<compile_context>
chip_gen: v6e
topology: v6e:2x2x1
jax: 0.10.0
libtpu: 0.0.40
codegen_flags: <defaults>
</compile_context>

<pallas_src>
import math

import jax
import jax.numpy as jnp
from jax.experimental import pallas as pl
from jax.experimental.pallas import tpu as pltpu

SELU_ALPHA = 1.6732632423543772
SELU_SCALE = 1.0507009873554805
LN_EPS = 1e-5
STD_EPS = 1e-5  # PyG StdAggregation: sqrt(var.clamp(min=1e-5)), zeroed at the clamp floor


def _selu(x):
    return SELU_SCALE * jnp.where(x > 0, x, SELU_ALPHA * (jnp.exp(x) - 1.0))


def _round_up(a, b):
    return ((a + b - 1) // b) * b


# ----------------------------------------------------------------------------
# Kernel
# ----------------------------------------------------------------------------
def global_pna_kernel(brow_ref, x_ref, u_ref,
                      w1u_ref, w1m_ref, w1s_ref, w1x_ref, w1n_ref,
                      b1_ref, ln_g_ref, ln_b_ref, w2_ref, b2_ref,
                      o_ref,
                      sum_acc, sq_acc, cnt_acc, max_acc, min_acc):
    TN, F = x_ref.shape          # node tile size, node feature dim
    G, gd = u_ref.shape          # number of graphs, global feature dim
    Gp = sum_acc.shape[0]        # group rows padded to a sublane multiple (>= 8)

    # -------- init resident accumulators on the first node tile --------
    @pl.when(pl.program_id(0) == 0)
    def _init():
        sum_acc[...] = jnp.zeros(sum_acc.shape, jnp.float32)
        sq_acc[...] = jnp.zeros(sq_acc.shape, jnp.float32)
        cnt_acc[...] = jnp.zeros(cnt_acc.shape, jnp.float32)
        max_acc[...] = jnp.full(max_acc.shape, -jnp.inf, jnp.float32)
        min_acc[...] = jnp.full(min_acc.shape, jnp.inf, jnp.float32)

    x = x_ref[...].astype(jnp.float32)   # (TN, F); upcast if streamed as bf16
    brow = brow_ref[...]                 # (1, TN) int32; padded nodes carry id == Gp

    # One-hot membership (Gp rows so the transpose below is sublane-aligned);
    # padded nodes (id == Gp) match no row -> contribute nothing.
    seg = jax.lax.broadcasted_iota(jnp.int32, (Gp, TN), 0)
    mask = (seg == brow).astype(jnp.float32)                 # (Gp, TN)

    cnt_acc[...] += jnp.sum(mask, axis=1, keepdims=True)     # (Gp, 1)

    # mean/std statistics ride the MXU: two dots share the mask LHS
    # (no (TN, 2F) lane concat is ever materialized).
    sum_acc[...] += jnp.dot(mask, x, preferred_element_type=jnp.float32)
    sq_acc[...] += jnp.dot(mask, x * x, preferred_element_type=jnp.float32)

    # Per-node membership in sublane layout: ONE XLU transpose per tile
    # (replaces the padded (TN, 1) bcol input stream of the previous version).
    maskT = jnp.transpose(mask) > 0.5                        # (TN, Gp) bool

    # Running segment max / min. G is a compile-time constant, so a static
    # Python unroll gives the LLO scheduler full visibility to co-issue the
    # VPU selects with the MXU dots above.
    # TODO(synk): for G >~ 16 switch to a sorted-by-graph layout (see header).
    tmax_rows = []
    tmin_rows = []
    for g in range(G):
        col = maskT[:, g:g + 1]                              # (TN, 1), static lane slice
        tmax_rows.append(jnp.max(jnp.where(col, x, -jnp.inf), axis=0, keepdims=True))
        tmin_rows.append(jnp.min(jnp.where(col, x, jnp.inf), axis=0, keepdims=True))
    tmax = tmax_rows[0] if G == 1 else jnp.concatenate(tmax_rows, axis=0)  # (G, F)
    tmin = tmin_rows[0] if G == 1 else jnp.concatenate(tmin_rows, axis=0)  # (G, F)
    max_acc[...] = jnp.maximum(max_acc[...], tmax)
    min_acc[...] = jnp.minimum(min_acc[...], tmin)

    # -------- finalize statistics + global MLP on the last node tile --------
    @pl.when(pl.program_id(0) == pl.num_programs(0) - 1)
    def _finalize():
        cnt = cnt_acc[0:G, :]                                # (G, 1)
        has = cnt > 0.0
        inv = jnp.where(has, 1.0 / jnp.maximum(cnt, 1.0), 0.0)   # empty-group guard
        mean = sum_acc[0:G, :] * inv
        mean_sq = sq_acc[0:G, :] * inv
        var = mean_sq - mean * mean      # E[x^2]-E[x]^2: matches PyG Var/StdAggregation
        std = jnp.where(var <= STD_EPS, 0.0, jnp.sqrt(jnp.maximum(var, STD_EPS)))
        xmax = jnp.where(has, max_acc[...], 0.0)             # guard empty groups (+-inf)
        xmin = jnp.where(has, min_acc[...], 0.0)

        # Linear 1 with w1 pre-split by input-row block (always sublane-aligned),
        # so the [u, mean, std, max, min] concat is never materialized.
        h = jnp.dot(u_ref[...], w1u_ref[...], preferred_element_type=jnp.float32)
        h = h + jnp.dot(mean, w1m_ref[...], preferred_element_type=jnp.float32)
        h = h + jnp.dot(std, w1s_ref[...], preferred_element_type=jnp.float32)
        h = h + jnp.dot(xmax, w1x_ref[...], preferred_element_type=jnp.float32)
        h = h + jnp.dot(xmin, w1n_ref[...], preferred_element_type=jnp.float32)
        h = h + b1_ref[...]
        # Dropout(p=0.0) is the identity.
        h = _selu(h)
        mu = jnp.mean(h, axis=1, keepdims=True)
        v = jnp.mean((h - mu) ** 2, axis=1, keepdims=True)
        hn = (h - mu) * jax.lax.rsqrt(v + LN_EPS)
        hn = hn * ln_g_ref[...] + ln_b_ref[...]
        y = jnp.dot(hn, w2_ref[...], preferred_element_type=jnp.float32) + b2_ref[...]
        o_ref[...] = y.astype(o_ref.dtype)


# ----------------------------------------------------------------------------
# Tile / VMEM sizing (byte-based, generation-aware)
# ----------------------------------------------------------------------------
def _pick_sizes(N, F, G, gd, H, Gp, x_itemsize):
    try:
        vmem_cap = int(pltpu.get_tpu_info().vmem_capacity_bytes)
    except Exception:
        vmem_cap = 64 * 1024 * 1024     # conservative fallback (v7x-sized VMEM)
    in_dim = gd + 4 * F
    resident_bytes = 4 * (G * gd + in_dim * H + 4 * H + H * gd + gd)
    accum_bytes = 4 * (Gp * (2 * F + 128) + 2 * G * F)
    # Bytes that scale with the node-tile length: double-buffered x tile,
    # double-buffered sublane-padded (1, TN) batch-id row, and in-kernel f32
    # temporaries (x upcast, x*x, mask, maskT).
    per_node = 2 * (F * x_itemsize + 8 * 4) + 4 * (2 * F + 2 * Gp)
    budget = max(int(0.45 * vmem_cap) - 2 * resident_bytes - accum_bytes,
                 4 * 1024 * 1024)
    tn_by_vmem = budget // max(1, per_node)
    tn_by_target = (4 * 1024 * 1024) // max(1, F * x_itemsize)   # ~4 MiB x tile
    tn = min(tn_by_vmem, tn_by_target, _round_up(N, 128))
    tn = max(128, (tn // 128) * 128)
    need = tn * per_node + 2 * resident_bytes + accum_bytes + (8 << 20)
    vmem_limit = int(min(vmem_cap * 3 // 4, max(32 << 20, need)))
    return tn, vmem_limit


# ----------------------------------------------------------------------------
# Wrapper
# ----------------------------------------------------------------------------
def global_pna_forward(x, edge_index, edge_attr, u, batch, params, *,
                       node_tile=None, x_stream_dtype=jnp.float32):
    """GlobalPNAModel.forward. edge_index / edge_attr are accepted for signature
    fidelity but unused (the PyTorch forward ignores them)."""
    del edge_index, edge_attr
    N, F = x.shape
    G, gd = u.shape
    in_dim, H = params["w1"].shape
    assert in_dim == gd + 4 * F
    Gp = max(8, _round_up(G, 8))
    x_itemsize = jnp.dtype(x_stream_dtype).itemsize

    TN, vmem_limit = _pick_sizes(N, F, G, gd, H, Gp, x_itemsize)
    if node_tile is not None:
        TN = int(node_tile)
    assert TN % 128 == 0
    n_pad = _round_up(N, TN)
    pad = n_pad - N
    num_tiles = n_pad // TN

    xp = jnp.pad(x.astype(x_stream_dtype), ((0, pad), (0, 0)))
    bp = jnp.pad(batch.astype(jnp.int32), (0, pad), constant_values=Gp)  # id==Gp -> no group
    brow = bp.reshape(1, n_pad)

    p32 = {k: params[k].astype(jnp.float32)
           for k in ("w1", "b1", "ln_g", "ln_b", "w2", "b2")}
    w1 = p32["w1"]
    # Pre-split w1 by input-row block [u | mean | std | max | min]: every block
    # starts at row 0 of its own operand -> all MXU reads are sublane-aligned.
    w1u = w1[0:gd]
    w1m = w1[gd:gd + F]
    w1s = w1[gd + F:gd + 2 * F]
    w1x = w1[gd + 2 * F:gd + 3 * F]
    w1n = w1[gd + 3 * F:gd + 4 * F]

    args = (brow, xp, u.astype(jnp.float32),
            w1u, w1m, w1s, w1x, w1n,
            p32["b1"], p32["ln_g"], p32["ln_b"], p32["w2"], p32["b2"])

    cost = pl.CostEstimate(
        flops=int(4 * Gp * n_pad * F                 # two stats matmuls
                  + 4 * G * n_pad * F                # masked max/min selects+reduces
                  + 2 * G * (in_dim * H + H * gd)),  # global MLP
        transcendentals=int(G * H),                  # SELU exp
        bytes_accessed=int(n_pad * F * x_itemsize + n_pad * 4
                           + (in_dim * H + 4 * H + H * gd + gd + G * gd) * 4
                           + G * gd * 4),
    )

    def build(buffered_residents):
        def resident(shape):
            idx = lambda i: tuple(0 for _ in shape)
            if buffered_residents:
                try:
                    # Single-buffer the constant-index residents: they are
                    # fetched once, so a second VMEM buffer is pure waste.
                    return pl.BlockSpec(shape, idx, pipeline_mode=pl.Buffered(1))
                except Exception:
                    pass
            return pl.BlockSpec(shape, idx)

        grid_spec = pltpu.PrefetchScalarGridSpec(
            num_scalar_prefetch=0,
            grid=(num_tiles,),
            in_specs=[
                pl.BlockSpec((1, TN), lambda i: (0, i)),     # batch ids (streamed)
                pl.BlockSpec((TN, F), lambda i: (i, 0)),     # node features (streamed)
                resident((G, gd)),                           # u
                resident((gd, H)),                           # w1[u rows]
                resident((F, H)),                            # w1[mean rows]
                resident((F, H)),                            # w1[std rows]
                resident((F, H)),                            # w1[max rows]
                resident((F, H)),                            # w1[min rows]
                resident((1, H)),                            # b1
                resident((1, H)),                            # LN gamma
                resident((1, H)),                            # LN beta
                resident((H, gd)),                           # w2
                resident((1, gd)),                           # b2
            ],
            out_specs=pl.BlockSpec((G, gd), lambda i: (0, 0)),  # written on last tile
            scratch_shapes=[
                pltpu.VMEM((Gp, F), jnp.float32),   # running sum_x
                pltpu.VMEM((Gp, F), jnp.float32),   # running sum_x^2
                pltpu.VMEM((Gp, 1), jnp.float32),   # counts
                pltpu.VMEM((G, F), jnp.float32),    # running max
                pltpu.VMEM((G, F), jnp.float32),    # running min
            ],
        )
        return pl.pallas_call(
            global_pna_kernel,
            out_shape=jax.ShapeDtypeStruct((G, gd), jnp.float32),
            grid_spec=grid_spec,
            compiler_params=pltpu.CompilerParams(
                dimension_semantics=("arbitrary",),   # node-tile axis is a reduction
                vmem_limit_bytes=vmem_limit,
            ),
            cost_estimate=cost,
        )

    try:
        return build(True)(*args)
    except Exception:
        # Safety net for Pallas versions without pipeline_mode / Buffered(1).
        return build(False)(*args)


# ----------------------------------------------------------------------------
# Params + pure-JAX reference
# ----------------------------------------------------------------------------
def init_params(key, node_dim, global_dim, hidden_dim):
    """Deterministic parameter init mirroring torch Linear/LayerNorm shapes.
    MLP input dim = global_dim + 4 * node_dim (lazy Linear(-1, hidden_dim))."""
    in_dim = global_dim + 4 * node_dim
    k1, k2, k3, k4 = jax.random.split(key, 4)
    lim1 = 1.0 / math.sqrt(in_dim)
    lim2 = 1.0 / math.sqrt(hidden_dim)
    return {
        "w1": jax.random.uniform(k1, (in_dim, hidden_dim), jnp.float32, -lim1, lim1),
        "b1": jax.random.uniform(k2, (1, hidden_dim), jnp.float32, -lim1, lim1),
        "ln_g": jnp.ones((1, hidden_dim), jnp.float32),
        "ln_b": jnp.zeros((1, hidden_dim), jnp.float32),
        "w2": jax.random.uniform(k3, (hidden_dim, global_dim), jnp.float32, -lim2, lim2),
        "b2": jax.random.uniform(k4, (1, global_dim), jnp.float32, -lim2, lim2),
    }


def reference_forward(x, u, batch, params, G):
    """Pure-JAX reference of the same forward pass for validation."""
    counts = jax.ops.segment_sum(jnp.ones((x.shape[0], 1), jnp.float32), batch, G)
    mean = jax.ops.segment_sum(x, batch, G) / counts
    mean_sq = jax.ops.segment_sum(x * x, batch, G) / counts
    var = mean_sq - mean * mean
    std = jnp.where(var <= STD_EPS, 0.0, jnp.sqrt(jnp.maximum(var, STD_EPS)))
    xmax = jax.ops.segment_max(x, batch, G)
    xmin = jax.ops.segment_min(x, batch, G)
    feat = jnp.concatenate([u, mean, std, xmax, xmin], axis=1)
    h = _selu(feat @ params["w1"] + params["b1"])
    mu = h.mean(axis=1, keepdims=True)
    v = ((h - mu) ** 2).mean(axis=1, keepdims=True)
    hn = (h - mu) / jnp.sqrt(v + LN_EPS) * params["ln_g"] + params["ln_b"]
    return hn @ params["w2"] + params["b2"]


if __name__ == "__main__":
    key = jax.random.PRNGKey(0)
    kx, ku, ke, kp, kx2, ku2, kb2, kp2 = jax.random.split(key, 8)

    # ---- Case 1: tiny single-tile batch (2 graphs, 8 nodes, F=32) ----
    G, N, F, HIDDEN, GLOBAL_DIM, E = 2, 8, 32, 32, 8, 10
    x = jax.random.normal(kx, (N, F), dtype=jnp.float32)
    u = jax.random.normal(ku, (G, GLOBAL_DIM), dtype=jnp.float32)
    batch = jnp.array([0, 0, 0, 0, 1, 1, 1, 1], dtype=jnp.int32)
    edge_index = jnp.zeros((2, E), dtype=jnp.int32)          # unused
    edge_attr = jax.random.normal(ke, (E, 4), jnp.float32)   # unused
    params = init_params(kp, node_dim=F, global_dim=GLOBAL_DIM, hidden_dim=HIDDEN)

    out = global_pna_forward(x, edge_index, edge_attr, u, batch, params)
    out = jax.block_until_ready(out)
    ref = reference_forward(x, u, batch, params, G)
    assert out.shape == (G, GLOBAL_DIM)
    assert jnp.allclose(out, ref, rtol=1e-3, atol=1e-3), (out, ref)

    # ---- Case 2: multi-tile streaming path (3 graphs, 333 nodes, 128-node tiles) ----
    G2, N2, F2, H2, GD2 = 3, 333, 32, 64, 16
    x2 = jax.random.normal(kx2, (N2, F2), dtype=jnp.float32)
    u2 = jax.random.normal(ku2, (G2, GD2), dtype=jnp.float32)
    batch2 = jnp.concatenate([jnp.arange(G2, dtype=jnp.int32),
                              jax.random.randint(kb2, (N2 - G2,), 0, G2, jnp.int32)])
    params2 = init_params(kp2, node_dim=F2, global_dim=GD2, hidden_dim=H2)

    out2 = global_pna_forward(x2, jnp.zeros((2, 1), jnp.int32),
                              jnp.zeros((1, 4), jnp.float32), u2, batch2, params2,
                              node_tile=128)
    out2 = jax.block_until_ready(out2)
    ref2 = reference_forward(x2, u2, batch2, params2, G2)
    assert out2.shape == (G2, GD2)
    assert jnp.allclose(out2, ref2, rtol=1e-3, atol=1e-3), (out2, ref2)

    print("KERNEL_OK")
</pallas_src>

<mosaic_0001>
module attributes {stable_mosaic.version = 11 : i64} {
  func.func @global_pna_kernel(%arg0: i32, %arg1: memref<1x128xi32, #tpu.memory_space<vmem>>, %arg2: memref<128x32xf32, #tpu.memory_space<vmem>>, %arg3: memref<2x8xf32, #tpu.memory_space<vmem>>, %arg4: memref<8x32xf32, #tpu.memory_space<vmem>>, %arg5: memref<32x32xf32, #tpu.memory_space<vmem>>, %arg6: memref<32x32xf32, #tpu.memory_space<vmem>>, %arg7: memref<32x32xf32, #tpu.memory_space<vmem>>, %arg8: memref<32x32xf32, #tpu.memory_space<vmem>>, %arg9: memref<1x32xf32, #tpu.memory_space<vmem>>, %arg10: memref<1x32xf32, #tpu.memory_space<vmem>>, %arg11: memref<1x32xf32, #tpu.memory_space<vmem>>, %arg12: memref<32x8xf32, #tpu.memory_space<vmem>>, %arg13: memref<1x8xf32, #tpu.memory_space<vmem>>, %arg14: memref<2x8xf32, #tpu.memory_space<vmem>>, %arg15: memref<8x32xf32, #tpu.memory_space<vmem>>, %arg16: memref<8x32xf32, #tpu.memory_space<vmem>>, %arg17: memref<8x1xf32, #tpu.memory_space<vmem>>, %arg18: memref<2x32xf32, #tpu.memory_space<vmem>>, %arg19: memref<2x32xf32, #tpu.memory_space<vmem>>) attributes {dimension_semantics = [#tpu.dimension_semantics<arbitrary>], iteration_bounds = array<i64: 1>, scalar_prefetch = 0 : i64, scratch_operands = 5 : i64, tpu.core_type = #tpu.core_type<tc>, window_params = [{transform_indices = @transform_0, window_bounds = array<i64: 1, 128>}, {transform_indices = @transform_1, window_bounds = array<i64: 128, 32>}, {pipeline_mode = #tpu.pipeline_mode<synchronous>, transform_indices = @transform_2, window_bounds = array<i64: 2, 8>}, {pipeline_mode = #tpu.pipeline_mode<synchronous>, transform_indices = @transform_3, window_bounds = array<i64: 8, 32>}, {pipeline_mode = #tpu.pipeline_mode<synchronous>, transform_indices = @transform_4, window_bounds = array<i64: 32, 32>}, {pipeline_mode = #tpu.pipeline_mode<synchronous>, transform_indices = @transform_5, window_bounds = array<i64: 32, 32>}, {pipeline_mode = #tpu.pipeline_mode<synchronous>, transform_indices = @transform_6, window_bounds = array<i64: 32, 32>}, {pipeline_mode = #tpu.pipeline_mode<synchronous>, transform_indices = @transform_7, window_bounds = array<i64: 32, 32>}, {pipeline_mode = #tpu.pipeline_mode<synchronous>, transform_indices = @transform_8, window_bounds = array<i64: 1, 32>}, {pipeline_mode = #tpu.pipeline_mode<synchronous>, transform_indices = @transform_9, window_bounds = array<i64: 1, 32>}, {pipeline_mode = #tpu.pipeline_mode<synchronous>, transform_indices = @transform_10, window_bounds = array<i64: 1, 32>}, {pipeline_mode = #tpu.pipeline_mode<synchronous>, transform_indices = @transform_11, window_bounds = array<i64: 32, 8>}, {pipeline_mode = #tpu.pipeline_mode<synchronous>, transform_indices = @transform_12, window_bounds = array<i64: 1, 8>}, {pipeline_mode = #tpu.pipeline_mode<synchronous>, transform_indices = @transform_13, window_bounds = array<i64: 2, 8>}]} {
    %c0_i32 = arith.constant 0 : i32
    %0 = arith.cmpi eq, %arg0, %c0_i32 : i32
    %1 = arith.extui %0 : i1 to i32
    %c0_i32_0 = arith.constant 0 : i32
    %2 = arith.cmpi ne, %1, %c0_i32_0 : i32
    scf.if %2 {
      %cst_37 = arith.constant 0.000000e+00 : f32
      %64 = vector.broadcast %cst_37 : f32 to vector<8x32xf32>
      %c0_38 = arith.constant 0 : index
      %c0_39 = arith.constant 0 : index
      %65 = vector.load %arg15[%c0_38, %c0_39] : memref<8x32xf32, #tpu.memory_space<vmem>>, vector<8x32xf32>
      tpu.vector_store %arg15[%c0_38, %c0_39], %64 {strides = array<i32>} : memref<8x32xf32, #tpu.memory_space<vmem>>, vector<8x32xf32>,
      %cst_40 = arith.constant 0.000000e+00 : f32
      %66 = vector.broadcast %cst_40 : f32 to vector<8x32xf32>
      %c0_41 = arith.constant 0 : index
      %c0_42 = arith.constant 0 : index
      %67 = vector.load %arg16[%c0_41, %c0_42] : memref<8x32xf32, #tpu.memory_space<vmem>>, vector<8x32xf32>
      tpu.vector_store %arg16[%c0_41, %c0_42], %66 {strides = array<i32>} : memref<8x32xf32, #tpu.memory_space<vmem>>, vector<8x32xf32>,
      %cst_43 = arith.constant 0.000000e+00 : f32
      %68 = vector.broadcast %cst_43 : f32 to vector<8x1xf32>
      %c0_44 = arith.constant 0 : index
      %c0_45 = arith.constant 0 : index
      %69 = vector.load %arg17[%c0_44, %c0_45] : memref<8x1xf32, #tpu.memory_space<vmem>>, vector<8x1xf32>
      tpu.vector_store %arg17[%c0_44, %c0_45], %68 {strides = array<i32>} : memref<8x1xf32, #tpu.memory_space<vmem>>, vector<8x1xf32>,
      %cst_46 = arith.constant 0xFF800000 : f32
      %70 = vector.broadcast %cst_46 : f32 to vector<2x32xf32>
      %c0_47 = arith.constant 0 : index
      %c0_48 = arith.constant 0 : index
      %71 = vector.load %arg18[%c0_47, %c0_48] : memref<2x32xf32, #tpu.memory_space<vmem>>, vector<2x32xf32>
      tpu.vector_store %arg18[%c0_47, %c0_48], %70 {strides = array<i32>} : memref<2x32xf32, #tpu.memory_space<vmem>>, vector<2x32xf32>,
      %cst_49 = arith.constant 0x7F800000 : f32
      %72 = vector.broadcast %cst_49 : f32 to vector<2x32xf32>
      %c0_50 = arith.constant 0 : index
      %c0_51 = arith.constant 0 : index
      %73 = vector.load %arg19[%c0_50, %c0_51] : memref<2x32xf32, #tpu.memory_space<vmem>>, vector<2x32xf32>
      tpu.vector_store %arg19[%c0_50, %c0_51], %72 {strides = array<i32>} : memref<2x32xf32, #tpu.memory_space<vmem>>, vector<2x32xf32>,
    } else {
    }
    %c0 = arith.constant 0 : index
    %c0_1 = arith.constant 0 : index
    %3 = vector.load %arg2[%c0, %c0_1] : memref<128x32xf32, #tpu.memory_space<vmem>>, vector<128x32xf32>
    %c0_2 = arith.constant 0 : index
    %c0_3 = arith.constant 0 : index
    %4 = vector.load %arg1[%c0_2, %c0_3] : memref<1x128xi32, #tpu.memory_space<vmem>>, vector<1x128xi32>
    %5 = tpu.iota {dimensions = array<i32: 0>} : vector<8x128xi32>
    %6 = vector.broadcast %4 : vector<1x128xi32> to vector<8x128xi32>
    %7 = arith.cmpi eq, %5, %6 : vector<8x128xi32>
    %8 = arith.extui %7 : vector<8x128xi1> to vector<8x128xi32>
    %9 = arith.sitofp %8 : vector<8x128xi32> to vector<8x128xf32>
    %c0_4 = arith.constant 0 : index
    %c0_5 = arith.constant 0 : index
    %10 = vector.load %arg17[%c0_4, %c0_5] : memref<8x1xf32, #tpu.memory_space<vmem>>, vector<8x1xf32>
    %cst = arith.constant dense<0.000000e+00> : vector<8xf32>
    %11 = vector.multi_reduction <add>, %9, %cst [1] : vector<8x128xf32> to vector<8xf32>
    %12 = vector.shape_cast %11 : vector<8xf32> to vector<8x1xf32>
    %13 = arith.addf %10, %12 : vector<8x1xf32>
    %c0_6 = arith.constant 0 : index
    %c0_7 = arith.constant 0 : index
    %14 = vector.load %arg17[%c0_6, %c0_7] : memref<8x1xf32, #tpu.memory_space<vmem>>, vector<8x1xf32>
    tpu.vector_store %arg17[%c0_6, %c0_7], %13 {strides = array<i32>} : memref<8x1xf32, #tpu.memory_space<vmem>>, vector<8x1xf32>,
    %c0_8 = arith.constant 0 : index
    %c0_9 = arith.constant 0 : index
    %15 = vector.load %arg15[%c0_8, %c0_9] : memref<8x32xf32, #tpu.memory_space<vmem>>, vector<8x32xf32>
    %cst_10 = arith.constant dense<0.000000e+00> : vector<8x32xf32>
    %16 = tpu.matmul %9, %3, %cst_10 {dimension_numbers = #tpu.dot_dimension_numbers<[1], [0], [0], [1], [0, 0, 1, 1], [], []>} : vector<8x128xf32>, vector<128x32xf32>, vector<8x32xf32> -> vector<8x32xf32>
    %17 = arith.addf %15, %16 : vector<8x32xf32>
    %c0_11 = arith.constant 0 : index
    %c0_12 = arith.constant 0 : index
    %18 = vector.load %arg15[%c0_11, %c0_12] : memref<8x32xf32, #tpu.memory_space<vmem>>, vector<8x32xf32>
    tpu.vector_store %arg15[%c0_11, %c0_12], %17 {strides = array<i32>} : memref<8x32xf32, #tpu.memory_space<vmem>>, vector<8x32xf32>,
    %c0_13 = arith.constant 0 : index
    %c0_14 = arith.constant 0 : index
    %19 = vector.load %arg16[%c0_13, %c0_14] : memref<8x32xf32, #tpu.memory_space<vmem>>, vector<8x32xf32>
    %20 = arith.mulf %3, %3 : vector<128x32xf32>
    %cst_15 = arith.constant dense<0.000000e+00> : vector<8x32xf32>
    %21 = tpu.matmul %9, %20, %cst_15 {dimension_numbers = #tpu.dot_dimension_numbers<[1], [0], [0], [1], [0, 0, 1, 1], [], []>} : vector<8x128xf32>, vector<128x32xf32>, vector<8x32xf32> -> vector<8x32xf32>
    %22 = arith.addf %19, %21 : vector<8x32xf32>
    %c0_16 = arith.constant 0 : index
    %c0_17 = arith.constant 0 : index
    %23 = vector.load %arg16[%c0_16, %c0_17] : memref<8x32xf32, #tpu.memory_space<vmem>>, vector<8x32xf32>
    tpu.vector_store %arg16[%c0_16, %c0_17], %22 {strides = array<i32>} : memref<8x32xf32, #tpu.memory_space<vmem>>, vector<8x32xf32>,
    %24 = tpu.transpose %9, [1, 0] : vector<8x128xf32> -> vector<128x8xf32>
    %cst_18 = arith.constant 5.000000e-01 : f32
    %25 = vector.broadcast %cst_18 : f32 to vector<128x8xf32>
    %26 = arith.cmpf ogt, %24, %25 : vector<128x8xf32>
    %27 = vector.extract_strided_slice %26 {offsets = [0, 0], sizes = [128, 1], strides = [1, 1]} : vector<128x8xi1> to vector<128x1xi1>
    %cst_19 = arith.constant 0xFF800000 : f32
    %28 = vector.shape_cast %27 : vector<128x1xi1> to vector<128x1xi1>
    %29 = vector.broadcast %28 : vector<128x1xi1> to vector<128x32xi1>
    %30 = vector.broadcast %cst_19 : f32 to vector<128x32xf32>
    %31 = arith.select %29, %3, %30 : vector<128x32xi1>, vector<128x32xf32>
    %cst_20 = arith.constant dense<0xFF800000> : vector<32xf32>
    %32 = vector.multi_reduction <maximumf>, %31, %cst_20 [0] : vector<128x32xf32> to vector<32xf32>
    %33 = vector.shape_cast %32 : vector<32xf32> to vector<1x32xf32>
    %cst_21 = arith.constant 0x7F800000 : f32
    %34 = vector.shape_cast %27 : vector<128x1xi1> to vector<128x1xi1>
    %35 = vector.broadcast %34 : vector<128x1xi1> to vector<128x32xi1>
    %36 = vector.broadcast %cst_21 : f32 to vector<128x32xf32>
    %37 = arith.select %35, %3, %36 : vector<128x32xi1>, vector<128x32xf32>
    %cst_22 = arith.constant dense<0x7F800000> : vector<32xf32>
    %38 = vector.multi_reduction <minimumf>, %37, %cst_22 [0] : vector<128x32xf32> to vector<32xf32>
    %39 = vector.shape_cast %38 : vector<32xf32> to vector<1x32xf32>
    %40 = vector.extract_strided_slice %26 {offsets = [0, 1], sizes = [128, 1], strides = [1, 1]} : vector<128x8xi1> to vector<128x1xi1>
    %cst_23 = arith.constant 0xFF800000 : f32
    %41 = vector.shape_cast %40 : vector<128x1xi1> to vector<128x1xi1>
    %42 = vector.broadcast %41 : vector<128x1xi1> to vector<128x32xi1>
    %43 = vector.broadcast %cst_23 : f32 to vector<128x32xf32>
    %44 = arith.select %42, %3, %43 : vector<128x32xi1>, vector<128x32xf32>
    %cst_24 = arith.constant dense<0xFF800000> : vector<32xf32>
    %45 = vector.multi_reduction <maximumf>, %44, %cst_24 [0] : vector<128x32xf32> to vector<32xf32>
    %46 = vector.shape_cast %45 : vector<32xf32> to vector<1x32xf32>
    %cst_25 = arith.constant 0x7F800000 : f32
    %47 = vector.shape_cast %40 : vector<128x1xi1> to vector<128x1xi1>
    %48 = vector.broadcast %47 : vector<128x1xi1> to vector<128x32xi1>
    %49 = vector.broadcast %cst_25 : f32 to vector<128x32xf32>
    %50 = arith.select %48, %3, %49 : vector<128x32xi1>, vector<128x32xf32>
    %cst_26 = arith.constant dense<0x7F800000> : vector<32xf32>
    %51 = vector.multi_reduction <minimumf>, %50, %cst_26 [0] : vector<128x32xf32> to vector<32xf32>
    %52 = vector.shape_cast %51 : vector<32xf32> to vector<1x32xf32>
    %53 = tpu.concatenate %33, %46 in 0 : vector<1x32xf32>, vector<1x32xf32> -> vector<2x32xf32>
    %54 = tpu.concatenate %39, %52 in 0 : vector<1x32xf32>, vector<1x32xf32> -> vector<2x32xf32>
    %c0_27 = arith.constant 0 : index
    %c0_28 = arith.constant 0 : index
    %55 = vector.load %arg18[%c0_27, %c0_28] : memref<2x32xf32, #tpu.memory_space<vmem>>, vector<2x32xf32>
    %56 = arith.maximumf %55, %53 : vector<2x32xf32>
    %c0_29 = arith.constant 0 : index
    %c0_30 = arith.constant 0 : index
    %57 = vector.load %arg18[%c0_29, %c0_30] : memref<2x32xf32, #tpu.memory_space<vmem>>, vector<2x32xf32>
    tpu.vector_store %arg18[%c0_29, %c0_30], %56 {strides = array<i32>} : memref<2x32xf32, #tpu.memory_space<vmem>>, vector<2x32xf32>,
    %c0_31 = arith.constant 0 : index
    %c0_32 = arith.constant 0 : index
    %58 = vector.load %arg19[%c0_31, %c0_32] : memref<2x32xf32, #tpu.memory_space<vmem>>, vector<2x32xf32>
    %59 = arith.minimumf %58, %54 : vector<2x32xf32>
    %c0_33 = arith.constant 0 : index
    %c0_34 = arith.constant 0 : index
    %60 = vector.load %arg19[%c0_33, %c0_34] : memref<2x32xf32, #tpu.memory_space<vmem>>, vector<2x32xf32>
    tpu.vector_store %arg19[%c0_33, %c0_34], %59 {strides = array<i32>} : memref<2x32xf32, #tpu.memory_space<vmem>>, vector<2x32xf32>,
    %c0_i32_35 = arith.constant 0 : i32
    %61 = arith.cmpi eq, %arg0, %c0_i32_35 : i32
    %62 = arith.extui %61 : i1 to i32
    %c0_i32_36 = arith.constant 0 : i32
    %63 = arith.cmpi ne, %62, %c0_i32_36 : i32
    scf.if %63 {
      %c0_37 = arith.constant 0 : index
      %c0_38 = arith.constant 0 : index
      %64 = vector.load %arg17[%c0_37, %c0_38] : memref<8x1xf32, #tpu.memory_space<vmem>>, vector<2x1xf32>
      %cst_39 = arith.constant 0.000000e+00 : f32
      %65 = vector.broadcast %cst_39 : f32 to vector<2x1xf32>
      %66 = arith.cmpf ogt, %64, %65 : vector<2x1xf32>
      %cst_40 = arith.constant 1.000000e+00 : f32
      %67 = vector.broadcast %cst_40 : f32 to vector<2x1xf32>
      %68 = arith.maximumf %64, %67 : vector<2x1xf32>
      %cst_41 = arith.constant 1.000000e+00 : f32
      %69 = vector.broadcast %cst_41 : f32 to vector<2x1xf32>
      %70 = arith.divf %69, %68 : vector<2x1xf32>
      %cst_42 = arith.constant 0.000000e+00 : f32
      %71 = vector.broadcast %cst_42 : f32 to vector<2x1xf32>
      %72 = arith.select %66, %70, %71 : vector<2x1xi1>, vector<2x1xf32>
      %c0_43 = arith.constant 0 : index
      %c0_44 = arith.constant 0 : index
      %73 = vector.load %arg15[%c0_43, %c0_44] : memref<8x32xf32, #tpu.memory_space<vmem>>, vector<2x32xf32>
      %74 = vector.broadcast %72 : vector<2x1xf32> to vector<2x32xf32>
      %75 = arith.mulf %73, %74 : vector<2x32xf32>
      %c0_45 = arith.constant 0 : index
      %c0_46 = arith.constant 0 : index
      %76 = vector.load %arg16[%c0_45, %c0_46] : memref<8x32xf32, #tpu.memory_space<vmem>>, vector<2x32xf32>
      %77 = vector.broadcast %72 : vector<2x1xf32> to vector<2x32xf32>
      %78 = arith.mulf %76, %77 : vector<2x32xf32>
      %79 = arith.mulf %75, %75 : vector<2x32xf32>
      %80 = arith.subf %78, %79 : vector<2x32xf32>
      %cst_47 = arith.constant 9.99999974E-6 : f32
      %81 = vector.broadcast %cst_47 : f32 to vector<2x32xf32>
      %82 = arith.cmpf ole, %80, %81 : vector<2x32xf32>
      %cst_48 = arith.constant 9.99999974E-6 : f32
      %83 = vector.broadcast %cst_48 : f32 to vector<2x32xf32>
      %84 = arith.maximumf %80, %83 : vector<2x32xf32>
      %85 = math.sqrt %84 : vector<2x32xf32>
      %cst_49 = arith.constant 0.000000e+00 : f32
      %86 = vector.broadcast %cst_49 : f32 to vector<2x32xf32>
      %87 = arith.select %82, %86, %85 : vector<2x32xi1>, vector<2x32xf32>
      %c0_50 = arith.constant 0 : index
      %c0_51 = arith.constant 0 : index
      %88 = vector.load %arg18[%c0_50, %c0_51] : memref<2x32xf32, #tpu.memory_space<vmem>>, vector<2x32xf32>
      %cst_52 = arith.constant 0.000000e+00 : f32
      %89 = vector.shape_cast %66 : vector<2x1xi1> to vector<2x1xi1>
      %90 = vector.broadcast %89 : vector<2x1xi1> to vector<2x32xi1>
      %91 = vector.broadcast %cst_52 : f32 to vector<2x32xf32>
      %92 = arith.select %90, %88, %91 : vector<2x32xi1>, vector<2x32xf32>
      %c0_53 = arith.constant 0 : index
      %c0_54 = arith.constant 0 : index
      %93 = vector.load %arg19[%c0_53, %c0_54] : memref<2x32xf32, #tpu.memory_space<vmem>>, vector<2x32xf32>
      %cst_55 = arith.constant 0.000000e+00 : f32
      %94 = vector.shape_cast %66 : vector<2x1xi1> to vector<2x1xi1>
      %95 = vector.broadcast %94 : vector<2x1xi1> to vector<2x32xi1>
      %96 = vector.broadcast %cst_55 : f32 to vector<2x32xf32>
      %97 = arith.select %95, %93, %96 : vector<2x32xi1>, vector<2x32xf32>
      %c0_56 = arith.constant 0 : index
      %c0_57 = arith.constant 0 : index
      %98 = vector.load %arg3[%c0_56, %c0_57] : memref<2x8xf32, #tpu.memory_space<vmem>>, vector<2x8xf32>
      %c0_58 = arith.constant 0 : index
      %c0_59 = arith.constant 0 : index
      %99 = vector.load %arg4[%c0_58, %c0_59] : memref<8x32xf32, #tpu.memory_space<vmem>>, vector<8x32xf32>
      %cst_60 = arith.constant dense<0.000000e+00> : vector<2x32xf32>
      %100 = tpu.matmul %98, %99, %cst_60 {dimension_numbers = #tpu.dot_dimension_numbers<[1], [0], [0], [1], [0, 0, 1, 1], [], []>} : vector<2x8xf32>, vector<8x32xf32>, vector<2x32xf32> -> vector<2x32xf32>
      %c0_61 = arith.constant 0 : index
      %c0_62 = arith.constant 0 : index
      %101 = vector.load %arg5[%c0_61, %c0_62] : memref<32x32xf32, #tpu.memory_space<vmem>>, vector<32x32xf32>
      %cst_63 = arith.constant dense<0.000000e+00> : vector<2x32xf32>
      %102 = tpu.matmul %75, %101, %cst_63 {dimension_numbers = #tpu.dot_dimension_numbers<[1], [0], [0], [1], [0, 0, 1, 1], [], []>} : vector<2x32xf32>, vector<32x32xf32>, vector<2x32xf32> -> vector<2x32xf32>
      %103 = arith.addf %100, %102 : vector<2x32xf32>
      %c0_64 = arith.constant 0 : index
      %c0_65 = arith.constant 0 : index
      %104 = vector.load %arg6[%c0_64, %c0_65] : memref<32x32xf32, #tpu.memory_space<vmem>>, vector<32x32xf32>
      %cst_66 = arith.constant dense<0.000000e+00> : vector<2x32xf32>
      %105 = tpu.matmul %87, %104, %cst_66 {dimension_numbers = #tpu.dot_dimension_numbers<[1], [0], [0], [1], [0, 0, 1, 1], [], []>} : vector<2x32xf32>, vector<32x32xf32>, vector<2x32xf32> -> vector<2x32xf32>
      %106 = arith.addf %103, %105 : vector<2x32xf32>
      %c0_67 = arith.constant 0 : index
      %c0_68 = arith.constant 0 : index
      %107 = vector.load %arg7[%c0_67, %c0_68] : memref<32x32xf32, #tpu.memory_space<vmem>>, vector<32x32xf32>
      %cst_69 = arith.constant dense<0.000000e+00> : vector<2x32xf32>
      %108 = tpu.matmul %92, %107, %cst_69 {dimension_numbers = #tpu.dot_dimension_numbers<[1], [0], [0], [1], [0, 0, 1, 1], [], []>} : vector<2x32xf32>, vector<32x32xf32>, vector<2x32xf32> -> vector<2x32xf32>
      %109 = arith.addf %106, %108 : vector<2x32xf32>
      %c0_70 = arith.constant 0 : index
      %c0_71 = arith.constant 0 : index
      %110 = vector.load %arg8[%c0_70, %c0_71] : memref<32x32xf32, #tpu.memory_space<vmem>>, vector<32x32xf32>
      %cst_72 = arith.constant dense<0.000000e+00> : vector<2x32xf32>
      %111 = tpu.matmul %97, %110, %cst_72 {dimension_numbers = #tpu.dot_dimension_numbers<[1], [0], [0], [1], [0, 0, 1, 1], [], []>} : vector<2x32xf32>, vector<32x32xf32>, vector<2x32xf32> -> vector<2x32xf32>
      %112 = arith.addf %109, %111 : vector<2x32xf32>
      %c0_73 = arith.constant 0 : index
      %c0_74 = arith.constant 0 : index
      %113 = vector.load %arg9[%c0_73, %c0_74] : memref<1x32xf32, #tpu.memory_space<vmem>>, vector<1x32xf32>
      %114 = vector.broadcast %113 : vector<1x32xf32> to vector<2x32xf32>
      %115 = arith.addf %112, %114 : vector<2x32xf32>
      %cst_75 = arith.constant 0.000000e+00 : f32
      %116 = vector.broadcast %cst_75 : f32 to vector<2x32xf32>
      %117 = arith.cmpf ogt, %115, %116 : vector<2x32xf32>
      %118 = math.exp %115 : vector<2x32xf32>
      %cst_76 = arith.constant 1.000000e+00 : f32
      %119 = vector.broadcast %cst_76 : f32 to vector<2x32xf32>
      %120 = arith.subf %118, %119 : vector<2x32xf32>
      %cst_77 = arith.constant 1.67326319 : f32
      %121 = vector.broadcast %cst_77 : f32 to vector<2x32xf32>
      %122 = arith.mulf %121, %120 : vector<2x32xf32>
      %123 = arith.select %117, %115, %122 : vector<2x32xi1>, vector<2x32xf32>
      %cst_78 = arith.constant 1.05070102 : f32
      %124 = vector.broadcast %cst_78 : f32 to vector<2x32xf32>
      %125 = arith.mulf %124, %123 : vector<2x32xf32>
      %cst_79 = arith.constant dense<0.000000e+00> : vector<2xf32>
      %126 = vector.multi_reduction <add>, %125, %cst_79 [1] : vector<2x32xf32> to vector<2xf32>
      %127 = vector.shape_cast %126 : vector<2xf32> to vector<2x1xf32>
      %cst_80 = arith.constant 3.200000e+01 : f32
      %128 = vector.broadcast %cst_80 : f32 to vector<2x1xf32>
      %129 = arith.divf %127, %128 : vector<2x1xf32>
      %130 = vector.broadcast %129 : vector<2x1xf32> to vector<2x32xf32>
      %131 = arith.subf %125, %130 : vector<2x32xf32>
      %132 = arith.mulf %131, %131 : vector<2x32xf32>
      %cst_81 = arith.constant dense<0.000000e+00> : vector<2xf32>
      %133 = vector.multi_reduction <add>, %132, %cst_81 [1] : vector<2x32xf32> to vector<2xf32>
      %134 = vector.shape_cast %133 : vector<2xf32> to vector<2x1xf32>
      %cst_82 = arith.constant 3.200000e+01 : f32
      %135 = vector.broadcast %cst_82 : f32 to vector<2x1xf32>
      %136 = arith.divf %134, %135 : vector<2x1xf32>
      %137 = vector.broadcast %129 : vector<2x1xf32> to vector<2x32xf32>
      %138 = arith.subf %125, %137 : vector<2x32xf32>
      %cst_83 = arith.constant 9.99999974E-6 : f32
      %139 = vector.broadcast %cst_83 : f32 to vector<2x1xf32>
      %140 = arith.addf %136, %139 : vector<2x1xf32>
      %141 = math.rsqrt %140 : vector<2x1xf32>
      %142 = vector.broadcast %141 : vector<2x1xf32> to vector<2x32xf32>
      %143 = arith.mulf %138, %142 : vector<2x32xf32>
      %c0_84 = arith.constant 0 : index
      %c0_85 = arith.constant 0 : index
      %144 = vector.load %arg10[%c0_84, %c0_85] : memref<1x32xf32, #tpu.memory_space<vmem>>, vector<1x32xf32>
      %145 = vector.broadcast %144 : vector<1x32xf32> to vector<2x32xf32>
      %146 = arith.mulf %143, %145 : vector<2x32xf32>
      %c0_86 = arith.constant 0 : index
      %c0_87 = arith.constant 0 : index
      %147 = vector.load %arg11[%c0_86, %c0_87] : memref<1x32xf32, #tpu.memory_space<vmem>>, vector<1x32xf32>
      %148 = vector.broadcast %147 : vector<1x32xf32> to vector<2x32xf32>
      %149 = arith.addf %146, %148 : vector<2x32xf32>
      %c0_88 = arith.constant 0 : index
      %c0_89 = arith.constant 0 : index
      %150 = vector.load %arg12[%c0_88, %c0_89] : memref<32x8xf32, #tpu.memory_space<vmem>>, vector<32x8xf32>
      %cst_90 = arith.constant dense<0.000000e+00> : vector<2x8xf32>
      %151 = tpu.matmul %149, %150, %cst_90 {dimension_numbers = #tpu.dot_dimension_numbers<[1], [0], [0], [1], [0, 0, 1, 1], [], []>} : vector<2x32xf32>, vector<32x8xf32>, vector<2x8xf32> -> vector<2x8xf32>
      %c0_91 = arith.constant 0 : index
      %c0_92 = arith.constant 0 : index
      %152 = vector.load %arg13[%c0_91, %c0_92] : memref<1x8xf32, #tpu.memory_space<vmem>>, vector<1x8xf32>
      %153 = vector.broadcast %152 : vector<1x8xf32> to vector<2x8xf32>
      %154 = arith.addf %151, %153 : vector<2x8xf32>
      %c0_93 = arith.constant 0 : index
      %c0_94 = arith.constant 0 : index
      %155 = vector.load %arg14[%c0_93, %c0_94] : memref<2x8xf32, #tpu.memory_space<vmem>>, vector<2x8xf32>
      tpu.vector_store %arg14[%c0_93, %c0_94], %154 {strides = array<i32>} : memref<2x8xf32, #tpu.memory_space<vmem>>, vector<2x8xf32>,
    } else {
    }
    return
  }
  func.func @transform_0(%arg0: i32) -> (i32, i32) {
    %c0_i32 = arith.constant 0 : i32
    %c0_i32_0 = arith.constant 0 : i32
    return %c0_i32, %arg0 : i32, i32
  }
  func.func @transform_1(%arg0: i32) -> (i32, i32) {
    %c0_i32 = arith.constant 0 : i32
    %c0_i32_0 = arith.constant 0 : i32
    return %arg0, %c0_i32 : i32, i32
  }
  func.func @transform_2(%arg0: i32) -> (i32, i32) {
    %c0_i32 = arith.constant 0 : i32
    %c0_i32_0 = arith.constant 0 : i32
    %c0_i32_1 = arith.constant 0 : i32
    return %c0_i32, %c0_i32_0 : i32, i32
  }
  func.func @transform_3(%arg0: i32) -> (i32, i32) {
    %c0_i32 = arith.constant 0 : i32
    %c0_i32_0 = arith.constant 0 : i32
    %c0_i32_1 = arith.constant 0 : i32
    return %c0_i32, %c0_i32_0 : i32, i32
  }
  func.func @transform_4(%arg0: i32) -> (i32, i32) {
    %c0_i32 = arith.constant 0 : i32
    %c0_i32_0 = arith.constant 0 : i32
    %c0_i32_1 = arith.constant 0 : i32
    return %c0_i32, %c0_i32_0 : i32, i32
  }
  func.func @transform_5(%arg0: i32) -> (i32, i32) {
    %c0_i32 = arith.constant 0 : i32
    %c0_i32_0 = arith.constant 0 : i32
    %c0_i32_1 = arith.constant 0 : i32
    return %c0_i32, %c0_i32_0 : i32, i32
  }
  func.func @transform_6(%arg0: i32) -> (i32, i32) {
    %c0_i32 = arith.constant 0 : i32
    %c0_i32_0 = arith.constant 0 : i32
    %c0_i32_1 = arith.constant 0 : i32
    return %c0_i32, %c0_i32_0 : i32, i32
  }
  func.func @transform_7(%arg0: i32) -> (i32, i32) {
    %c0_i32 = arith.constant 0 : i32
    %c0_i32_0 = arith.constant 0 : i32
    %c0_i32_1 = arith.constant 0 : i32
    return %c0_i32, %c0_i32_0 : i32, i32
  }
  func.func @transform_8(%arg0: i32) -> (i32, i32) {
    %c0_i32 = arith.constant 0 : i32
    %c0_i32_0 = arith.constant 0 : i32
    %c0_i32_1 = arith.constant 0 : i32
    return %c0_i32, %c0_i32_0 : i32, i32
  }
  func.func @transform_9(%arg0: i32) -> (i32, i32) {
    %c0_i32 = arith.constant 0 : i32
    %c0_i32_0 = arith.constant 0 : i32
    %c0_i32_1 = arith.constant 0 : i32
    return %c0_i32, %c0_i32_0 : i32, i32
  }
  func.func @transform_10(%arg0: i32) -> (i32, i32) {
    %c0_i32 = arith.constant 0 : i32
    %c0_i32_0 = arith.constant 0 : i32
    %c0_i32_1 = arith.constant 0 : i32
    return %c0_i32, %c0_i32_0 : i32, i32
  }
  func.func @transform_11(%arg0: i32) -> (i32, i32) {
    %c0_i32 = arith.constant 0 : i32
    %c0_i32_0 = arith.constant 0 : i32
    %c0_i32_1 = arith.constant 0 : i32
    return %c0_i32, %c0_i32_0 : i32, i32
  }
  func.func @transform_12(%arg0: i32) -> (i32, i32) {
    %c0_i32 = arith.constant 0 : i32
    %c0_i32_0 = arith.constant 0 : i32
    %c0_i32_1 = arith.constant 0 : i32
    return %c0_i32, %c0_i32_0 : i32, i32
  }
  func.func @transform_13(%arg0: i32) -> (i32, i32) {
    %c0_i32 = arith.constant 0 : i32
    %c0_i32_0 = arith.constant 0 : i32
    %c0_i32_1 = arith.constant 0 : i32
    return %c0_i32, %c0_i32_0 : i32, i32
  }
}

module attributes {stable_mosaic.version = 11 : i64} {
  func.func @global_pna_kernel(%arg0: i32, %arg1: memref<1x128xi32, #tpu.memory_space<vmem>>, %arg2: memref<128x32xf32, #tpu.memory_space<vmem>>, %arg3: memref<2x8xf32, #tpu.memory_space<vmem>>, %arg4: memref<8x32xf32, #tpu.memory_space<vmem>>, %arg5: memref<32x32xf32, #tpu.memory_space<vmem>>, %arg6: memref<32x32xf32, #tpu.memory_space<vmem>>, %arg7: memref<32x32xf32, #tpu.memory_space<vmem>>, %arg8: memref<32x32xf32, #tpu.memory_space<vmem>>, %arg9: memref<1x32xf32, #tpu.memory_space<vmem>>, %arg10: memref<1x32xf32, #tpu.memory_space<vmem>>, %arg11: memref<1x32xf32, #tpu.memory_space<vmem>>, %arg12: memref<32x8xf32, #tpu.memory_space<vmem>>, %arg13: memref<1x8xf32, #tpu.memory_space<vmem>>, %arg14: memref<2x8xf32, #tpu.memory_space<vmem>>, %arg15: memref<8x32xf32, #tpu.memory_space<vmem>>, %arg16: memref<8x32xf32, #tpu.memory_space<vmem>>, %arg17: memref<8x1xf32, #tpu.memory_space<vmem>>, %arg18: memref<2x32xf32, #tpu.memory_space<vmem>>, %arg19: memref<2x32xf32, #tpu.memory_space<vmem>>) attributes {dimension_semantics = [#tpu.dimension_semantics<arbitrary>], iteration_bounds = array<i64: 1>, scalar_prefetch = 0 : i64, scratch_operands = 5 : i64, tpu.core_type = #tpu.core_type<tc>, window_params = [{transform_indices = @transform_0, window_bounds = array<i64: 1, 128>}, {transform_indices = @transform_1, window_bounds = array<i64: 128, 32>}, {pipeline_mode = #tpu.pipeline_mode<synchronous>, transform_indices = @transform_2, window_bounds = array<i64: 2, 8>}, {pipeline_mode = #tpu.pipeline_mode<synchronous>, transform_indices = @transform_3, window_bounds = array<i64: 8, 32>}, {pipeline_mode = #tpu.pipeline_mode<synchronous>, transform_indices = @transform_4, window_bounds = array<i64: 32, 32>}, {pipeline_mode = #tpu.pipeline_mode<synchronous>, transform_indices = @transform_5, window_bounds = array<i64: 32, 32>}, {pipeline_mode = #tpu.pipeline_mode<synchronous>, transform_indices = @transform_6, window_bounds = array<i64: 32, 32>}, {pipeline_mode = #tpu.pipeline_mode<synchronous>, transform_indices = @transform_7, window_bounds = array<i64: 32, 32>}, {pipeline_mode = #tpu.pipeline_mode<synchronous>, transform_indices = @transform_8, window_bounds = array<i64: 1, 32>}, {pipeline_mode = #tpu.pipeline_mode<synchronous>, transform_indices = @transform_9, window_bounds = array<i64: 1, 32>}, {pipeline_mode = #tpu.pipeline_mode<synchronous>, transform_indices = @transform_10, window_bounds = array<i64: 1, 32>}, {pipeline_mode = #tpu.pipeline_mode<synchronous>, transform_indices = @transform_11, window_bounds = array<i64: 32, 8>}, {pipeline_mode = #tpu.pipeline_mode<synchronous>, transform_indices = @transform_12, window_bounds = array<i64: 1, 8>}, {pipeline_mode = #tpu.pipeline_mode<synchronous>, transform_indices = @transform_13, window_bounds = array<i64: 2, 8>}]} {
    %c0_i32 = arith.constant 0 : i32
    %0 = arith.cmpi eq, %arg0, %c0_i32 : i32
    %1 = arith.extui %0 : i1 to i32
    %c0_i32_0 = arith.constant 0 : i32
    %2 = arith.cmpi ne, %1, %c0_i32_0 : i32
    scf.if %2 {
      %cst_37 = arith.constant 0.000000e+00 : f32
      %64 = vector.broadcast %cst_37 : f32 to vector<8x32xf32>
      %c0_38 = arith.constant 0 : index
      %c0_39 = arith.constant 0 : index
      %65 = vector.load %arg15[%c0_38, %c0_39] : memref<8x32xf32, #tpu.memory_space<vmem>>, vector<8x32xf32>
      tpu.vector_store %arg15[%c0_38, %c0_39], %64 {strides = array<i32>} : memref<8x32xf32, #tpu.memory_space<vmem>>, vector<8x32xf32>,
      %cst_40 = arith.constant 0.000000e+00 : f32
      %66 = vector.broadcast %cst_40 : f32 to vector<8x32xf32>
      %c0_41 = arith.constant 0 : index
      %c0_42 = arith.constant 0 : index
      %67 = vector.load %arg16[%c0_41, %c0_42] : memref<8x32xf32, #tpu.memory_space<vmem>>, vector<8x32xf32>
      tpu.vector_store %arg16[%c0_41, %c0_42], %66 {strides = array<i32>} : memref<8x32xf32, #tpu.memory_space<vmem>>, vector<8x32xf32>,
      %cst_43 = arith.constant 0.000000e+00 : f32
      %68 = vector.broadcast %cst_43 : f32 to vector<8x1xf32>
      %c0_44 = arith.constant 0 : index
      %c0_45 = arith.constant 0 : index
      %69 = vector.load %arg17[%c0_44, %c0_45] : memref<8x1xf32, #tpu.memory_space<vmem>>, vector<8x1xf32>
      tpu.vector_store %arg17[%c0_44, %c0_45], %68 {strides = array<i32>} : memref<8x1xf32, #tpu.memory_space<vmem>>, vector<8x1xf32>,
      %cst_46 = arith.constant 0xFF800000 : f32
      %70 = vector.broadcast %cst_46 : f32 to vector<2x32xf32>
      %c0_47 = arith.constant 0 : index
      %c0_48 = arith.constant 0 : index
      %71 = vector.load %arg18[%c0_47, %c0_48] : memref<2x32xf32, #tpu.memory_space<vmem>>, vector<2x32xf32>
      tpu.vector_store %arg18[%c0_47, %c0_48], %70 {strides = array<i32>} : memref<2x32xf32, #tpu.memory_space<vmem>>, vector<2x32xf32>,
      %cst_49 = arith.constant 0x7F800000 : f32
      %72 = vector.broadcast %cst_49 : f32 to vector<2x32xf32>
      %c0_50 = arith.constant 0 : index
      %c0_51 = arith.constant 0 : index
      %73 = vector.load %arg19[%c0_50, %c0_51] : memref<2x32xf32, #tpu.memory_space<vmem>>, vector<2x32xf32>
      tpu.vector_store %arg19[%c0_50, %c0_51], %72 {strides = array<i32>} : memref<2x32xf32, #tpu.memory_space<vmem>>, vector<2x32xf32>,
    } else {
    }
    %c0 = arith.constant 0 : index
    %c0_1 = arith.constant 0 : index
    %3 = vector.load %arg2[%c0, %c0_1] : memref<128x32xf32, #tpu.memory_space<vmem>>, vector<128x32xf32>
    %c0_2 = arith.constant 0 : index
    %c0_3 = arith.constant 0 : index
    %4 = vector.load %arg1[%c0_2, %c0_3] : memref<1x128xi32, #tpu.memory_space<vmem>>, vector<1x128xi32>
    %5 = tpu.iota {dimensions = array<i32: 0>} : vector<8x128xi32>
    %6 = vector.broadcast %4 : vector<1x128xi32> to vector<8x128xi32>
    %7 = arith.cmpi eq, %5, %6 : vector<8x128xi32>
    %8 = arith.extui %7 : vector<8x128xi1> to vector<8x128xi32>
    %9 = arith.sitofp %8 : vector<8x128xi32> to vector<8x128xf32>
    %c0_4 = arith.constant 0 : index
    %c0_5 = arith.constant 0 : index
    %10 = vector.load %arg17[%c0_4, %c0_5] : memref<8x1xf32, #tpu.memory_space<vmem>>, vector<8x1xf32>
    %cst = arith.constant dense<0.000000e+00> : vector<8xf32>
    %11 = vector.multi_reduction <add>, %9, %cst [1] : vector<8x128xf32> to vector<8xf32>
    %12 = vector.shape_cast %11 : vector<8xf32> to vector<8x1xf32>
    %13 = arith.addf %10, %12 : vector<8x1xf32>
    %c0_6 = arith.constant 0 : index
    %c0_7 = arith.constant 0 : index
    %14 = vector.load %arg17[%c0_6, %c0_7] : memref<8x1xf32, #tpu.memory_space<vmem>>, vector<8x1xf32>
    tpu.vector_store %arg17[%c0_6, %c0_7], %13 {strides = array<i32>} : memref<8x1xf32, #tpu.memory_space<vmem>>, vector<8x1xf32>,
    %c0_8 = arith.constant 0 : index
    %c0_9 = arith.constant 0 : index
    %15 = vector.load %arg15[%c0_8, %c0_9] : memref<8x32xf32, #tpu.memory_space<vmem>>, vector<8x32xf32>
    %cst_10 = arith.constant dense<0.000000e+00> : vector<8x32xf32>
    %16 = tpu.matmul %9, %3, %cst_10 {dimension_numbers = #tpu.dot_dimension_numbers<[1], [0], [0], [1], [0, 0, 1, 1], [], []>} : vector<8x128xf32>, vector<128x32xf32>, vector<8x32xf32> -> vector<8x32xf32>
    %17 = arith.addf %15, %16 : vector<8x32xf32>
    %c0_11 = arith.constant 0 : index
    %c0_12 = arith.constant 0 : index
    %18 = vector.load %arg15[%c0_11, %c0_12] : memref<8x32xf32, #tpu.memory_space<vmem>>, vector<8x32xf32>
    tpu.vector_store %arg15[%c0_11, %c0_12], %17 {strides = array<i32>} : memref<8x32xf32, #tpu.memory_space<vmem>>, vector<8x32xf32>,
    %c0_13 = arith.constant 0 : index
    %c0_14 = arith.constant 0 : index
    %19 = vector.load %arg16[%c0_13, %c0_14] : memref<8x32xf32, #tpu.memory_space<vmem>>, vector<8x32xf32>
    %20 = arith.mulf %3, %3 : vector<128x32xf32>
    %cst_15 = arith.constant dense<0.000000e+00> : vector<8x32xf32>
    %21 = tpu.matmul %9, %20, %cst_15 {dimension_numbers = #tpu.dot_dimension_numbers<[1], [0], [0], [1], [0, 0, 1, 1], [], []>} : vector<8x128xf32>, vector<128x32xf32>, vector<8x32xf32> -> vector<8x32xf32>
    %22 = arith.addf %19, %21 : vector<8x32xf32>
    %c0_16 = arith.constant 0 : index
    %c0_17 = arith.constant 0 : index
    %23 = vector.load %arg16[%c0_16, %c0_17] : memref<8x32xf32, #tpu.memory_space<vmem>>, vector<8x32xf32>
    tpu.vector_store %arg16[%c0_16, %c0_17], %22 {strides = array<i32>} : memref<8x32xf32, #tpu.memory_space<vmem>>, vector<8x32xf32>,
    %24 = tpu.transpose %9, [1, 0] : vector<8x128xf32> -> vector<128x8xf32>
    %cst_18 = arith.constant 5.000000e-01 : f32
    %25 = vector.broadcast %cst_18 : f32 to vector<128x8xf32>
    %26 = arith.cmpf ogt, %24, %25 : vector<128x8xf32>
    %27 = vector.extract_strided_slice %26 {offsets = [0, 0], sizes = [128, 1], strides = [1, 1]} : vector<128x8xi1> to vector<128x1xi1>
    %cst_19 = arith.constant 0xFF800000 : f32
    %28 = vector.shape_cast %27 : vector<128x1xi1> to vector<128x1xi1>
    %29 = vector.broadcast %28 : vector<128x1xi1> to vector<128x32xi1>
    %30 = vector.broadcast %cst_19 : f32 to vector<128x32xf32>
    %31 = arith.select %29, %3, %30 : vector<128x32xi1>, vector<128x32xf32>
    %cst_20 = arith.constant dense<0xFF800000> : vector<32xf32>
    %32 = vector.multi_reduction <maximumf>, %31, %cst_20 [0] : vector<128x32xf32> to vector<32xf32>
    %33 = vector.shape_cast %32 : vector<32xf32> to vector<1x32xf32>
    %cst_21 = arith.constant 0x7F800000 : f32
    %34 = vector.shape_cast %27 : vector<128x1xi1> to vector<128x1xi1>
    %35 = vector.broadcast %34 : vector<128x1xi1> to vector<128x32xi1>
    %36 = vector.broadcast %cst_21 : f32 to vector<128x32xf32>
    %37 = arith.select %35, %3, %36 : vector<128x32xi1>, vector<128x32xf32>
    %cst_22 = arith.constant dense<0x7F800000> : vector<32xf32>
    %38 = vector.multi_reduction <minimumf>, %37, %cst_22 [0] : vector<128x32xf32> to vector<32xf32>
    %39 = vector.shape_cast %38 : vector<32xf32> to vector<1x32xf32>
    %40 = vector.extract_strided_slice %26 {offsets = [0, 1], sizes = [128, 1], strides = [1, 1]} : vector<128x8xi1> to vector<128x1xi1>
    %cst_23 = arith.constant 0xFF800000 : f32
    %41 = vector.shape_cast %40 : vector<128x1xi1> to vector<128x1xi1>
    %42 = vector.broadcast %41 : vector<128x1xi1> to vector<128x32xi1>
    %43 = vector.broadcast %cst_23 : f32 to vector<128x32xf32>
    %44 = arith.select %42, %3, %43 : vector<128x32xi1>, vector<128x32xf32>
    %cst_24 = arith.constant dense<0xFF800000> : vector<32xf32>
    %45 = vector.multi_reduction <maximumf>, %44, %cst_24 [0] : vector<128x32xf32> to vector<32xf32>
    %46 = vector.shape_cast %45 : vector<32xf32> to vector<1x32xf32>
    %cst_25 = arith.constant 0x7F800000 : f32
    %47 = vector.shape_cast %40 : vector<128x1xi1> to vector<128x1xi1>
    %48 = vector.broadcast %47 : vector<128x1xi1> to vector<128x32xi1>
    %49 = vector.broadcast %cst_25 : f32 to vector<128x32xf32>
    %50 = arith.select %48, %3, %49 : vector<128x32xi1>, vector<128x32xf32>
    %cst_26 = arith.constant dense<0x7F800000> : vector<32xf32>
    %51 = vector.multi_reduction <minimumf>, %50, %cst_26 [0] : vector<128x32xf32> to vector<32xf32>
    %52 = vector.shape_cast %51 : vector<32xf32> to vector<1x32xf32>
    %53 = tpu.concatenate %33, %46 in 0 : vector<1x32xf32>, vector<1x32xf32> -> vector<2x32xf32>
    %54 = tpu.concatenate %39, %52 in 0 : vector<1x32xf32>, vector<1x32xf32> -> vector<2x32xf32>
    %c0_27 = arith.constant 0 : index
    %c0_28 = arith.constant 0 : index
    %55 = vector.load %arg18[%c0_27, %c0_28] : memref<2x32xf32, #tpu.memory_space<vmem>>, vector<2x32xf32>
    %56 = arith.maximumf %55, %53 : vector<2x32xf32>
    %c0_29 = arith.constant 0 : index
    %c0_30 = arith.constant 0 : index
    %57 = vector.load %arg18[%c0_29, %c0_30] : memref<2x32xf32, #tpu.memory_space<vmem>>, vector<2x32xf32>
    tpu.vector_store %arg18[%c0_29, %c0_30], %56 {strides = array<i32>} : memref<2x32xf32, #tpu.memory_space<vmem>>, vector<2x32xf32>,
    %c0_31 = arith.constant 0 : index
    %c0_32 = arith.constant 0 : index
    %58 = vector.load %arg19[%c0_31, %c0_32] : memref<2x32xf32, #tpu.memory_space<vmem>>, vector<2x32xf32>
    %59 = arith.minimumf %58, %54 : vector<2x32xf32>
    %c0_33 = arith.constant 0 : index
    %c0_34 = arith.constant 0 : index
    %60 = vector.load %arg19[%c0_33, %c0_34] : memref<2x32xf32, #tpu.memory_space<vmem>>, vector<2x32xf32>
    tpu.vector_store %arg19[%c0_33, %c0_34], %59 {strides = array<i32>} : memref<2x32xf32, #tpu.memory_space<vmem>>, vector<2x32xf32>,
    %c0_i32_35 = arith.constant 0 : i32
    %61 = arith.cmpi eq, %arg0, %c0_i32_35 : i32
    %62 = arith.extui %61 : i1 to i32
    %c0_i32_36 = arith.constant 0 : i32
    %63 = arith.cmpi ne, %62, %c0_i32_36 : i32
    scf.if %63 {
      %c0_37 = arith.constant 0 : index
      %c0_38 = arith.constant 0 : index
      %64 = vector.load %arg17[%c0_37, %c0_38] : memref<8x1xf32, #tpu.memory_space<vmem>>, vector<2x1xf32>
      %cst_39 = arith.constant 0.000000e+00 : f32
      %65 = vector.broadcast %cst_39 : f32 to vector<2x1xf32>
      %66 = arith.cmpf ogt, %64, %65 : vector<2x1xf32>
      %cst_40 = arith.constant 1.000000e+00 : f32
      %67 = vector.broadcast %cst_40 : f32 to vector<2x1xf32>
      %68 = arith.maximumf %64, %67 : vector<2x1xf32>
      %cst_41 = arith.constant 1.000000e+00 : f32
      %69 = vector.broadcast %cst_41 : f32 to vector<2x1xf32>
      %70 = arith.divf %69, %68 : vector<2x1xf32>
      %cst_42 = arith.constant 0.000000e+00 : f32
      %71 = vector.broadcast %cst_42 : f32 to vector<2x1xf32>
      %72 = arith.select %66, %70, %71 : vector<2x1xi1>, vector<2x1xf32>
      %c0_43 = arith.constant 0 : index
      %c0_44 = arith.constant 0 : index
      %73 = vector.load %arg15[%c0_43, %c0_44] : memref<8x32xf32, #tpu.memory_space<vmem>>, vector<2x32xf32>
      %74 = vector.broadcast %72 : vector<2x1xf32> to vector<2x32xf32>
      %75 = arith.mulf %73, %74 : vector<2x32xf32>
      %c0_45 = arith.constant 0 : index
      %c0_46 = arith.constant 0 : index
      %76 = vector.load %arg16[%c0_45, %c0_46] : memref<8x32xf32, #tpu.memory_space<vmem>>, vector<2x32xf32>
      %77 = vector.broadcast %72 : vector<2x1xf32> to vector<2x32xf32>
      %78 = arith.mulf %76, %77 : vector<2x32xf32>
      %79 = arith.mulf %75, %75 : vector<2x32xf32>
      %80 = arith.subf %78, %79 : vector<2x32xf32>
      %cst_47 = arith.constant 9.99999974E-6 : f32
      %81 = vector.broadcast %cst_47 : f32 to vector<2x32xf32>
      %82 = arith.cmpf ole, %80, %81 : vector<2x32xf32>
      %cst_48 = arith.constant 9.99999974E-6 : f32
      %83 = vector.broadcast %cst_48 : f32 to vector<2x32xf32>
      %84 = arith.maximumf %80, %83 : vector<2x32xf32>
      %85 = math.sqrt %84 : vector<2x32xf32>
      %cst_49 = arith.constant 0.000000e+00 : f32
      %86 = vector.broadcast %cst_49 : f32 to vector<2x32xf32>
      %87 = arith.select %82, %86, %85 : vector<2x32xi1>, vector<2x32xf32>
      %c0_50 = arith.constant 0 : index
      %c0_51 = arith.constant 0 : index
      %88 = vector.load %arg18[%c0_50, %c0_51] : memref<2x32xf32, #tpu.memory_space<vmem>>, vector<2x32xf32>
      %cst_52 = arith.constant 0.000000e+00 : f32
      %89 = vector.shape_cast %66 : vector<2x1xi1> to vector<2x1xi1>
      %90 = vector.broadcast %89 : vector<2x1xi1> to vector<2x32xi1>
      %91 = vector.broadcast %cst_52 : f32 to vector<2x32xf32>
      %92 = arith.select %90, %88, %91 : vector<2x32xi1>, vector<2x32xf32>
      %c0_53 = arith.constant 0 : index
      %c0_54 = arith.constant 0 : index
      %93 = vector.load %arg19[%c0_53, %c0_54] : memref<2x32xf32, #tpu.memory_space<vmem>>, vector<2x32xf32>
      %cst_55 = arith.constant 0.000000e+00 : f32
      %94 = vector.shape_cast %66 : vector<2x1xi1> to vector<2x1xi1>
      %95 = vector.broadcast %94 : vector<2x1xi1> to vector<2x32xi1>
      %96 = vector.broadcast %cst_55 : f32 to vector<2x32xf32>
      %97 = arith.select %95, %93, %96 : vector<2x32xi1>, vector<2x32xf32>
      %c0_56 = arith.constant 0 : index
      %c0_57 = arith.constant 0 : index
      %98 = vector.load %arg3[%c0_56, %c0_57] : memref<2x8xf32, #tpu.memory_space<vmem>>, vector<2x8xf32>
      %c0_58 = arith.constant 0 : index
      %c0_59 = arith.constant 0 : index
      %99 = vector.load %arg4[%c0_58, %c0_59] : memref<8x32xf32, #tpu.memory_space<vmem>>, vector<8x32xf32>
      %cst_60 = arith.constant dense<0.000000e+00> : vector<2x32xf32>
      %100 = tpu.matmul %98, %99, %cst_60 {dimension_numbers = #tpu.dot_dimension_numbers<[1], [0], [0], [1], [0, 0, 1, 1], [], []>} : vector<2x8xf32>, vector<8x32xf32>, vector<2x32xf32> -> vector<2x32xf32>
      %c0_61 = arith.constant 0 : index
      %c0_62 = arith.constant 0 : index
      %101 = vector.load %arg5[%c0_61, %c0_62] : memref<32x32xf32, #tpu.memory_space<vmem>>, vector<32x32xf32>
      %cst_63 = arith.constant dense<0.000000e+00> : vector<2x32xf32>
      %102 = tpu.matmul %75, %101, %cst_63 {dimension_numbers = #tpu.dot_dimension_numbers<[1], [0], [0], [1], [0, 0, 1, 1], [], []>} : vector<2x32xf32>, vector<32x32xf32>, vector<2x32xf32> -> vector<2x32xf32>
      %103 = arith.addf %100, %102 : vector<2x32xf32>
      %c0_64 = arith.constant 0 : index
      %c0_65 = arith.constant 0 : index
      %104 = vector.load %arg6[%c0_64, %c0_65] : memref<32x32xf32, #tpu.memory_space<vmem>>, vector<32x32xf32>
      %cst_66 = arith.constant dense<0.000000e+00> : vector<2x32xf32>
      %105 = tpu.matmul %87, %104, %cst_66 {dimension_numbers = #tpu.dot_dimension_numbers<[1], [0], [0], [1], [0, 0, 1, 1], [], []>} : vector<2x32xf32>, vector<32x32xf32>, vector<2x32xf32> -> vector<2x32xf32>
      %106 = arith.addf %103, %105 : vector<2x32xf32>
      %c0_67 = arith.constant 0 : index
      %c0_68 = arith.constant 0 : index
      %107 = vector.load %arg7[%c0_67, %c0_68] : memref<32x32xf32, #tpu.memory_space<vmem>>, vector<32x32xf32>
      %cst_69 = arith.constant dense<0.000000e+00> : vector<2x32xf32>
      %108 = tpu.matmul %92, %107, %cst_69 {dimension_numbers = #tpu.dot_dimension_numbers<[1], [0], [0], [1], [0, 0, 1, 1], [], []>} : vector<2x32xf32>, vector<32x32xf32>, vector<2x32xf32> -> vector<2x32xf32>
      %109 = arith.addf %106, %108 : vector<2x32xf32>
      %c0_70 = arith.constant 0 : index
      %c0_71 = arith.constant 0 : index
      %110 = vector.load %arg8[%c0_70, %c0_71] : memref<32x32xf32, #tpu.memory_space<vmem>>, vector<32x32xf32>
      %cst_72 = arith.constant dense<0.000000e+00> : vector<2x32xf32>
      %111 = tpu.matmul %97, %110, %cst_72 {dimension_numbers = #tpu.dot_dimension_numbers<[1], [0], [0], [1], [0, 0, 1, 1], [], []>} : vector<2x32xf32>, vector<32x32xf32>, vector<2x32xf32> -> vector<2x32xf32>
      %112 = arith.addf %109, %111 : vector<2x32xf32>
      %c0_73 = arith.constant 0 : index
      %c0_74 = arith.constant 0 : index
      %113 = vector.load %arg9[%c0_73, %c0_74] : memref<1x32xf32, #tpu.memory_space<vmem>>, vector<1x32xf32>
      %114 = vector.broadcast %113 : vector<1x32xf32> to vector<2x32xf32>
      %115 = arith.addf %112, %114 : vector<2x32xf32>
      %cst_75 = arith.constant 0.000000e+00 : f32
      %116 = vector.broadcast %cst_75 : f32 to vector<2x32xf32>
      %117 = arith.cmpf ogt, %115, %116 : vector<2x32xf32>
      %118 = math.exp %115 : vector<2x32xf32>
      %cst_76 = arith.constant 1.000000e+00 : f32
      %119 = vector.broadcast %cst_76 : f32 to vector<2x32xf32>
      %120 = arith.subf %118, %119 : vector<2x32xf32>
      %cst_77 = arith.constant 1.67326319 : f32
      %121 = vector.broadcast %cst_77 : f32 to vector<2x32xf32>
      %122 = arith.mulf %121, %120 : vector<2x32xf32>
      %123 = arith.select %117, %115, %122 : vector<2x32xi1>, vector<2x32xf32>
      %cst_78 = arith.constant 1.05070102 : f32
      %124 = vector.broadcast %cst_78 : f32 to vector<2x32xf32>
      %125 = arith.mulf %124, %123 : vector<2x32xf32>
      %cst_79 = arith.constant dense<0.000000e+00> : vector<2xf32>
      %126 = vector.multi_reduction <add>, %125, %cst_79 [1] : vector<2x32xf32> to vector<2xf32>
      %127 = vector.shape_cast %126 : vector<2xf32> to vector<2x1xf32>
      %cst_80 = arith.constant 3.200000e+01 : f32
      %128 = vector.broadcast %cst_80 : f32 to vector<2x1xf32>
      %129 = arith.divf %127, %128 : vector<2x1xf32>
      %130 = vector.broadcast %129 : vector<2x1xf32> to vector<2x32xf32>
      %131 = arith.subf %125, %130 : vector<2x32xf32>
      %132 = arith.mulf %131, %131 : vector<2x32xf32>
      %cst_81 = arith.constant dense<0.000000e+00> : vector<2xf32>
      %133 = vector.multi_reduction <add>, %132, %cst_81 [1] : vector<2x32xf32> to vector<2xf32>
      %134 = vector.shape_cast %133 : vector<2xf32> to vector<2x1xf32>
      %cst_82 = arith.constant 3.200000e+01 : f32
      %135 = vector.broadcast %cst_82 : f32 to vector<2x1xf32>
      %136 = arith.divf %134, %135 : vector<2x1xf32>
      %137 = vector.broadcast %129 : vector<2x1xf32> to vector<2x32xf32>
      %138 = arith.subf %125, %137 : vector<2x32xf32>
      %cst_83 = arith.constant 9.99999974E-6 : f32
      %139 = vector.broadcast %cst_83 : f32 to vector<2x1xf32>
      %140 = arith.addf %136, %139 : vector<2x1xf32>
      %141 = math.rsqrt %140 : vector<2x1xf32>
      %142 = vector.broadcast %141 : vector<2x1xf32> to vector<2x32xf32>
      %143 = arith.mulf %138, %142 : vector<2x32xf32>
      %c0_84 = arith.constant 0 : index
      %c0_85 = arith.constant 0 : index
      %144 = vector.load %arg10[%c0_84, %c0_85] : memref<1x32xf32, #tpu.memory_space<vmem>>, vector<1x32xf32>
      %145 = vector.broadcast %144 : vector<1x32xf32> to vector<2x32xf32>
      %146 = arith.mulf %143, %145 : vector<2x32xf32>
      %c0_86 = arith.constant 0 : index
      %c0_87 = arith.constant 0 : index
      %147 = vector.load %arg11[%c0_86, %c0_87] : memref<1x32xf32, #tpu.memory_space<vmem>>, vector<1x32xf32>
      %148 = vector.broadcast %147 : vector<1x32xf32> to vector<2x32xf32>
      %149 = arith.addf %146, %148 : vector<2x32xf32>
      %c0_88 = arith.constant 0 : index
      %c0_89 = arith.constant 0 : index
      %150 = vector.load %arg12[%c0_88, %c0_89] : memref<32x8xf32, #tpu.memory_space<vmem>>, vector<32x8xf32>
      %cst_90 = arith.constant dense<0.000000e+00> : vector<2x8xf32>
      %151 = tpu.matmul %149, %150, %cst_90 {dimension_numbers = #tpu.dot_dimension_numbers<[1], [0], [0], [1], [0, 0, 1, 1], [], []>} : vector<2x32xf32>, vector<32x8xf32>, vector<2x8xf32> -> vector<2x8xf32>
      %c0_91 = arith.constant 0 : index
      %c0_92 = arith.constant 0 : index
      %152 = vector.load %arg13[%c0_91, %c0_92] : memref<1x8xf32, #tpu.memory_space<vmem>>, vector<1x8xf32>
      %153 = vector.broadcast %152 : vector<1x8xf32> to vector<2x8xf32>
      %154 = arith.addf %151, %153 : vector<2x8xf32>
      %c0_93 = arith.constant 0 : index
      %c0_94 = arith.constant 0 : index
      %155 = vector.load %arg14[%c0_93, %c0_94] : memref<2x8xf32, #tpu.memory_space<vmem>>, vector<2x8xf32>
      tpu.vector_store %arg14[%c0_93, %c0_94], %154 {strides = array<i32>} : memref<2x8xf32, #tpu.memory_space<vmem>>, vector<2x8xf32>,
    } else {
    }
    return
  }
  func.func @transform_0(%arg0: i32) -> (i32, i32) {
    %c0_i32 = arith.constant 0 : i32
    %c0_i32_0 = arith.constant 0 : i32
    return %c0_i32, %arg0 : i32, i32
  }
  func.func @transform_1(%arg0: i32) -> (i32, i32) {
    %c0_i32 = arith.constant 0 : i32
    %c0_i32_0 = arith.constant 0 : i32
    return %arg0, %c0_i32 : i32, i32
  }
  func.func @transform_2(%arg0: i32) -> (i32, i32) {
    %c0_i32 = arith.constant 0 : i32
    %c0_i32_0 = arith.constant 0 : i32
    %c0_i32_1 = arith.constant 0 : i32
    return %c0_i32, %c0_i32_0 : i32, i32
  }
  func.func @transform_3(%arg0: i32) -> (i32, i32) {
    %c0_i32 = arith.constant 0 : i32
    %c0_i32_0 = arith.constant 0 : i32
    %c0_i32_1 = arith.constant 0 : i32
    return %c0_i32, %c0_i32_0 : i32, i32
  }
  func.func @transform_4(%arg0: i32) -> (i32, i32) {
    %c0_i32 = arith.constant 0 : i32
    %c0_i32_0 = arith.constant 0 : i32
    %c0_i32_1 = arith.constant 0 : i32
    return %c0_i32, %c0_i32_0 : i32, i32
  }
  func.func @transform_5(%arg0: i32) -> (i32, i32) {
    %c0_i32 = arith.constant 0 : i32
    %c0_i32_0 = arith.constant 0 : i32
    %c0_i32_1 = arith.constant 0 : i32
    return %c0_i32, %c0_i32_0 : i32, i32
  }
  func.func @transform_6(%arg0: i32) -> (i32, i32) {
    %c0_i32 = arith.constant 0 : i32
    %c0_i32_0 = arith.constant 0 : i32
    %c0_i32_1 = arith.constant 0 : i32
    return %c0_i32, %c0_i32_0 : i32, i32
  }
  func.func @transform_7(%arg0: i32) -> (i32, i32) {
    %c0_i32 = arith.constant 0 : i32
    %c0_i32_0 = arith.constant 0 : i32
    %c0_i32_1 = arith.constant 0 : i32
    return %c0_i32, %c0_i32_0 : i32, i32
  }
  func.func @transform_8(%arg0: i32) -> (i32, i32) {
    %c0_i32 = arith.constant 0 : i32
    %c0_i32_0 = arith.constant 0 : i32
    %c0_i32_1 = arith.constant 0 : i32
    return %c0_i32, %c0_i32_0 : i32, i32
  }
  func.func @transform_9(%arg0: i32) -> (i32, i32) {
    %c0_i32 = arith.constant 0 : i32
    %c0_i32_0 = arith.constant 0 : i32
    %c0_i32_1 = arith.constant 0 : i32
    return %c0_i32, %c0_i32_0 : i32, i32
  }
  func.func @transform_10(%arg0: i32) -> (i32, i32) {
    %c0_i32 = arith.constant 0 : i32
    %c0_i32_0 = arith.constant 0 : i32
    %c0_i32_1 = arith.constant 0 : i32
    return %c0_i32, %c0_i32_0 : i32, i32
  }
  func.func @transform_11(%arg0: i32) -> (i32, i32) {
    %c0_i32 = arith.constant 0 : i32
    %c0_i32_0 = arith.constant 0 : i32
    %c0_i32_1 = arith.constant 0 : i32
    return %c0_i32, %c0_i32_0 : i32, i32
  }
  func.func @transform_12(%arg0: i32) -> (i32, i32) {
    %c0_i32 = arith.constant 0 : i32
    %c0_i32_0 = arith.constant 0 : i32
    %c0_i32_1 = arith.constant 0 : i32
    return %c0_i32, %c0_i32_0 : i32, i32
  }
  func.func @transform_13(%arg0: i32) -> (i32, i32) {
    %c0_i32 = arith.constant 0 : i32
    %c0_i32_0 = arith.constant 0 : i32
    %c0_i32_1 = arith.constant 0 : i32
    return %c0_i32, %c0_i32_0 : i32, i32
  }
}

</mosaic_0001>

<llo_original>
// kernel: tpu_custom_call.1
$region0: #{tpu_custom_call.1}
  #allocation0 [shape = 'u32[]', space=smem, size = 0x4, offset = 0x4, fixed_abs, tag = 'smem constant byte address 0x4 - core index']
  #allocation1 [shape = 'u32[144,128]{1,0:T(1,128)}', space=vmem, size = 0x12000, scoped, tag = 'internal scratch']
  #allocation2 [shape = 'f32[8,32]{1,0:T(8,128)}', space=vmem, size = 0x1000, scoped, tag = 'scratch operand']
  #allocation3 [shape = 'f32[8,32]{1,0:T(8,128)}', space=vmem, size = 0x1000, scoped, tag = 'scratch operand']
  #allocation4 [shape = 'f32[8,1]{1,0:T(8,128)}', space=vmem, size = 0x1000, scoped, tag = 'scratch operand']
  #allocation5 [shape = 'f32[2,32]{1,0:T(2,128)}', space=vmem, size = 0x400, scoped, tag = 'scratch operand']
  #allocation6 [shape = 'f32[2,32]{1,0:T(2,128)}', space=vmem, size = 0x400, scoped, tag = 'scratch operand']
  %s0 = inlined_call_operand.vmem [shape: s32[1,128], index: 0, kind: input, shape index: {}]
  %s1 = inlined_call_operand.vmem [shape: f32[128,32], index: 1, kind: input, shape index: {}]
  %s2 = inlined_call_operand.vmem [shape: f32[2,8], index: 2, kind: input, shape index: {}]
  %s3 = inlined_call_operand.vmem [shape: f32[8,32], index: 3, kind: input, shape index: {}]
  %s4 = inlined_call_operand.vmem [shape: f32[32,32], index: 4, kind: input, shape index: {}]
  %s5 = inlined_call_operand.vmem [shape: f32[32,32], index: 5, kind: input, shape index: {}]
  %s6 = inlined_call_operand.vmem [shape: f32[32,32], index: 6, kind: input, shape index: {}]
  %s7 = inlined_call_operand.vmem [shape: f32[32,32], index: 7, kind: input, shape index: {}]
  %s8 = inlined_call_operand.vmem [shape: f32[1,32], index: 8, kind: input, shape index: {}]
  %s9 = inlined_call_operand.vmem [shape: f32[1,32], index: 9, kind: input, shape index: {}]
  %s10 = inlined_call_operand.vmem [shape: f32[1,32], index: 10, kind: input, shape index: {}]
  %s11 = inlined_call_operand.vmem [shape: f32[32,8], index: 11, kind: input, shape index: {}]
  %s12 = inlined_call_operand.vmem [shape: f32[1,8], index: 12, kind: input, shape index: {}]
  %s13 = inlined_call_operand.hbm [shape: f32[2,8], index: 13, kind: output, shape index: {}]
  %s14 = sld [smem:[#allocation0]]
  $region70: #{tpu_custom_call.1} parent=0
    _
  %s16 = ssub.s32 1, %s14
  %s17 = scalar_select 0, %s16, %s14
  $region1: #{tpu_custom_call.1} parent=0
    #allocation7 [shape = 'u8[1024]{0}', space=vmem, size = 0x400, scoped, tag = 'output window, operand 0, single buffered']
    #allocation8 [shape = 's32[1]{0}', space=sflag, size = 0x4, scoped, tag = 'scoped memory for tpu_custom_call.1']
    %18 = vsyncpa [#allocation8], 0
    // Predicated region
    $region2: #{tpu_custom_call.1} parent=1 // pred_check
      _
    $region3: #{tpu_custom_call.1} parent=1 // pred_check_branch
      %20 = sbr.rel (0) target = $region5
    $region4: #{tpu_custom_call.1} parent=1 // pred_region
      _
    $region5: #{tpu_custom_call.1} parent=1 // pred_fallthru
      _
    // Predicated region
    $region6: #{tpu_custom_call.1} parent=1 // pred_check
      _
    $region7: #{tpu_custom_call.1} parent=1 // pred_check_branch
      %22 = sbr.rel (0) target = $region9
    $region8: #{tpu_custom_call.1} parent=1 // pred_region
      _
    $region9: #{tpu_custom_call.1} parent=1 // pred_fallthru
      _
    // Predicated region
    $region10: #{tpu_custom_call.1} parent=1 // pred_check
      _
    $region11: #{tpu_custom_call.1} parent=1 // pred_check_branch
      %24 = sbr.rel (0) target = $region13
    $region12: #{tpu_custom_call.1} parent=1 // pred_region
      _
    $region13: #{tpu_custom_call.1} parent=1 // pred_fallthru
      _
    // Predicated region
    $region14: #{tpu_custom_call.1} parent=1 // pred_check
      _
    $region15: #{tpu_custom_call.1} parent=1 // pred_check_branch
      %26 = sbr.rel (0) target = $region17
    $region16: #{tpu_custom_call.1} parent=1 // pred_region
      _
    $region17: #{tpu_custom_call.1} parent=1 // pred_fallthru
      _
    // Predicated region
    $region18: #{tpu_custom_call.1} parent=1 // pred_check
      _
    $region19: #{tpu_custom_call.1} parent=1 // pred_check_branch
      %28 = sbr.rel (0) target = $region21
    $region20: #{tpu_custom_call.1} parent=1 // pred_region
      _
    $region21: #{tpu_custom_call.1} parent=1 // pred_fallthru
      _
    // Predicated region
    $region22: #{tpu_custom_call.1} parent=1 // pred_check
      _
    $region23: #{tpu_custom_call.1} parent=1 // pred_check_branch
      %30 = sbr.rel (0) target = $region25
    $region24: #{tpu_custom_call.1} parent=1 // pred_region
      _
    $region25: #{tpu_custom_call.1} parent=1 // pred_fallthru
      _
    // Predicated region
    $region26: #{tpu_custom_call.1} parent=1 // pred_check
      _
    $region27: #{tpu_custom_call.1} parent=1 // pred_check_branch
      %32 = sbr.rel (0) target = $region29
    $region28: #{tpu_custom_call.1} parent=1 // pred_region
      _
    $region29: #{tpu_custom_call.1} parent=1 // pred_fallthru
      _
    // Predicated region
    $region30: #{tpu_custom_call.1} parent=1 // pred_check
      _
    $region31: #{tpu_custom_call.1} parent=1 // pred_check_branch
      %34 = sbr.rel (0) target = $region33
    $region32: #{tpu_custom_call.1} parent=1 // pred_region
      _
    $region33: #{tpu_custom_call.1} parent=1 // pred_fallthru
      _
    // Predicated region
    $region34: #{tpu_custom_call.1} parent=1 // pred_check
      _
    $region35: #{tpu_custom_call.1} parent=1 // pred_check_branch
      %36 = sbr.rel (0) target = $region37
    $region36: #{tpu_custom_call.1} parent=1 // pred_region
      _
    $region37: #{tpu_custom_call.1} parent=1 // pred_fallthru
      _
    // Predicated region
    $region38: #{tpu_custom_call.1} parent=1 // pred_check
      _
    $region39: #{tpu_custom_call.1} parent=1 // pred_check_branch
      %38 = sbr.rel (0) target = $region41
    $region40: #{tpu_custom_call.1} parent=1 // pred_region
      _
    $region41: #{tpu_custom_call.1} parent=1 // pred_fallthru
      _
    // Predicated region
    $region42: #{tpu_custom_call.1} parent=1 // pred_check
      _
    $region43: #{tpu_custom_call.1} parent=1 // pred_check_branch
      %40 = sbr.rel (0) target = $region45
    $region44: #{tpu_custom_call.1} parent=1 // pred_region
      _
    $region45: #{tpu_custom_call.1} parent=1 // pred_fallthru
      _
    // Predicated region
    $region46: #{tpu_custom_call.1} parent=1 // pred_check
      _
    $region47: #{tpu_custom_call.1} parent=1 // pred_check_branch
      %42 = sbr.rel (0) target = $region49
    $region48: #{tpu_custom_call.1} parent=1 // pred_region
      _
    $region49: #{tpu_custom_call.1} parent=1 // pred_fallthru
      _
    // Predicated region
    $region50: #{tpu_custom_call.1} parent=1 // pred_check
      _
    $region51: #{tpu_custom_call.1} parent=1 // pred_check_branch
      %44 = sbr.rel (0) target = $region53
    $region52: #{tpu_custom_call.1} parent=1 // pred_region
      _
    $region53: #{tpu_custom_call.1} parent=1 // pred_fallthru
      _
    %p45 = scmp.eq.s32.totalorder 0, 0
    // Predicated region
    $region54: #{tpu_custom_call.1} parent=1 // pred_check
      %p46 = pneg %p45
    $region55: #{tpu_custom_call.1} parent=1 // pred_check_branch
      %48 = sbr.rel (%p46) target = $region57
    $region56: #{tpu_custom_call.1} parent=1 // pred_region
      %vm49 = vcmask 261120
      %50 = vst.msk [vmem:[#allocation2] sm:$0xff] %vm49, 0.0
      %51 = vst.msk [vmem:[#allocation3] sm:$0xff] %vm49, 0.0
      %vm52 = vcmask 7168
      %53 = vst.msk [vmem:[#allocation4] sm:$0xff] %vm52, 0.0
      %vm54 = vcmask 254976
      %55 = vst.msk [vmem:[#allocation5] sm:$0x3] %vm54, -inf
      %56 = vst.msk [vmem:[#allocation6] sm:$0x3] %vm54, inf
    $region57: #{tpu_custom_call.1} parent=1 // pred_fallthru
      _
    %v57 = vld [vmem:[%s1] sm:$0xff]
    %v58 = vld [vmem:[%s1 + $0x8] sm:$0xff]
    %v59 = vld [vmem:[%s1 + $0x10] sm:$0xff]
    %v60 = vld [vmem:[%s1 + $0x18] sm:$0xff]
    %v61 = vld [vmem:[%s1 + $0x20] sm:$0xff]
    %v62 = vld [vmem:[%s1 + $0x28] sm:$0xff]
    %v63 = vld [vmem:[%s1 + $0x30] sm:$0xff]
    %v64 = vld [vmem:[%s1 + $0x38] sm:$0xff]
    %v65 = vld [vmem:[%s1 + $0x40] sm:$0xff]
    %v66 = vld [vmem:[%s1 + $0x48] sm:$0xff]
    %v67 = vld [vmem:[%s1 + $0x50] sm:$0xff]
    %v68 = vld [vmem:[%s1 + $0x58] sm:$0xff]
    %v69 = vld [vmem:[%s1 + $0x60] sm:$0xff]
    %v70 = vld [vmem:[%s1 + $0x68] sm:$0xff]
    %v71 = vld [vmem:[%s1 + $0x70] sm:$0xff]
    %v72 = vld [vmem:[%s1 + $0x78] sm:$0xff]
    %v73 = vld [vmem:[%s0] sm:$0x1]
    %v74 = vlaneseq
    %v75 = vshrl.u32 %v74, 7
    %v76 = vlaneseq
    %v77 = vshrl.u32 %v76, 7
    %v78 = vsub.s32 0, %v77
    %v79 = vrot.slane %v73, %v78
    %vm80 = vcmp.eq.s32.totalorder %v75, %v79
    %v81 = vsel %vm80, 1, 0
    %v82 = vcvt.s32.f32 %v81
    %v83 = vld [vmem:[#allocation4] sm:$0xff]
    %84 = vadd.xlane.f32.xlu0 %v82
    %v85 = vpop.xlane.xlu0 %84
    %v86 = vadd.f32 %v83, %v85
    %vm87 = vcmask 7168
    %88 = vst.msk [vmem:[#allocation4] sm:$0xff] %vm87, %v86
    %v89 = vld [vmem:[#allocation2] sm:$0xff]
    %90 = vmatprep.subr.mxu0 0.0
    %91 = vmatpush1.msra.mxu0 %v72
    %92 = vmatprep.subr.mxu0 0.0
    %93 = vmatpush1.msra.mxu0 %v71
    %94 = vmatprep.subr.mxu0 0.0
    %95 = vmatpush1.msra.mxu0 %v70
    %96 = vmatprep.subr.mxu0 0.0
    %97 = vmatpush1.msra.mxu0 %v69
    %98 = vmatprep.subr.mxu0 0.0
    %99 = vmatpush1.msra.mxu0 %v68
    %100 = vmatprep.subr.mxu0 0.0
    %101 = vmatpush1.msra.mxu0 %v67
    %102 = vmatprep.subr.mxu0 0.0
    %103 = vmatpush1.msra.mxu0 %v66
    %104 = vmatprep.subr.mxu0 0.0
    %105 = vmatpush1.msra.mxu0 %v65
    %106 = vmatprep.subr.mxu0 0.0
    %107 = vmatpush1.msra.mxu0 %v64
    %108 = vmatprep.subr.mxu0 0.0
    %109 = vmatpush1.msra.mxu0 %v63
    %110 = vmatprep.subr.mxu0 0.0
    %111 = vmatpush1.msra.mxu0 %v62
    %112 = vmatprep.subr.mxu0 0.0
    %113 = vmatpush1.msra.mxu0 %v61
    %114 = vmatprep.subr.mxu0 0.0
    %115 = vmatpush1.msra.mxu0 %v60
    %116 = vmatprep.subr.mxu0 0.0
    %117 = vmatpush1.msra.mxu0 %v59
    %118 = vmatprep.subr.mxu0 0.0
    %119 = vmatpush1.msra.mxu0 %v58
    %120 = vmatprep.subr.mxu0 0.0
    %121 = vmatpush1.msra.mxu0 %v57
    %122 = vmatprep.subr.mxu0 0.0
    %123 = vmatpush2.msra.mxu0 0.0
    %124 = vmatprep.subr.mxu0 0.0
    %125 = vmatpush2.msra.mxu0 0.0
    %126 = vmatprep.subr.mxu0 0.0
    %127 = vmatpush2.msra.mxu0 0.0
    %128 = vmatprep.subr.mxu0 0.0
    %129 = vmatpush2.msra.mxu0 0.0
    %130 = vmatprep.subr.mxu0 0.0
    %131 = vmatpush2.msra.mxu0 0.0
    %132 = vmatprep.subr.mxu0 0.0
    %133 = vmatpush2.msra.mxu0 0.0
    %134 = vmatprep.subr.mxu0 0.0
    %135 = vmatpush2.msra.mxu0 0.0
    %136 = vmatprep.subr.mxu0 0.0
    %137 = vmatpush2.msra.mxu0 0.0
    %138 = vmatprep.subr.mxu0 0.0
    %139 = vmatpush2.msra.mxu0 0.0
    %140 = vmatprep.subr.mxu0 0.0
    %141 = vmatpush2.msra.mxu0 0.0
    %142 = vmatprep.subr.mxu0 0.0
    %143 = vmatpush2.msra.mxu0 0.0
    %144 = vmatprep.subr.mxu0 0.0
    %145 = vmatpush2.msra.mxu0 0.0
    %146 = vmatprep.subr.mxu0 0.0
    %147 = vmatpush2.msra.mxu0 0.0
    %148 = vmatprep.subr.mxu0 0.0
    %149 = vmatpush2.msra.mxu0 0.0
    %150 = vmatprep.subr.mxu0 0.0
    %151 = vmatpush2.msra.mxu0 0.0
    %152 = vmatprep.subr.mxu0 0.0
    %153 = vmatpush2.msra.mxu0 0.0
    %154 = vmatprep.mubr.f32.mxu0 0.0
    %155 = vmatmul.mubr.f32.gmra.mxu0 %v82
    %v156 = vpop.f32.mrf.mxu0
    %v157 = vadd.f32 0.0, %v156
    %v158 = vpop.f32.mrf.mxu0
    %159 = vdwg.mxu0
    %v160 = vadd.f32 %v89, %v157
    %vm161 = vcmask 261120
    %162 = vst.msk [vmem:[#allocation2] sm:$0xff] %vm161, %v160
    %v163 = vld [vmem:[#allocation3] sm:$0xff]
    %v164 = vmul.f32 %v57, %v57
    %v165 = vmul.f32 %v58, %v58
    %v166 = vmul.f32 %v59, %v59
    %v167 = vmul.f32 %v60, %v60
    %v168 = vmul.f32 %v61, %v61
    %v169 = vmul.f32 %v62, %v62
    %v170 = vmul.f32 %v63, %v63
    %v171 = vmul.f32 %v64, %v64
    %v172 = vmul.f32 %v65, %v65
    %v173 = vmul.f32 %v66, %v66
    %v174 = vmul.f32 %v67, %v67
    %v175 = vmul.f32 %v68, %v68
    %v176 = vmul.f32 %v69, %v69
    %v177 = vmul.f32 %v70, %v70
    %v178 = vmul.f32 %v71, %v71
    %v179 = vmul.f32 %v72, %v72
    %180 = vmatprep.subr.mxu0 0.0
    %181 = vmatpush1.msra.mxu0 %v179
    %182 = vmatprep.subr.mxu0 0.0
    %183 = vmatpush1.msra.mxu0 %v178
    %184 = vmatprep.subr.mxu0 0.0
    %185 = vmatpush1.msra.mxu0 %v177
    %186 = vmatprep.subr.mxu0 0.0
    %187 = vmatpush1.msra.mxu0 %v176
    %188 = vmatprep.subr.mxu0 0.0
    %189 = vmatpush1.msra.mxu0 %v175
    %190 = vmatprep.subr.mxu0 0.0
    %191 = vmatpush1.msra.mxu0 %v174
    %192 = vmatprep.subr.mxu0 0.0
    %193 = vmatpush1.msra.mxu0 %v173
    %194 = vmatprep.subr.mxu0 0.0
    %195 = vmatpush1.msra.mxu0 %v172
    %196 = vmatprep.subr.mxu0 0.0
    %197 = vmatpush1.msra.mxu0 %v171
    %198 = vmatprep.subr.mxu0 0.0
    %199 = vmatpush1.msra.mxu0 %v170
    %200 = vmatprep.subr.mxu0 0.0
    %201 = vmatpush1.msra.mxu0 %v169
    %202 = vmatprep.subr.mxu0 0.0
    %203 = vmatpush1.msra.mxu0 %v168
    %204 = vmatprep.subr.mxu0 0.0
    %205 = vmatpush1.msra.mxu0 %v167
    %206 = vmatprep.subr.mxu0 0.0
    %207 = vmatpush1.msra.mxu0 %v166
    %208 = vmatprep.subr.mxu0 0.0
    %209 = vmatpush1.msra.mxu0 %v165
    %210 = vmatprep.subr.mxu0 0.0
    %211 = vmatpush1.msra.mxu0 %v164
    %212 = vmatprep.subr.mxu0 0.0
    %213 = vmatpush2.msra.mxu0 0.0
    %214 = vmatprep.subr.mxu0 0.0
    %215 = vmatpush2.msra.mxu0 0.0
    %216 = vmatprep.subr.mxu0 0.0
    %217 = vmatpush2.msra.mxu0 0.0
    %218 = vmatprep.subr.mxu0 0.0
    %219 = vmatpush2.msra.mxu0 0.0
    %220 = vmatprep.subr.mxu0 0.0
    %221 = vmatpush2.msra.mxu0 0.0
    %222 = vmatprep.subr.mxu0 0.0
    %223 = vmatpush2.msra.mxu0 0.0
    %224 = vmatprep.subr.mxu0 0.0
    %225 = vmatpush2.msra.mxu0 0.0
    %226 = vmatprep.subr.mxu0 0.0
    %227 = vmatpush2.msra.mxu0 0.0
    %228 = vmatprep.subr.mxu0 0.0
    %229 = vmatpush2.msra.mxu0 0.0
    %230 = vmatprep.subr.mxu0 0.0
    %231 = vmatpush2.msra.mxu0 0.0
    %232 = vmatprep.subr.mxu0 0.0
    %233 = vmatpush2.msra.mxu0 0.0
    %234 = vmatprep.subr.mxu0 0.0
    %235 = vmatpush2.msra.mxu0 0.0
    %236 = vmatprep.subr.mxu0 0.0
    %237 = vmatpush2.msra.mxu0 0.0
    %238 = vmatprep.subr.mxu0 0.0
    %239 = vmatpush2.msra.mxu0 0.0
    %240 = vmatprep.subr.mxu0 0.0
    %241 = vmatpush2.msra.mxu0 0.0
    %242 = vmatprep.subr.mxu0 0.0
    %243 = vmatpush2.msra.mxu0 0.0
    %244 = vmatprep.mubr.f32.mxu0 0.0
    %245 = vmatmul.mubr.f32.gmra.mxu0 %v82
    %v246 = vpop.f32.mrf.mxu0
    %v247 = vadd.f32 0.0, %v246
    %v248 = vpop.f32.mrf.mxu0
    %249 = vdwg.mxu0
    %v250 = vadd.f32 %v163, %v247
    %251 = vst.msk [vmem:[#allocation3] sm:$0xff] %vm161, %v250
    %252 = vxpose.xlu0.b32.start [1/16] %v82, 128
    %253 = vxpose.xlu0.b32.cont [2/16] 0.0, 128
    %254 = vxpose.xlu0.b32.cont [3/16] 0.0, 128
    %255 = vxpose.xlu0.b32.cont [4/16] 0.0, 128
    %256 = vxpose.xlu0.b32.cont [5/16] 0.0, 128
    %257 = vxpose.xlu0.b32.cont [6/16] 0.0, 128
    %258 = vxpose.xlu0.b32.cont [7/16] 0.0, 128
    %259 = vxpose.xlu0.b32.cont [8/16] 0.0, 128
    %260 = vxpose.xlu0.b32.cont [9/16] 0.0, 128
    %261 = vxpose.xlu0.b32.cont [10/16] 0.0, 128
    %262 = vxpose.xlu0.b32.cont [11/16] 0.0, 128
    %263 = vxpose.xlu0.b32.cont [12/16] 0.0, 128
    %264 = vxpose.xlu0.b32.cont [13/16] 0.0, 128
    %265 = vxpose.xlu0.b32.cont [14/16] 0.0, 128
    %266 = vxpose.xlu0.b32.cont [15/16] 0.0, 128
    %267 = vxpose.xlu0.b32.end [16/16] 0.0, 128
    %v268 = vpop.trf.xlu0
    %v269 = vpop.trf.xlu0
    %v270 = vpop.trf.xlu0
    %v271 = vpop.trf.xlu0
    %v272 = vpop.trf.xlu0
    %v273 = vpop.trf.xlu0
    %v274 = vpop.trf.xlu0
    %v275 = vpop.trf.xlu0
    %v276 = vpop.trf.xlu0
    %v277 = vpop.trf.xlu0
    %v278 = vpop.trf.xlu0
    %v279 = vpop.trf.xlu0
    %v280 = vpop.trf.xlu0
    %v281 = vpop.trf.xlu0
    %v282 = vpop.trf.xlu0
    %v283 = vpop.trf.xlu0
    %vm284 = vcmp.gt.f32.partialorder %v268, 0.5
    %vm285 = vcmp.gt.f32.partialorder %v269, 0.5
    %vm286 = vcmp.gt.f32.partialorder %v270, 0.5
    %vm287 = vcmp.gt.f32.partialorder %v271, 0.5
    %vm288 = vcmp.gt.f32.partialorder %v272, 0.5
    %vm289 = vcmp.gt.f32.partialorder %v273, 0.5
    %vm290 = vcmp.gt.f32.partialorder %v274, 0.5
    %vm291 = vcmp.gt.f32.partialorder %v275, 0.5
    %vm292 = vcmp.gt.f32.partialorder %v276, 0.5
    %vm293 = vcmp.gt.f32.partialorder %v277, 0.5
    %vm294 = vcmp.gt.f32.partialorder %v278, 0.5
    %vm295 = vcmp.gt.f32.partialorder %v279, 0.5
    %vm296 = vcmp.gt.f32.partialorder %v280, 0.5
    %vm297 = vcmp.gt.f32.partialorder %v281, 0.5
    %vm298 = vcmp.gt.f32.partialorder %v282, 0.5
    %vm299 = vcmp.gt.f32.partialorder %v283, 0.5
    %v300 = vsel %vm284, 1, 0
    %v301 = vsel %vm285, 1, 0
    %v302 = vsel %vm286, 1, 0
    %v303 = vsel %vm287, 1, 0
    %v304 = vsel %vm288, 1, 0
    %v305 = vsel %vm289, 1, 0
    %v306 = vsel %vm290, 1, 0
    %v307 = vsel %vm291, 1, 0
    %v308 = vsel %vm292, 1, 0
    %v309 = vsel %vm293, 1, 0
    %v310 = vsel %vm294, 1, 0
    %v311 = vsel %vm295, 1, 0
    %v312 = vsel %vm296, 1, 0
    %v313 = vsel %vm297, 1, 0
    %v314 = vsel %vm298, 1, 0
    %v315 = vsel %vm299, 1, 0
    %316 = vset.pattern.permute.xlu0 0
    %317 = vperm.xlu0 %316, %v300
    %v318 = vpop.permute.xlu0 %317
    %319 = vset.pattern.permute.xlu0 0
    %320 = vperm.xlu0 %319, %v301
    %v321 = vpop.permute.xlu0 %320
    %322 = vset.pattern.permute.xlu0 0
    %323 = vperm.xlu0 %322, %v302
    %v324 = vpop.permute.xlu0 %323
    %325 = vset.pattern.permute.xlu0 0
    %326 = vperm.xlu0 %325, %v303
    %v327 = vpop.permute.xlu0 %326
    %328 = vset.pattern.permute.xlu0 0
    %329 = vperm.xlu0 %328, %v304
    %v330 = vpop.permute.xlu0 %329
    %331 = vset.pattern.permute.xlu0 0
    %332 = vperm.xlu0 %331, %v305
    %v333 = vpop.permute.xlu0 %332
    %334 = vset.pattern.permute.xlu0 0
    %335 = vperm.xlu0 %334, %v306
    %v336 = vpop.permute.xlu0 %335
    %337 = vset.pattern.permute.xlu0 0
    %338 = vperm.xlu0 %337, %v307
    %v339 = vpop.permute.xlu0 %338
    %340 = vset.pattern.permute.xlu0 0
    %341 = vperm.xlu0 %340, %v308
    %v342 = vpop.permute.xlu0 %341
    %343 = vset.pattern.permute.xlu0 0
    %344 = vperm.xlu0 %343, %v309
    %v345 = vpop.permute.xlu0 %344
    %346 = vset.pattern.permute.xlu0 0
    %347 = vperm.xlu0 %346, %v310
    %v348 = vpop.permute.xlu0 %347
    %349 = vset.pattern.permute.xlu0 0
    %350 = vperm.xlu0 %349, %v311
    %v351 = vpop.permute.xlu0 %350
    %352 = vset.pattern.permute.xlu0 0
    %353 = vperm.xlu0 %352, %v312
    %v354 = vpop.permute.xlu0 %353
    %355 = vset.pattern.permute.xlu0 0
    %356 = vperm.xlu0 %355, %v313
    %v357 = vpop.permute.xlu0 %356
    %358 = vset.pattern.permute.xlu0 0
    %359 = vperm.xlu0 %358, %v314
    %v360 = vpop.permute.xlu0 %359
    %361 = vset.pattern.permute.xlu0 0
    %362 = vperm.xlu0 %361, %v315
    %v363 = vpop.permute.xlu0 %362
    %vm364 = vcmp.eq.s32.totalorder %v318, 1
    %vm365 = vcmp.eq.s32.totalorder %v321, 1
    %vm366 = vcmp.eq.s32.totalorder %v324, 1
    %vm367 = vcmp.eq.s32.totalorder %v327, 1
    %vm368 = vcmp.eq.s32.totalorder %v330, 1
    %vm369 = vcmp.eq.s32.totalorder %v333, 1
    %vm370 = vcmp.eq.s32.totalorder %v336, 1
    %vm371 = vcmp.eq.s32.totalorder %v339, 1
    %vm372 = vcmp.eq.s32.totalorder %v342, 1
    %vm373 = vcmp.eq.s32.totalorder %v345, 1
    %vm374 = vcmp.eq.s32.totalorder %v348, 1
    %vm375 = vcmp.eq.s32.totalorder %v351, 1
    %vm376 = vcmp.eq.s32.totalorder %v354, 1
    %vm377 = vcmp.eq.s32.totalorder %v357, 1
    %vm378 = vcmp.eq.s32.totalorder %v360, 1
    %vm379 = vcmp.eq.s32.totalorder %v363, 1
    %v380 = vsel %vm364, %v57, -inf
    %v381 = vsel %vm365, %v58, -inf
    %v382 = vsel %vm366, %v59, -inf
    %v383 = vsel %vm367, %v60, -inf
    %v384 = vsel %vm368, %v61, -inf
    %v385 = vsel %vm369, %v62, -inf
    %v386 = vsel %vm370, %v63, -inf
    %v387 = vsel %vm371, %v64, -inf
    %v388 = vsel %vm372, %v65, -inf
    %v389 = vsel %vm373, %v66, -inf
    %v390 = vsel %vm374, %v67, -inf
    %v391 = vsel %vm375, %v68, -inf
    %v392 = vsel %vm376, %v69, -inf
    %v393 = vsel %vm377, %v70, -inf
    %v394 = vsel %vm378, %v71, -inf
    %v395 = vsel %vm379, %v72, -inf
    %v396 = vsel %vm161, %v380, -inf
    %v397 = vsel %vm161, %v381, -inf
    %v398 = vsel %vm161, %v382, -inf
    %v399 = vsel %vm161, %v383, -inf
    %v400 = vsel %vm161, %v384, -inf
    %v401 = vmax.f32 %v396, %v400
    %v402 = vsel %vm161, %v385, -inf
    %v403 = vmax.f32 %v397, %v402
    %v404 = vsel %vm161, %v386, -inf
    %v405 = vmax.f32 %v398, %v404
    %v406 = vsel %vm161, %v387, -inf
    %v407 = vmax.f32 %v399, %v406
    %v408 = vsel %vm161, %v388, -inf
    %v409 = vmax.f32 %v401, %v408
    %v410 = vsel %vm161, %v389, -inf
    %v411 = vmax.f32 %v403, %v410
    %v412 = vsel %vm161, %v390, -inf
    %v413 = vmax.f32 %v405, %v412
    %v414 = vsel %vm161, %v391, -inf
    %v415 = vmax.f32 %v407, %v414
    %v416 = vsel %vm161, %v392, -inf
    %v417 = vmax.f32 %v409, %v416
    %v418 = vsel %vm161, %v393, -inf
    %v419 = vmax.f32 %v411, %v418
    %v420 = vsel %vm161, %v394, -inf
    %v421 = vmax.f32 %v413, %v420
    %v422 = vsel %vm161, %v395, -inf
    %v423 = vmax.f32 %v415, %v422
    %v424 = vmax.f32 %v417, %v419
    %v425 = vmax.f32 %v421, %v423
    %v426 = vmax.f32 %v424, %v425
    %v427 = vrot.slane %v426, 4
    %v428 = vmax.f32 %v426, %v427
    %v429 = vrot.slane %v428, 2
    %v430 = vmax.f32 %v428, %v429
    %v431 = vrot.slane %v430, 1
    %v432 = vmax.f32 %v430, %v431
    %v433 = vsel %vm364, %v57, inf
    %v434 = vsel %vm365, %v58, inf
    %v435 = vsel %vm366, %v59, inf
    %v436 = vsel %vm367, %v60, inf
    %v437 = vsel %vm368, %v61, inf
    %v438 = vsel %vm369, %v62, inf
    %v439 = vsel %vm370, %v63, inf
    %v440 = vsel %vm371, %v64, inf
    %v441 = vsel %vm372, %v65, inf
    %v442 = vsel %vm373, %v66, inf
    %v443 = vsel %vm374, %v67, inf
    %v444 = vsel %vm375, %v68, inf
    %v445 = vsel %vm376, %v69, inf
    %v446 = vsel %vm377, %v70, inf
    %v447 = vsel %vm378, %v71, inf
    %v448 = vsel %vm379, %v72, inf
    %v449 = vsel %vm161, %v433, inf
    %v450 = vsel %vm161, %v434, inf
    %v451 = vsel %vm161, %v435, inf
    %v452 = vsel %vm161, %v436, inf
    %v453 = vsel %vm161, %v437, inf
    %v454 = vmin.f32 %v449, %v453
    %v455 = vsel %vm161, %v438, inf
    %v456 = vmin.f32 %v450, %v455
    %v457 = vsel %vm161, %v439, inf
    %v458 = vmin.f32 %v451, %v457
    %v459 = vsel %vm161, %v440, inf
    %v460 = vmin.f32 %v452, %v459
    %v461 = vsel %vm161, %v441, inf
    %v462 = vmin.f32 %v454, %v461
    %v463 = vsel %vm161, %v442, inf
    %v464 = vmin.f32 %v456, %v463
    %v465 = vsel %vm161, %v443, inf
    %v466 = vmin.f32 %v458, %v465
    %v467 = vsel %vm161, %v444, inf
    %v468 = vmin.f32 %v460, %v467
    %v469 = vsel %vm161, %v445, inf
    %v470 = vmin.f32 %v462, %v469
    %v471 = vsel %vm161, %v446, inf
    %v472 = vmin.f32 %v464, %v471
    %v473 = vsel %vm161, %v447, inf
    %v474 = vmin.f32 %v466, %v473
    %v475 = vsel %vm161, %v448, inf
    %v476 = vmin.f32 %v468, %v475
    %v477 = vmin.f32 %v470, %v472
    %v478 = vmin.f32 %v474, %v476
    %v479 = vmin.f32 %v477, %v478
    %v480 = vrot.slane %v479, 4
    %v481 = vmin.f32 %v479, %v480
    %v482 = vrot.slane %v481, 2
    %v483 = vmin.f32 %v481, %v482
    %v484 = vrot.slane %v483, 1
    %v485 = vmin.f32 %v483, %v484
    %486 = vset.pattern.permute.xlu0 1
    %487 = vperm.xlu0 %486, %v300
    %v488 = vpop.permute.xlu0 %487
    %489 = vset.pattern.permute.xlu0 1
    %490 = vperm.xlu0 %489, %v301
    %v491 = vpop.permute.xlu0 %490
    %492 = vset.pattern.permute.xlu0 1
    %493 = vperm.xlu0 %492, %v302
    %v494 = vpop.permute.xlu0 %493
    %495 = vset.pattern.permute.xlu0 1
    %496 = vperm.xlu0 %495, %v303
    %v497 = vpop.permute.xlu0 %496
    %498 = vset.pattern.permute.xlu0 1
    %499 = vperm.xlu0 %498, %v304
    %v500 = vpop.permute.xlu0 %499
    %501 = vset.pattern.permute.xlu0 1
    %502 = vperm.xlu0 %501, %v305
    %v503 = vpop.permute.xlu0 %502
    %504 = vset.pattern.permute.xlu0 1
    %505 = vperm.xlu0 %504, %v306
    %v506 = vpop.permute.xlu0 %505
    %507 = vset.pattern.permute.xlu0 1
    %508 = vperm.xlu0 %507, %v307
    %v509 = vpop.permute.xlu0 %508
    %510 = vset.pattern.permute.xlu0 1
    %511 = vperm.xlu0 %510, %v308
    %v512 = vpop.permute.xlu0 %511
    %513 = vset.pattern.permute.xlu0 1
    %514 = vperm.xlu0 %513, %v309
    %v515 = vpop.permute.xlu0 %514
    %516 = vset.pattern.permute.xlu0 1
    %517 = vperm.xlu0 %516, %v310
    %v518 = vpop.permute.xlu0 %517
    %519 = vset.pattern.permute.xlu0 1
    %520 = vperm.xlu0 %519, %v311
    %v521 = vpop.permute.xlu0 %520
    %522 = vset.pattern.permute.xlu0 1
    %523 = vperm.xlu0 %522, %v312
    %v524 = vpop.permute.xlu0 %523
    %525 = vset.pattern.permute.xlu0 1
    %526 = vperm.xlu0 %525, %v313
    %v527 = vpop.permute.xlu0 %526
    %528 = vset.pattern.permute.xlu0 1
    %529 = vperm.xlu0 %528, %v314
    %v530 = vpop.permute.xlu0 %529
    %531 = vset.pattern.permute.xlu0 1
    %532 = vperm.xlu0 %531, %v315
    %v533 = vpop.permute.xlu0 %532
    %vm534 = vcmp.eq.s32.totalorder %v488, 1
    %vm535 = vcmp.eq.s32.totalorder %v491, 1
    %vm536 = vcmp.eq.s32.totalorder %v494, 1
    %vm537 = vcmp.eq.s32.totalorder %v497, 1
    %vm538 = vcmp.eq.s32.totalorder %v500, 1
    %vm539 = vcmp.eq.s32.totalorder %v503, 1
    %vm540 = vcmp.eq.s32.totalorder %v506, 1
    %vm541 = vcmp.eq.s32.totalorder %v509, 1
    %vm542 = vcmp.eq.s32.totalorder %v512, 1
    %vm543 = vcmp.eq.s32.totalorder %v515, 1
    %vm544 = vcmp.eq.s32.totalorder %v518, 1
    %vm545 = vcmp.eq.s32.totalorder %v521, 1
    %vm546 = vcmp.eq.s32.totalorder %v524, 1
    %vm547 = vcmp.eq.s32.totalorder %v527, 1
    %vm548 = vcmp.eq.s32.totalorder %v530, 1
    %vm549 = vcmp.eq.s32.totalorder %v533, 1
    %v550 = vsel %vm534, %v57, -inf
    %v551 = vsel %vm535, %v58, -inf
    %v552 = vsel %vm536, %v59, -inf
    %v553 = vsel %vm537, %v60, -inf
    %v554 = vsel %vm538, %v61, -inf
    %v555 = vsel %vm539, %v62, -inf
    %v556 = vsel %vm540, %v63, -inf
    %v557 = vsel %vm541, %v64, -inf
    %v558 = vsel %vm542, %v65, -inf
    %v559 = vsel %vm543, %v66, -inf
    %v560 = vsel %vm544, %v67, -inf
    %v561 = vsel %vm545, %v68, -inf
    %v562 = vsel %vm546, %v69, -inf
    %v563 = vsel %vm547, %v70, -inf
    %v564 = vsel %vm548, %v71, -inf
    %v565 = vsel %vm549, %v72, -inf
    %v566 = vsel %vm161, %v550, -inf
    %v567 = vsel %vm161, %v551, -inf
    %v568 = vsel %vm161, %v552, -inf
    %v569 = vsel %vm161, %v553, -inf
    %v570 = vsel %vm161, %v554, -inf
    %v571 = vmax.f32 %v566, %v570
    %v572 = vsel %vm161, %v555, -inf
    %v573 = vmax.f32 %v567, %v572
    %v574 = vsel %vm161, %v556, -inf
    %v575 = vmax.f32 %v568, %v574
    %v576 = vsel %vm161, %v557, -inf
    %v577 = vmax.f32 %v569, %v576
    %v578 = vsel %vm161, %v558, -inf
    %v579 = vmax.f32 %v571, %v578
    %v580 = vsel %vm161, %v559, -inf
    %v581 = vmax.f32 %v573, %v580
    %v582 = vsel %vm161, %v560, -inf
    %v583 = vmax.f32 %v575, %v582
    %v584 = vsel %vm161, %v561, -inf
    %v585 = vmax.f32 %v577, %v584
    %v586 = vsel %vm161, %v562, -inf
    %v587 = vmax.f32 %v579, %v586
    %v588 = vsel %vm161, %v563, -inf
    %v589 = vmax.f32 %v581, %v588
    %v590 = vsel %vm161, %v564, -inf
    %v591 = vmax.f32 %v583, %v590
    %v592 = vsel %vm161, %v565, -inf
    %v593 = vmax.f32 %v585, %v592
    %v594 = vmax.f32 %v587, %v589
    %v595 = vmax.f32 %v591, %v593
    %v596 = vmax.f32 %v594, %v595
    %v597 = vrot.slane %v596, 4
    %v598 = vmax.f32 %v596, %v597
    %v599 = vrot.slane %v598, 2
    %v600 = vmax.f32 %v598, %v599
    %v601 = vrot.slane %v600, 1
    %v602 = vmax.f32 %v600, %v601
    %v603 = vsel %vm534, %v57, inf
    %v604 = vsel %vm535, %v58, inf
    %v605 = vsel %vm536, %v59, inf
    %v606 = vsel %vm537, %v60, inf
    %v607 = vsel %vm538, %v61, inf
    %v608 = vsel %vm539, %v62, inf
    %v609 = vsel %vm540, %v63, inf
    %v610 = vsel %vm541, %v64, inf
    %v611 = vsel %vm542, %v65, inf
    %v612 = vsel %vm543, %v66, inf
    %v613 = vsel %vm544, %v67, inf
    %v614 = vsel %vm545, %v68, inf
    %v615 = vsel %vm546, %v69, inf
    %v616 = vsel %vm547, %v70, inf
    %v617 = vsel %vm548, %v71, inf
    %v618 = vsel %vm549, %v72, inf
    %v619 = vsel %vm161, %v603, inf
    %v620 = vsel %vm161, %v604, inf
    %v621 = vsel %vm161, %v605, inf
    %v622 = vsel %vm161, %v606, inf
    %v623 = vsel %vm161, %v607, inf
    %v624 = vmin.f32 %v619, %v623
    %v625 = vsel %vm161, %v608, inf
    %v626 = vmin.f32 %v620, %v625
    %v627 = vsel %vm161, %v609, inf
    %v628 = vmin.f32 %v621, %v627
    %v629 = vsel %vm161, %v610, inf
    %v630 = vmin.f32 %v622, %v629
    %v631 = vsel %vm161, %v611, inf
    %v632 = vmin.f32 %v624, %v631
    %v633 = vsel %vm161, %v612, inf
    %v634 = vmin.f32 %v626, %v633
    %v635 = vsel %vm161, %v613, inf
    %v636 = vmin.f32 %v628, %v635
    %v637 = vsel %vm161, %v614, inf
    %v638 = vmin.f32 %v630, %v637
    %v639 = vsel %vm161, %v615, inf
    %v640 = vmin.f32 %v632, %v639
    %v641 = vsel %vm161, %v616, inf
    %v642 = vmin.f32 %v634, %v641
    %v643 = vsel %vm161, %v617, inf
    %v644 = vmin.f32 %v636, %v643
    %v645 = vsel %vm161, %v618, inf
    %v646 = vmin.f32 %v638, %v645
    %v647 = vmin.f32 %v640, %v642
    %v648 = vmin.f32 %v644, %v646
    %v649 = vmin.f32 %v647, %v648
    %v650 = vrot.slane %v649, 4
    %v651 = vmin.f32 %v649, %v650
    %v652 = vrot.slane %v651, 2
    %v653 = vmin.f32 %v651, %v652
    %v654 = vrot.slane %v653, 1
    %v655 = vmin.f32 %v653, %v654
    %vm656 = vcmask 1040384
    %v657 = vsel %vm656, %v432, %v602
    %v658 = vsel %vm656, %v485, %v655
    %v659 = vld [vmem:[#allocation5] sm:$0x3]
    %v660 = vmax.f32 %v659, %v657
    %vm661 = vcmask 254976
    %662 = vst.msk [vmem:[#allocation5] sm:$0x3] %vm661, %v660
    %v663 = vld [vmem:[#allocation6] sm:$0x3]
    %v664 = vmin.f32 %v663, %v658
    %665 = vst.msk [vmem:[#allocation6] sm:$0x3] %vm661, %v664
    // Predicated region
    $region58: #{tpu_custom_call.1} parent=1 // pred_check
      %p666 = pneg %p45
    $region59: #{tpu_custom_call.1} parent=1 // pred_check_branch
      %668 = sbr.rel (%p666) target = $region61
    $region60: #{tpu_custom_call.1} parent=1 // pred_region
      %v669 = vld [vmem:[#allocation4] sm:$0x3]
      %vm670 = vcmp.gt.f32.partialorder %v669, 0.0
      %v671 = vmax.f32 %v669, 1.0
      %v672 = vrcp.pop %v671
      %v673 = vmul.f32 1.0, %v672
      %v674 = vsel %vm670, %v673, 0.0
      %v675 = vld [vmem:[#allocation2] sm:$0x3]
      %677 = vset.pattern.permute.xlu0 0
      %678 = vperm.xlu0 %677, %v674
      %v679 = vpop.permute.xlu0 %678
      %v681 = vmul.f32 %v675, %v679
      %v682 = vld [vmem:[#allocation3] sm:$0x3]
      %v683 = vmul.f32 %v682, %v679
      %v684 = vmul.f32 %v681, %v681
      %v685 = vsub.f32 %v683, %v684
      %vm686 = vcmp.le.f32.partialorder %v685, 1e-05
      %v687 = vmax.f32 %v685, 1e-05
      %v688 = vrsqrt.pop %v687
      %v689 = vmul.f32 %v687, %v688
      %vm690 = vcmp.eq.f32.partialorder %v687, inf
      %v691 = vsel %vm690, %v687, %v689
      %vm692 = vcmp.eq.f32.partialorder %v687, 0.0
      %v693 = vand.u32 %v687, 2147483648
      %v694 = vsel %vm692, %v693, %v691
      %v695 = vsel %vm686, 0.0, %v694
      %v696 = vld [vmem:[#allocation5] sm:$0x3]
      %v697 = vsel %vm670, 1, 0
      %698 = vset.pattern.permute.xlu0 0
      %699 = vperm.xlu0 %698, %v697
      %v700 = vpop.permute.xlu0 %699
      %vm701 = vcmp.eq.s32.totalorder %v700, 1
      %v702 = vsel %vm701, %v696, 0.0
      %v703 = vld [vmem:[#allocation6] sm:$0x3]
      %v704 = vsel %vm701, %v703, 0.0
      %v705 = vld [vmem:[%s2] sm:$0x3]
      %v706 = vld [vmem:[%s3] sm:$0xff]
      %v707 = vld [vmem:[%s4] sm:$0xff]
      %v708 = vld [vmem:[%s4 + $0x8] sm:$0xff]
      %v709 = vld [vmem:[%s4 + $0x10] sm:$0xff]
      %v710 = vld [vmem:[%s4 + $0x18] sm:$0xff]
      %v712 = vsel %vm161, %v681, 0
      %714 = vmatprep.subr.mxu0 0.0
      %715 = vmatpush1.msra.mxu0 0.0
      %716 = vmatprep.subr.mxu0 0.0
      %717 = vmatpush1.msra.mxu0 0.0
      %718 = vmatprep.subr.mxu0 0.0
      %719 = vmatpush1.msra.mxu0 0.0
      %720 = vmatprep.subr.mxu0 0.0
      %721 = vmatpush1.msra.mxu0 0.0
      %722 = vmatprep.subr.mxu0 0.0
      %723 = vmatpush1.msra.mxu0 0.0
      %724 = vmatprep.subr.mxu0 0.0
      %725 = vmatpush1.msra.mxu0 0.0
      %726 = vmatprep.subr.mxu0 0.0
      %727 = vmatpush1.msra.mxu0 0.0
      %728 = vmatprep.subr.mxu0 0.0
      %729 = vmatpush1.msra.mxu0 0.0
      %730 = vmatprep.subr.mxu0 0.0
      %731 = vmatpush1.msra.mxu0 0.0
      %732 = vmatprep.subr.mxu0 0.0
      %733 = vmatpush1.msra.mxu0 0.0
      %734 = vmatprep.subr.mxu0 0.0
      %735 = vmatpush1.msra.mxu0 0.0
      %736 = vmatprep.subr.mxu0 0.0
      %737 = vmatpush1.msra.mxu0 0.0
      %738 = vmatprep.subr.mxu0 0.0
      %739 = vmatpush1.msra.mxu0 %v710
      %740 = vmatprep.subr.mxu0 0.0
      %741 = vmatpush1.msra.mxu0 %v709
      %742 = vmatprep.subr.mxu0 0.0
      %743 = vmatpush1.msra.mxu0 %v708
      %744 = vmatprep.subr.mxu0 0.0
      %745 = vmatpush1.msra.mxu0 %v707
      %746 = vmatprep.subr.mxu0 0.0
      %747 = vmatpush2.msra.mxu0 0.0
      %748 = vmatprep.subr.mxu0 0.0
      %749 = vmatpush2.msra.mxu0 0.0
      %750 = vmatprep.subr.mxu0 0.0
      %751 = vmatpush2.msra.mxu0 0.0
      %752 = vmatprep.subr.mxu0 0.0
      %753 = vmatpush2.msra.mxu0 0.0
      %754 = vmatprep.subr.mxu0 0.0
      %755 = vmatpush2.msra.mxu0 0.0
      %756 = vmatprep.subr.mxu0 0.0
      %757 = vmatpush2.msra.mxu0 0.0
      %758 = vmatprep.subr.mxu0 0.0
      %759 = vmatpush2.msra.mxu0 0.0
      %760 = vmatprep.subr.mxu0 0.0
      %761 = vmatpush2.msra.mxu0 0.0
      %762 = vmatprep.subr.mxu0 0.0
      %763 = vmatpush2.msra.mxu0 0.0
      %764 = vmatprep.subr.mxu0 0.0
      %765 = vmatpush2.msra.mxu0 0.0
      %766 = vmatprep.subr.mxu0 0.0
      %767 = vmatpush2.msra.mxu0 0.0
      %768 = vmatprep.subr.mxu0 0.0
      %769 = vmatpush2.msra.mxu0 0.0
      %770 = vmatprep.subr.mxu0 0.0
      %771 = vmatpush2.msra.mxu0 0.0
      %772 = vmatprep.subr.mxu0 0.0
      %773 = vmatpush2.msra.mxu0 0.0
      %774 = vmatprep.subr.mxu0 0.0
      %775 = vmatpush2.msra.mxu0 0.0
      %776 = vmatprep.subr.mxu0 0.0
      %777 = vmatpush2.msra.mxu0 0.0
      %778 = vmatprep.mubr.f32.mxu0 0.0
      %779 = vmatmul.mubr.f32.gmra.mxu0 %v712
      %v780 = vpop.f32.mrf.mxu0
      %v781 = vadd.f32 0.0, %v780
      %v782 = vpop.f32.mrf.mxu0
      %783 = vdwg.mxu0
      %vm784 = vcmask 64512
      %v786 = vsel %vm784, %v705, 0
      %788 = vmatprep.subr.mxu0 0.0
      %789 = vmatpush1.msra.mxu0 0.0
      %790 = vmatprep.subr.mxu0 0.0
      %791 = vmatpush1.msra.mxu0 0.0
      %792 = vmatprep.subr.mxu0 0.0
      %793 = vmatpush1.msra.mxu0 0.0
      %794 = vmatprep.subr.mxu0 0.0
      %795 = vmatpush1.msra.mxu0 0.0
      %796 = vmatprep.subr.mxu0 0.0
      %797 = vmatpush1.msra.mxu0 0.0
      %798 = vmatprep.subr.mxu0 0.0
      %799 = vmatpush1.msra.mxu0 0.0
      %800 = vmatprep.subr.mxu0 0.0
      %801 = vmatpush1.msra.mxu0 0.0
      %802 = vmatprep.subr.mxu0 0.0
      %803 = vmatpush1.msra.mxu0 0.0
      %804 = vmatprep.subr.mxu0 0.0
      %805 = vmatpush1.msra.mxu0 0.0
      %806 = vmatprep.subr.mxu0 0.0
      %807 = vmatpush1.msra.mxu0 0.0
      %808 = vmatprep.subr.mxu0 0.0
      %809 = vmatpush1.msra.mxu0 0.0
      %810 = vmatprep.subr.mxu0 0.0
      %811 = vmatpush1.msra.mxu0 0.0
      %812 = vmatprep.subr.mxu0 0.0
      %813 = vmatpush1.msra.mxu0 0.0
      %814 = vmatprep.subr.mxu0 0.0
      %815 = vmatpush1.msra.mxu0 0.0
      %816 = vmatprep.subr.mxu0 0.0
      %817 = vmatpush1.msra.mxu0 0.0
      %818 = vmatprep.subr.mxu0 0.0
      %819 = vmatpush1.msra.mxu0 %v706
      %820 = vmatprep.subr.mxu0 0.0
      %821 = vmatpush2.msra.mxu0 0.0
      %822 = vmatprep.subr.mxu0 0.0
      %823 = vmatpush2.msra.mxu0 0.0
      %824 = vmatprep.subr.mxu0 0.0
      %825 = vmatpush2.msra.mxu0 0.0
      %826 = vmatprep.subr.mxu0 0.0
      %827 = vmatpush2.msra.mxu0 0.0
      %828 = vmatprep.subr.mxu0 0.0
      %829 = vmatpush2.msra.mxu0 0.0
      %830 = vmatprep.subr.mxu0 0.0
      %831 = vmatpush2.msra.mxu0 0.0
      %832 = vmatprep.subr.mxu0 0.0
      %833 = vmatpush2.msra.mxu0 0.0
      %834 = vmatprep.subr.mxu0 0.0
      %835 = vmatpush2.msra.mxu0 0.0
      %836 = vmatprep.subr.mxu0 0.0
      %837 = vmatpush2.msra.mxu0 0.0
      %838 = vmatprep.subr.mxu0 0.0
      %839 = vmatpush2.msra.mxu0 0.0
      %840 = vmatprep.subr.mxu0 0.0
      %841 = vmatpush2.msra.mxu0 0.0
      %842 = vmatprep.subr.mxu0 0.0
      %843 = vmatpush2.msra.mxu0 0.0
      %844 = vmatprep.subr.mxu0 0.0
      %845 = vmatpush2.msra.mxu0 0.0
      %846 = vmatprep.subr.mxu0 0.0
      %847 = vmatpush2.msra.mxu0 0.0
      %848 = vmatprep.subr.mxu0 0.0
      %849 = vmatpush2.msra.mxu0 0.0
      %850 = vmatprep.subr.mxu0 0.0
      %851 = vmatpush2.msra.mxu0 0.0
      %852 = vmatprep.mubr.f32.mxu0 0.0
      %853 = vmatmul.mubr.f32.gmra.mxu0 %v786
      %v854 = vpop.f32.mrf.mxu0
      %v855 = vadd.f32 %v781, %v854
      %v856 = vpop.f32.mrf.mxu0
      %857 = vdwg.mxu0
      %v858 = vld [vmem:[%s5] sm:$0xff]
      %v859 = vld [vmem:[%s5 + $0x8] sm:$0xff]
      %v860 = vld [vmem:[%s5 + $0x10] sm:$0xff]
      %v861 = vld [vmem:[%s5 + $0x18] sm:$0xff]
      %v863 = vsel %vm161, %v695, 0
      %865 = vmatprep.subr.mxu0 0.0
      %866 = vmatpush1.msra.mxu0 0.0
      %867 = vmatprep.subr.mxu0 0.0
      %868 = vmatpush1.msra.mxu0 0.0
      %869 = vmatprep.subr.mxu0 0.0
      %870 = vmatpush1.msra.mxu0 0.0
      %871 = vmatprep.subr.mxu0 0.0
      %872 = vmatpush1.msra.mxu0 0.0
      %873 = vmatprep.subr.mxu0 0.0
      %874 = vmatpush1.msra.mxu0 0.0
      %875 = vmatprep.subr.mxu0 0.0
      %876 = vmatpush1.msra.mxu0 0.0
      %877 = vmatprep.subr.mxu0 0.0
      %878 = vmatpush1.msra.mxu0 0.0
      %879 = vmatprep.subr.mxu0 0.0
      %880 = vmatpush1.msra.mxu0 0.0
      %881 = vmatprep.subr.mxu0 0.0
      %882 = vmatpush1.msra.mxu0 0.0
      %883 = vmatprep.subr.mxu0 0.0
      %884 = vmatpush1.msra.mxu0 0.0
      %885 = vmatprep.subr.mxu0 0.0
      %886 = vmatpush1.msra.mxu0 0.0
      %887 = vmatprep.subr.mxu0 0.0
      %888 = vmatpush1.msra.mxu0 0.0
      %889 = vmatprep.subr.mxu0 0.0
      %890 = vmatpush1.msra.mxu0 %v861
      %891 = vmatprep.subr.mxu0 0.0
      %892 = vmatpush1.msra.mxu0 %v860
      %893 = vmatprep.subr.mxu0 0.0
      %894 = vmatpush1.msra.mxu0 %v859
      %895 = vmatprep.subr.mxu0 0.0
      %896 = vmatpush1.msra.mxu0 %v858
      %897 = vmatprep.subr.mxu0 0.0
      %898 = vmatpush2.msra.mxu0 0.0
      %899 = vmatprep.subr.mxu0 0.0
      %900 = vmatpush2.msra.mxu0 0.0
      %901 = vmatprep.subr.mxu0 0.0
      %902 = vmatpush2.msra.mxu0 0.0
      %903 = vmatprep.subr.mxu0 0.0
      %904 = vmatpush2.msra.mxu0 0.0
      %905 = vmatprep.subr.mxu0 0.0
      %906 = vmatpush2.msra.mxu0 0.0
      %907 = vmatprep.subr.mxu0 0.0
      %908 = vmatpush2.msra.mxu0 0.0
      %909 = vmatprep.subr.mxu0 0.0
      %910 = vmatpush2.msra.mxu0 0.0
      %911 = vmatprep.subr.mxu0 0.0
      %912 = vmatpush2.msra.mxu0 0.0
      %913 = vmatprep.subr.mxu0 0.0
      %914 = vmatpush2.msra.mxu0 0.0
      %915 = vmatprep.subr.mxu0 0.0
      %916 = vmatpush2.msra.mxu0 0.0
      %917 = vmatprep.subr.mxu0 0.0
      %918 = vmatpush2.msra.mxu0 0.0
      %919 = vmatprep.subr.mxu0 0.0
      %920 = vmatpush2.msra.mxu0 0.0
      %921 = vmatprep.subr.mxu0 0.0
      %922 = vmatpush2.msra.mxu0 0.0
      %923 = vmatprep.subr.mxu0 0.0
      %924 = vmatpush2.msra.mxu0 0.0
      %925 = vmatprep.subr.mxu0 0.0
      %926 = vmatpush2.msra.mxu0 0.0
      %927 = vmatprep.subr.mxu0 0.0
      %928 = vmatpush2.msra.mxu0 0.0
      %929 = vmatprep.mubr.f32.mxu0 0.0
      %930 = vmatmul.mubr.f32.gmra.mxu0 %v863
      %v931 = vpop.f32.mrf.mxu0
      %v932 = vadd.f32 0.0, %v931
      %v933 = vpop.f32.mrf.mxu0
      %934 = vdwg.mxu0
      %v935 = vadd.f32 %v855, %v932
      %v936 = vld [vmem:[%s6] sm:$0xff]
      %v937 = vld [vmem:[%s6 + $0x8] sm:$0xff]
      %v938 = vld [vmem:[%s6 + $0x10] sm:$0xff]
      %v939 = vld [vmem:[%s6 + $0x18] sm:$0xff]
      %v941 = vsel %vm161, %v702, 0
      %943 = vmatprep.subr.mxu0 0.0
      %944 = vmatpush1.msra.mxu0 0.0
      %945 = vmatprep.subr.mxu0 0.0
      %946 = vmatpush1.msra.mxu0 0.0
      %947 = vmatprep.subr.mxu0 0.0
      %948 = vmatpush1.msra.mxu0 0.0
      %949 = vmatprep.subr.mxu0 0.0
      %950 = vmatpush1.msra.mxu0 0.0
      %951 = vmatprep.subr.mxu0 0.0
      %952 = vmatpush1.msra.mxu0 0.0
      %953 = vmatprep.subr.mxu0 0.0
      %954 = vmatpush1.msra.mxu0 0.0
      %955 = vmatprep.subr.mxu0 0.0
      %956 = vmatpush1.msra.mxu0 0.0
      %957 = vmatprep.subr.mxu0 0.0
      %958 = vmatpush1.msra.mxu0 0.0
      %959 = vmatprep.subr.mxu0 0.0
      %960 = vmatpush1.msra.mxu0 0.0
      %961 = vmatprep.subr.mxu0 0.0
      %962 = vmatpush1.msra.mxu0 0.0
      %963 = vmatprep.subr.mxu0 0.0
      %964 = vmatpush1.msra.mxu0 0.0
      %965 = vmatprep.subr.mxu0 0.0
      %966 = vmatpush1.msra.mxu0 0.0
      %967 = vmatprep.subr.mxu0 0.0
      %968 = vmatpush1.msra.mxu0 %v939
      %969 = vmatprep.subr.mxu0 0.0
      %970 = vmatpush1.msra.mxu0 %v938
      %971 = vmatprep.subr.mxu0 0.0
      %972 = vmatpush1.msra.mxu0 %v937
      %973 = vmatprep.subr.mxu0 0.0
      %974 = vmatpush1.msra.mxu0 %v936
      %975 = vmatprep.subr.mxu0 0.0
      %976 = vmatpush2.msra.mxu0 0.0
      %977 = vmatprep.subr.mxu0 0.0
      %978 = vmatpush2.msra.mxu0 0.0
      %979 = vmatprep.subr.mxu0 0.0
      %980 = vmatpush2.msra.mxu0 0.0
      %981 = vmatprep.subr.mxu0 0.0
      %982 = vmatpush2.msra.mxu0 0.0
      %983 = vmatprep.subr.mxu0 0.0
      %984 = vmatpush2.msra.mxu0 0.0
      %985 = vmatprep.subr.mxu0 0.0
      %986 = vmatpush2.msra.mxu0 0.0
      %987 = vmatprep.subr.mxu0 0.0
      %988 = vmatpush2.msra.mxu0 0.0
      %989 = vmatprep.subr.mxu0 0.0
      %990 = vmatpush2.msra.mxu0 0.0
      %991 = vmatprep.subr.mxu0 0.0
      %992 = vmatpush2.msra.mxu0 0.0
      %993 = vmatprep.subr.mxu0 0.0
      %994 = vmatpush2.msra.mxu0 0.0
      %995 = vmatprep.subr.mxu0 0.0
      %996 = vmatpush2.msra.mxu0 0.0
      %997 = vmatprep.subr.mxu0 0.0
      %998 = vmatpush2.msra.mxu0 0.0
      %999 = vmatprep.subr.mxu0 0.0
      %1000 = vmatpush2.msra.mxu0 0.0
      %1001 = vmatprep.subr.mxu0 0.0
      %1002 = vmatpush2.msra.mxu0 0.0
      %1003 = vmatprep.subr.mxu0 0.0
      %1004 = vmatpush2.msra.mxu0 0.0
      %1005 = vmatprep.subr.mxu0 0.0
      %1006 = vmatpush2.msra.mxu0 0.0
      %1007 = vmatprep.mubr.f32.mxu0 0.0
      %1008 = vmatmul.mubr.f32.gmra.mxu0 %v941
      %v1009 = vpop.f32.mrf.mxu0
      %v1010 = vadd.f32 0.0, %v1009
      %v1011 = vpop.f32.mrf.mxu0
      %1012 = vdwg.mxu0
      %v1013 = vadd.f32 %v935, %v1010
      %v1014 = vld [vmem:[%s7] sm:$0xff]
      %v1015 = vld [vmem:[%s7 + $0x8] sm:$0xff]
      %v1016 = vld [vmem:[%s7 + $0x10] sm:$0xff]
      %v1017 = vld [vmem:[%s7 + $0x18] sm:$0xff]
      %v1019 = vsel %vm161, %v704, 0
      %1021 = vmatprep.subr.mxu0 0.0
      %1022 = vmatpush1.msra.mxu0 0.0
      %1023 = vmatprep.subr.mxu0 0.0
      %1024 = vmatpush1.msra.mxu0 0.0
      %1025 = vmatprep.subr.mxu0 0.0
      %1026 = vmatpush1.msra.mxu0 0.0
      %1027 = vmatprep.subr.mxu0 0.0
      %1028 = vmatpush1.msra.mxu0 0.0
      %1029 = vmatprep.subr.mxu0 0.0
      %1030 = vmatpush1.msra.mxu0 0.0
      %1031 = vmatprep.subr.mxu0 0.0
      %1032 = vmatpush1.msra.mxu0 0.0
      %1033 = vmatprep.subr.mxu0 0.0
      %1034 = vmatpush1.msra.mxu0 0.0
      %1035 = vmatprep.subr.mxu0 0.0
      %1036 = vmatpush1.msra.mxu0 0.0
      %1037 = vmatprep.subr.mxu0 0.0
      %1038 = vmatpush1.msra.mxu0 0.0
      %1039 = vmatprep.subr.mxu0 0.0
      %1040 = vmatpush1.msra.mxu0 0.0
      %1041 = vmatprep.subr.mxu0 0.0
      %1042 = vmatpush1.msra.mxu0 0.0
      %1043 = vmatprep.subr.mxu0 0.0
      %1044 = vmatpush1.msra.mxu0 0.0
      %1045 = vmatprep.subr.mxu0 0.0
      %1046 = vmatpush1.msra.mxu0 %v1017
      %1047 = vmatprep.subr.mxu0 0.0
      %1048 = vmatpush1.msra.mxu0 %v1016
      %1049 = vmatprep.subr.mxu0 0.0
      %1050 = vmatpush1.msra.mxu0 %v1015
      %1051 = vmatprep.subr.mxu0 0.0
      %1052 = vmatpush1.msra.mxu0 %v1014
      %1053 = vmatprep.subr.mxu0 0.0
      %1054 = vmatpush2.msra.mxu0 0.0
      %1055 = vmatprep.subr.mxu0 0.0
      %1056 = vmatpush2.msra.mxu0 0.0
      %1057 = vmatprep.subr.mxu0 0.0
      %1058 = vmatpush2.msra.mxu0 0.0
      %1059 = vmatprep.subr.mxu0 0.0
      %1060 = vmatpush2.msra.mxu0 0.0
      %1061 = vmatprep.subr.mxu0 0.0
      %1062 = vmatpush2.msra.mxu0 0.0
      %1063 = vmatprep.subr.mxu0 0.0
      %1064 = vmatpush2.msra.mxu0 0.0
      %1065 = vmatprep.subr.mxu0 0.0
      %1066 = vmatpush2.msra.mxu0 0.0
      %1067 = vmatprep.subr.mxu0 0.0
      %1068 = vmatpush2.msra.mxu0 0.0
      %1069 = vmatprep.subr.mxu0 0.0
      %1070 = vmatpush2.msra.mxu0 0.0
      %1071 = vmatprep.subr.mxu0 0.0
      %1072 = vmatpush2.msra.mxu0 0.0
      %1073 = vmatprep.subr.mxu0 0.0
      %1074 = vmatpush2.msra.mxu0 0.0
      %1075 = vmatprep.subr.mxu0 0.0
      %1076 = vmatpush2.msra.mxu0 0.0
      %1077 = vmatprep.subr.mxu0 0.0
      %1078 = vmatpush2.msra.mxu0 0.0
      %1079 = vmatprep.subr.mxu0 0.0
      %1080 = vmatpush2.msra.mxu0 0.0
      %1081 = vmatprep.subr.mxu0 0.0
      %1082 = vmatpush2.msra.mxu0 0.0
      %1083 = vmatprep.subr.mxu0 0.0
      %1084 = vmatpush2.msra.mxu0 0.0
      %1085 = vmatprep.mubr.f32.mxu0 0.0
      %1086 = vmatmul.mubr.f32.gmra.mxu0 %v1019
      %v1087 = vpop.f32.mrf.mxu0
      %v1088 = vadd.f32 0.0, %v1087
      %v1089 = vpop.f32.mrf.mxu0
      %1090 = vdwg.mxu0
      %v1091 = vadd.f32 %v1013, %v1088
      %v1092 = vld [vmem:[%s8] sm:$0x1]
      %v1094 = vlaneseq
      %v1095 = vshrl.u32 %v1094, 7
      %v1096 = vsub.s32 0, %v1095
      %v1097 = vrot.slane %v1092, %v1096
      %v1099 = vadd.f32 %v1091, %v1097
      %vm1100 = vcmp.gt.f32.partialorder %v1099, 0.0
      %v1101 = vmul.f32 %v1099, 1.442695
      %v1102 = vpow.pop %v1101
      %v1103 = vsub.f32 %v1102, 1.0
      %v1104 = vmul.f32 %v1103, 1.6732632
      %v1105 = vsel %vm1100, %v1099, %v1104
      %v1106 = vmul.f32 %v1105, 1.050701
      %v1107 = vsel %vm661, %v1106, 0.0
      %1108 = vadd.xlane.f32.xlu0 %v1107
      %v1109 = vpop.xlane.xlu0 %1108
      %v1110 = vrcp.pop 32.0
      %v1111 = vmul.f32 %v1109, %v1110
      %v1112 = vsub.f32 %v1106, %v1111
      %v1113 = vmul.f32 %v1112, %v1112
      %v1114 = vsel %vm661, %v1113, 0.0
      %1115 = vadd.xlane.f32.xlu0 %v1114
      %v1116 = vpop.xlane.xlu0 %1115
      %v1117 = vmul.f32 %v1116, %v1110
      %v1118 = vadd.f32 %v1117, 1e-05
      %v1119 = vrsqrt.pop %v1118
      %v1120 = vmul.f32 %v1112, %v1119
      %v1121 = vld [vmem:[%s9] sm:$0x1]
      %v1123 = vlaneseq
      %v1124 = vshrl.u32 %v1123, 7
      %v1125 = vsub.s32 0, %v1124
      %v1126 = vrot.slane %v1121, %v1125
      %v1128 = vmul.f32 %v1120, %v1126
      %v1129 = vld [vmem:[%s10] sm:$0x1]
      %v1131 = vlaneseq
      %v1132 = vshrl.u32 %v1131, 7
      %v1133 = vsub.s32 0, %v1132
      %v1134 = vrot.slane %v1129, %v1133
      %v1136 = vadd.f32 %v1128, %v1134
      %v1137 = vld [vmem:[%s11] sm:$0xff]
      %v1138 = vld [vmem:[%s11 + $0x8] sm:$0xff]
      %v1139 = vld [vmem:[%s11 + $0x10] sm:$0xff]
      %v1140 = vld [vmem:[%s11 + $0x18] sm:$0xff]
      %v1141 = vld [vmem:[%s12] sm:$0x1]
      %v1143 = vlaneseq
      %v1144 = vshrl.u32 %v1143, 7
      %v1145 = vsub.s32 0, %v1144
      %v1146 = vrot.slane %v1141, %v1145
      %v1149 = vsel %vm161, %v1136, 0
      %1151 = vmatprep.subr.mxu0 0.0
      %1152 = vmatpush1.msra.mxu0 0.0
      %1153 = vmatprep.subr.mxu0 0.0
      %1154 = vmatpush1.msra.mxu0 0.0
      %1155 = vmatprep.subr.mxu0 0.0
      %1156 = vmatpush1.msra.mxu0 0.0
      %1157 = vmatprep.subr.mxu0 0.0
      %1158 = vmatpush1.msra.mxu0 0.0
      %1159 = vmatprep.subr.mxu0 0.0
      %1160 = vmatpush1.msra.mxu0 0.0
      %1161 = vmatprep.subr.mxu0 0.0
      %1162 = vmatpush1.msra.mxu0 0.0
      %1163 = vmatprep.subr.mxu0 0.0
      %1164 = vmatpush1.msra.mxu0 0.0
      %1165 = vmatprep.subr.mxu0 0.0
      %1166 = vmatpush1.msra.mxu0 0.0
      %1167 = vmatprep.subr.mxu0 0.0
      %1168 = vmatpush1.msra.mxu0 0.0
      %1169 = vmatprep.subr.mxu0 0.0
      %1170 = vmatpush1.msra.mxu0 0.0
      %1171 = vmatprep.subr.mxu0 0.0
      %1172 = vmatpush1.msra.mxu0 0.0
      %1173 = vmatprep.subr.mxu0 0.0
      %1174 = vmatpush1.msra.mxu0 0.0
      %1175 = vmatprep.subr.mxu0 0.0
      %1176 = vmatpush1.msra.mxu0 %v1140
      %1177 = vmatprep.subr.mxu0 0.0
      %1178 = vmatpush1.msra.mxu0 %v1139
      %1179 = vmatprep.subr.mxu0 0.0
      %1180 = vmatpush1.msra.mxu0 %v1138
      %1181 = vmatprep.subr.mxu0 0.0
      %1182 = vmatpush1.msra.mxu0 %v1137
      %1183 = vmatprep.subr.mxu0 0.0
      %1184 = vmatpush2.msra.mxu0 0.0
      %1185 = vmatprep.subr.mxu0 0.0
      %1186 = vmatpush2.msra.mxu0 0.0
      %1187 = vmatprep.subr.mxu0 0.0
      %1188 = vmatpush2.msra.mxu0 0.0
      %1189 = vmatprep.subr.mxu0 0.0
      %1190 = vmatpush2.msra.mxu0 0.0
      %1191 = vmatprep.subr.mxu0 0.0
      %1192 = vmatpush2.msra.mxu0 0.0
      %1193 = vmatprep.subr.mxu0 0.0
      %1194 = vmatpush2.msra.mxu0 0.0
      %1195 = vmatprep.subr.mxu0 0.0
      %1196 = vmatpush2.msra.mxu0 0.0
      %1197 = vmatprep.subr.mxu0 0.0
      %1198 = vmatpush2.msra.mxu0 0.0
      %1199 = vmatprep.subr.mxu0 0.0
      %1200 = vmatpush2.msra.mxu0 0.0
      %1201 = vmatprep.subr.mxu0 0.0
      %1202 = vmatpush2.msra.mxu0 0.0
      %1203 = vmatprep.subr.mxu0 0.0
      %1204 = vmatpush2.msra.mxu0 0.0
      %1205 = vmatprep.subr.mxu0 0.0
      %1206 = vmatpush2.msra.mxu0 0.0
      %1207 = vmatprep.subr.mxu0 0.0
      %1208 = vmatpush2.msra.mxu0 0.0
      %1209 = vmatprep.subr.mxu0 0.0
      %1210 = vmatpush2.msra.mxu0 0.0
      %1211 = vmatprep.subr.mxu0 0.0
      %1212 = vmatpush2.msra.mxu0 0.0
      %1213 = vmatprep.subr.mxu0 0.0
      %1214 = vmatpush2.msra.mxu0 0.0
      %1215 = vmatprep.mubr.f32.mxu0 0.0
      %1216 = vmatmul.mubr.f32.gmra.mxu0 %v1149
      %v1217 = vpop.f32.mrf.mxu0
      %v1218 = vadd.f32 %v1146, %v1217
      %v1219 = vpop.f32.mrf.mxu0
      %1220 = vdwg.mxu0
      %vm1221 = vcmask 58368
      %1222 = vst.msk [vmem:[#allocation7] sm:$0x3] %vm1221, %v1218
    $region61: #{tpu_custom_call.1} parent=1 // pred_fallthru
      _
    // Predicated region
    $region62: #{tpu_custom_call.1} parent=1 // pred_check
      _
    $region63: #{tpu_custom_call.1} parent=1 // pred_check_branch
      %1224 = sbr.rel (0) target = $region65
    $region64: #{tpu_custom_call.1} parent=1 // pred_region
      %s1226 = ssub.s32 32, 32
      %1227 = vsyncadd [#allocation8], %s1226
      %s1229 = sshll.u32 [#allocation7], 4
      %s1230 = int_to_ptr.vmem [resolvable:$true] %s1229
      %1232 = dma.vmem_to_hbm [thread:$0]  %s1230, 32, %s13, [#allocation8]
    $region65: #{tpu_custom_call.1} parent=1 // pred_fallthru
      _
    // Predicated region
    $region66: #{tpu_custom_call.1} parent=1 // pred_check
      _
    $region67: #{tpu_custom_call.1} parent=1 // pred_check_branch
      %1234 = sbr.rel (0) target = $region69
    $region68: #{tpu_custom_call.1} parent=1 // pred_region
      %1235 = dma.done [#allocation8], 32
    $region69: #{tpu_custom_call.1} parent=1 // pred_fallthru
      _
    %1236 = vsyncpa [#allocation8], 1

// kernel: tpu_custom_call.1
$region0: #{tpu_custom_call.1}
  #allocation0 [shape = 'u32[]', space=smem, size = 0x4, offset = 0x4, fixed_abs, tag = 'smem constant byte address 0x4 - core index']
  #allocation1 [shape = 'u32[144,128]{1,0:T(1,128)}', space=vmem, size = 0x12000, scoped, tag = 'internal scratch']
  #allocation2 [shape = 'f32[8,32]{1,0:T(8,128)}', space=vmem, size = 0x1000, scoped, tag = 'scratch operand']
  #allocation3 [shape = 'f32[8,32]{1,0:T(8,128)}', space=vmem, size = 0x1000, scoped, tag = 'scratch operand']
  #allocation4 [shape = 'f32[8,1]{1,0:T(8,128)}', space=vmem, size = 0x1000, scoped, tag = 'scratch operand']
  #allocation5 [shape = 'f32[2,32]{1,0:T(2,128)}', space=vmem, size = 0x400, scoped, tag = 'scratch operand']
  #allocation6 [shape = 'f32[2,32]{1,0:T(2,128)}', space=vmem, size = 0x400, scoped, tag = 'scratch operand']
  %s0 = inlined_call_operand.vmem [shape: s32[1,128], index: 0, kind: input, shape index: {}]
  %s1 = inlined_call_operand.vmem [shape: f32[128,32], index: 1, kind: input, shape index: {}]
  %s2 = inlined_call_operand.vmem [shape: f32[2,8], index: 2, kind: input, shape index: {}]
  %s3 = inlined_call_operand.vmem [shape: f32[8,32], index: 3, kind: input, shape index: {}]
  %s4 = inlined_call_operand.vmem [shape: f32[32,32], index: 4, kind: input, shape index: {}]
  %s5 = inlined_call_operand.vmem [shape: f32[32,32], index: 5, kind: input, shape index: {}]
  %s6 = inlined_call_operand.vmem [shape: f32[32,32], index: 6, kind: input, shape index: {}]
  %s7 = inlined_call_operand.vmem [shape: f32[32,32], index: 7, kind: input, shape index: {}]
  %s8 = inlined_call_operand.vmem [shape: f32[1,32], index: 8, kind: input, shape index: {}]
  %s9 = inlined_call_operand.vmem [shape: f32[1,32], index: 9, kind: input, shape index: {}]
  %s10 = inlined_call_operand.vmem [shape: f32[1,32], index: 10, kind: input, shape index: {}]
  %s11 = inlined_call_operand.vmem [shape: f32[32,8], index: 11, kind: input, shape index: {}]
  %s12 = inlined_call_operand.vmem [shape: f32[1,8], index: 12, kind: input, shape index: {}]
  %s13 = inlined_call_operand.hbm [shape: f32[2,8], index: 13, kind: output, shape index: {}]
  %s14 = sld [smem:[#allocation0]]
  $region70: #{tpu_custom_call.1} parent=0
    _
  %s16 = ssub.s32 1, %s14
  %s17 = scalar_select 0, %s16, %s14
  $region1: #{tpu_custom_call.1} parent=0
    #allocation7 [shape = 'u8[1024]{0}', space=vmem, size = 0x400, scoped, tag = 'output window, operand 0, single buffered']
    #allocation8 [shape = 's32[1]{0}', space=sflag, size = 0x4, scoped, tag = 'scoped memory for tpu_custom_call.1']
    %18 = vsyncpa [#allocation8], 0
    // Predicated region
    $region2: #{tpu_custom_call.1} parent=1 // pred_check
      _
    $region3: #{tpu_custom_call.1} parent=1 // pred_check_branch
      %20 = sbr.rel (0) target = $region5
    $region4: #{tpu_custom_call.1} parent=1 // pred_region
      _
    $region5: #{tpu_custom_call.1} parent=1 // pred_fallthru
      _
    // Predicated region
    $region6: #{tpu_custom_call.1} parent=1 // pred_check
      _
    $region7: #{tpu_custom_call.1} parent=1 // pred_check_branch
      %22 = sbr.rel (0) target = $region9
    $region8: #{tpu_custom_call.1} parent=1 // pred_region
      _
    $region9: #{tpu_custom_call.1} parent=1 // pred_fallthru
      _
    // Predicated region
    $region10: #{tpu_custom_call.1} parent=1 // pred_check
      _
    $region11: #{tpu_custom_call.1} parent=1 // pred_check_branch
      %24 = sbr.rel (0) target = $region13
    $region12: #{tpu_custom_call.1} parent=1 // pred_region
      _
    $region13: #{tpu_custom_call.1} parent=1 // pred_fallthru
      _
    // Predicated region
    $region14: #{tpu_custom_call.1} parent=1 // pred_check
      _
    $region15: #{tpu_custom_call.1} parent=1 // pred_check_branch
      %26 = sbr.rel (0) target = $region17
    $region16: #{tpu_custom_call.1} parent=1 // pred_region
      _
    $region17: #{tpu_custom_call.1} parent=1 // pred_fallthru
      _
    // Predicated region
    $region18: #{tpu_custom_call.1} parent=1 // pred_check
      _
    $region19: #{tpu_custom_call.1} parent=1 // pred_check_branch
      %28 = sbr.rel (0) target = $region21
    $region20: #{tpu_custom_call.1} parent=1 // pred_region
      _
    $region21: #{tpu_custom_call.1} parent=1 // pred_fallthru
      _
    // Predicated region
    $region22: #{tpu_custom_call.1} parent=1 // pred_check
      _
    $region23: #{tpu_custom_call.1} parent=1 // pred_check_branch
      %30 = sbr.rel (0) target = $region25
    $region24: #{tpu_custom_call.1} parent=1 // pred_region
      _
    $region25: #{tpu_custom_call.1} parent=1 // pred_fallthru
      _
    // Predicated region
    $region26: #{tpu_custom_call.1} parent=1 // pred_check
      _
    $region27: #{tpu_custom_call.1} parent=1 // pred_check_branch
      %32 = sbr.rel (0) target = $region29
    $region28: #{tpu_custom_call.1} parent=1 // pred_region
      _
    $region29: #{tpu_custom_call.1} parent=1 // pred_fallthru
      _
    // Predicated region
    $region30: #{tpu_custom_call.1} parent=1 // pred_check
      _
    $region31: #{tpu_custom_call.1} parent=1 // pred_check_branch
      %34 = sbr.rel (0) target = $region33
    $region32: #{tpu_custom_call.1} parent=1 // pred_region
      _
    $region33: #{tpu_custom_call.1} parent=1 // pred_fallthru
      _
    // Predicated region
    $region34: #{tpu_custom_call.1} parent=1 // pred_check
      _
    $region35: #{tpu_custom_call.1} parent=1 // pred_check_branch
      %36 = sbr.rel (0) target = $region37
    $region36: #{tpu_custom_call.1} parent=1 // pred_region
      _
    $region37: #{tpu_custom_call.1} parent=1 // pred_fallthru
      _
    // Predicated region
    $region38: #{tpu_custom_call.1} parent=1 // pred_check
      _
    $region39: #{tpu_custom_call.1} parent=1 // pred_check_branch
      %38 = sbr.rel (0) target = $region41
    $region40: #{tpu_custom_call.1} parent=1 // pred_region
      _
    $region41: #{tpu_custom_call.1} parent=1 // pred_fallthru
      _
    // Predicated region
    $region42: #{tpu_custom_call.1} parent=1 // pred_check
      _
    $region43: #{tpu_custom_call.1} parent=1 // pred_check_branch
      %40 = sbr.rel (0) target = $region45
    $region44: #{tpu_custom_call.1} parent=1 // pred_region
      _
    $region45: #{tpu_custom_call.1} parent=1 // pred_fallthru
      _
    // Predicated region
    $region46: #{tpu_custom_call.1} parent=1 // pred_check
      _
    $region47: #{tpu_custom_call.1} parent=1 // pred_check_branch
      %42 = sbr.rel (0) target = $region49
    $region48: #{tpu_custom_call.1} parent=1 // pred_region
      _
    $region49: #{tpu_custom_call.1} parent=1 // pred_fallthru
      _
    // Predicated region
    $region50: #{tpu_custom_call.1} parent=1 // pred_check
      _
    $region51: #{tpu_custom_call.1} parent=1 // pred_check_branch
      %44 = sbr.rel (0) target = $region53
    $region52: #{tpu_custom_call.1} parent=1 // pred_region
      _
    $region53: #{tpu_custom_call.1} parent=1 // pred_fallthru
      _
    %p45 = scmp.eq.s32.totalorder 0, 0
    // Predicated region
    $region54: #{tpu_custom_call.1} parent=1 // pred_check
      %p46 = pneg %p45
    $region55: #{tpu_custom_call.1} parent=1 // pred_check_branch
      %48 = sbr.rel (%p46) target = $region57
    $region56: #{tpu_custom_call.1} parent=1 // pred_region
      %vm49 = vcmask 261120
      %50 = vst.msk [vmem:[#allocation2] sm:$0xff] %vm49, 0.0
      %51 = vst.msk [vmem:[#allocation3] sm:$0xff] %vm49, 0.0
      %vm52 = vcmask 7168
      %53 = vst.msk [vmem:[#allocation4] sm:$0xff] %vm52, 0.0
      %vm54 = vcmask 254976
      %55 = vst.msk [vmem:[#allocation5] sm:$0x3] %vm54, -inf
      %56 = vst.msk [vmem:[#allocation6] sm:$0x3] %vm54, inf
    $region57: #{tpu_custom_call.1} parent=1 // pred_fallthru
      _
    %v57 = vld [vmem:[%s1] sm:$0xff]
    %v58 = vld [vmem:[%s1 + $0x8] sm:$0xff]
    %v59 = vld [vmem:[%s1 + $0x10] sm:$0xff]
    %v60 = vld [vmem:[%s1 + $0x18] sm:$0xff]
    %v61 = vld [vmem:[%s1 + $0x20] sm:$0xff]
    %v62 = vld [vmem:[%s1 + $0x28] sm:$0xff]
    %v63 = vld [vmem:[%s1 + $0x30] sm:$0xff]
    %v64 = vld [vmem:[%s1 + $0x38] sm:$0xff]
    %v65 = vld [vmem:[%s1 + $0x40] sm:$0xff]
    %v66 = vld [vmem:[%s1 + $0x48] sm:$0xff]
    %v67 = vld [vmem:[%s1 + $0x50] sm:$0xff]
    %v68 = vld [vmem:[%s1 + $0x58] sm:$0xff]
    %v69 = vld [vmem:[%s1 + $0x60] sm:$0xff]
    %v70 = vld [vmem:[%s1 + $0x68] sm:$0xff]
    %v71 = vld [vmem:[%s1 + $0x70] sm:$0xff]
    %v72 = vld [vmem:[%s1 + $0x78] sm:$0xff]
    %v73 = vld [vmem:[%s0] sm:$0x1]
    %v74 = vlaneseq
    %v75 = vshrl.u32 %v74, 7
    %v76 = vlaneseq
    %v77 = vshrl.u32 %v76, 7
    %v78 = vsub.s32 0, %v77
    %v79 = vrot.slane %v73, %v78
    %vm80 = vcmp.eq.s32.totalorder %v75, %v79
    %v81 = vsel %vm80, 1, 0
    %v82 = vcvt.s32.f32 %v81
    %v83 = vld [vmem:[#allocation4] sm:$0xff]
    %84 = vadd.xlane.f32.xlu0 %v82
    %v85 = vpop.xlane.xlu0 %84
    %v86 = vadd.f32 %v83, %v85
    %vm87 = vcmask 7168
    %88 = vst.msk [vmem:[#allocation4] sm:$0xff] %vm87, %v86
    %v89 = vld [vmem:[#allocation2] sm:$0xff]
    %90 = vmatprep.subr.mxu0 0.0
    %91 = vmatpush1.msra.mxu0 %v72
    %92 = vmatprep.subr.mxu0 0.0
    %93 = vmatpush1.msra.mxu0 %v71
    %94 = vmatprep.subr.mxu0 0.0
    %95 = vmatpush1.msra.mxu0 %v70
    %96 = vmatprep.subr.mxu0 0.0
    %97 = vmatpush1.msra.mxu0 %v69
    %98 = vmatprep.subr.mxu0 0.0
    %99 = vmatpush1.msra.mxu0 %v68
    %100 = vmatprep.subr.mxu0 0.0
    %101 = vmatpush1.msra.mxu0 %v67
    %102 = vmatprep.subr.mxu0 0.0
    %103 = vmatpush1.msra.mxu0 %v66
    %104 = vmatprep.subr.mxu0 0.0
    %105 = vmatpush1.msra.mxu0 %v65
    %106 = vmatprep.subr.mxu0 0.0
    %107 = vmatpush1.msra.mxu0 %v64
    %108 = vmatprep.subr.mxu0 0.0
    %109 = vmatpush1.msra.mxu0 %v63
    %110 = vmatprep.subr.mxu0 0.0
    %111 = vmatpush1.msra.mxu0 %v62
    %112 = vmatprep.subr.mxu0 0.0
    %113 = vmatpush1.msra.mxu0 %v61
    %114 = vmatprep.subr.mxu0 0.0
    %115 = vmatpush1.msra.mxu0 %v60
    %116 = vmatprep.subr.mxu0 0.0
    %117 = vmatpush1.msra.mxu0 %v59
    %118 = vmatprep.subr.mxu0 0.0
    %119 = vmatpush1.msra.mxu0 %v58
    %120 = vmatprep.subr.mxu0 0.0
    %121 = vmatpush1.msra.mxu0 %v57
    %122 = vmatprep.subr.mxu0 0.0
    %123 = vmatpush2.msra.mxu0 0.0
    %124 = vmatprep.subr.mxu0 0.0
    %125 = vmatpush2.msra.mxu0 0.0
    %126 = vmatprep.subr.mxu0 0.0
    %127 = vmatpush2.msra.mxu0 0.0
    %128 = vmatprep.subr.mxu0 0.0
    %129 = vmatpush2.msra.mxu0 0.0
    %130 = vmatprep.subr.mxu0 0.0
    %131 = vmatpush2.msra.mxu0 0.0
    %132 = vmatprep.subr.mxu0 0.0
    %133 = vmatpush2.msra.mxu0 0.0
    %134 = vmatprep.subr.mxu0 0.0
    %135 = vmatpush2.msra.mxu0 0.0
    %136 = vmatprep.subr.mxu0 0.0
    %137 = vmatpush2.msra.mxu0 0.0
    %138 = vmatprep.subr.mxu0 0.0
    %139 = vmatpush2.msra.mxu0 0.0
    %140 = vmatprep.subr.mxu0 0.0
    %141 = vmatpush2.msra.mxu0 0.0
    %142 = vmatprep.subr.mxu0 0.0
    %143 = vmatpush2.msra.mxu0 0.0
    %144 = vmatprep.subr.mxu0 0.0
    %145 = vmatpush2.msra.mxu0 0.0
    %146 = vmatprep.subr.mxu0 0.0
    %147 = vmatpush2.msra.mxu0 0.0
    %148 = vmatprep.subr.mxu0 0.0
    %149 = vmatpush2.msra.mxu0 0.0
    %150 = vmatprep.subr.mxu0 0.0
    %151 = vmatpush2.msra.mxu0 0.0
    %152 = vmatprep.subr.mxu0 0.0
    %153 = vmatpush2.msra.mxu0 0.0
    %154 = vmatprep.mubr.f32.mxu0 0.0
    %155 = vmatmul.mubr.f32.gmra.mxu0 %v82
    %v156 = vpop.f32.mrf.mxu0
    %v157 = vadd.f32 0.0, %v156
    %v158 = vpop.f32.mrf.mxu0
    %159 = vdwg.mxu0
    %v160 = vadd.f32 %v89, %v157
    %vm161 = vcmask 261120
    %162 = vst.msk [vmem:[#allocation2] sm:$0xff] %vm161, %v160
    %v163 = vld [vmem:[#allocation3] sm:$0xff]
    %v164 = vmul.f32 %v57, %v57
    %v165 = vmul.f32 %v58, %v58
    %v166 = vmul.f32 %v59, %v59
    %v167 = vmul.f32 %v60, %v60
    %v168 = vmul.f32 %v61, %v61
    %v169 = vmul.f32 %v62, %v62
    %v170 = vmul.f32 %v63, %v63
    %v171 = vmul.f32 %v64, %v64
    %v172 = vmul.f32 %v65, %v65
    %v173 = vmul.f32 %v66, %v66
    %v174 = vmul.f32 %v67, %v67
    %v175 = vmul.f32 %v68, %v68
    %v176 = vmul.f32 %v69, %v69
    %v177 = vmul.f32 %v70, %v70
    %v178 = vmul.f32 %v71, %v71
    %v179 = vmul.f32 %v72, %v72
    %180 = vmatprep.subr.mxu0 0.0
    %181 = vmatpush1.msra.mxu0 %v179
    %182 = vmatprep.subr.mxu0 0.0
    %183 = vmatpush1.msra.mxu0 %v178
    %184 = vmatprep.subr.mxu0 0.0
    %185 = vmatpush1.msra.mxu0 %v177
    %186 = vmatprep.subr.mxu0 0.0
    %187 = vmatpush1.msra.mxu0 %v176
    %188 = vmatprep.subr.mxu0 0.0
    %189 = vmatpush1.msra.mxu0 %v175
    %190 = vmatprep.subr.mxu0 0.0
    %191 = vmatpush1.msra.mxu0 %v174
    %192 = vmatprep.subr.mxu0 0.0
    %193 = vmatpush1.msra.mxu0 %v173
    %194 = vmatprep.subr.mxu0 0.0
    %195 = vmatpush1.msra.mxu0 %v172
    %196 = vmatprep.subr.mxu0 0.0
    %197 = vmatpush1.msra.mxu0 %v171
    %198 = vmatprep.subr.mxu0 0.0
    %199 = vmatpush1.msra.mxu0 %v170
    %200 = vmatprep.subr.mxu0 0.0
    %201 = vmatpush1.msra.mxu0 %v169
    %202 = vmatprep.subr.mxu0 0.0
    %203 = vmatpush1.msra.mxu0 %v168
    %204 = vmatprep.subr.mxu0 0.0
    %205 = vmatpush1.msra.mxu0 %v167
    %206 = vmatprep.subr.mxu0 0.0
    %207 = vmatpush1.msra.mxu0 %v166
    %208 = vmatprep.subr.mxu0 0.0
    %209 = vmatpush1.msra.mxu0 %v165
    %210 = vmatprep.subr.mxu0 0.0
    %211 = vmatpush1.msra.mxu0 %v164
    %212 = vmatprep.subr.mxu0 0.0
    %213 = vmatpush2.msra.mxu0 0.0
    %214 = vmatprep.subr.mxu0 0.0
    %215 = vmatpush2.msra.mxu0 0.0
    %216 = vmatprep.subr.mxu0 0.0
    %217 = vmatpush2.msra.mxu0 0.0
    %218 = vmatprep.subr.mxu0 0.0
    %219 = vmatpush2.msra.mxu0 0.0
    %220 = vmatprep.subr.mxu0 0.0
    %221 = vmatpush2.msra.mxu0 0.0
    %222 = vmatprep.subr.mxu0 0.0
    %223 = vmatpush2.msra.mxu0 0.0
    %224 = vmatprep.subr.mxu0 0.0
    %225 = vmatpush2.msra.mxu0 0.0
    %226 = vmatprep.subr.mxu0 0.0
    %227 = vmatpush2.msra.mxu0 0.0
    %228 = vmatprep.subr.mxu0 0.0
    %229 = vmatpush2.msra.mxu0 0.0
    %230 = vmatprep.subr.mxu0 0.0
    %231 = vmatpush2.msra.mxu0 0.0
    %232 = vmatprep.subr.mxu0 0.0
    %233 = vmatpush2.msra.mxu0 0.0
    %234 = vmatprep.subr.mxu0 0.0
    %235 = vmatpush2.msra.mxu0 0.0
    %236 = vmatprep.subr.mxu0 0.0
    %237 = vmatpush2.msra.mxu0 0.0
    %238 = vmatprep.subr.mxu0 0.0
    %239 = vmatpush2.msra.mxu0 0.0
    %240 = vmatprep.subr.mxu0 0.0
    %241 = vmatpush2.msra.mxu0 0.0
    %242 = vmatprep.subr.mxu0 0.0
    %243 = vmatpush2.msra.mxu0 0.0
    %244 = vmatprep.mubr.f32.mxu0 0.0
    %245 = vmatmul.mubr.f32.gmra.mxu0 %v82
    %v246 = vpop.f32.mrf.mxu0
    %v247 = vadd.f32 0.0, %v246
    %v248 = vpop.f32.mrf.mxu0
    %249 = vdwg.mxu0
    %v250 = vadd.f32 %v163, %v247
    %251 = vst.msk [vmem:[#allocation3] sm:$0xff] %vm161, %v250
    %252 = vxpose.xlu0.b32.start [1/16] %v82, 128
    %253 = vxpose.xlu0.b32.cont [2/16] 0.0, 128
    %254 = vxpose.xlu0.b32.cont [3/16] 0.0, 128
    %255 = vxpose.xlu0.b32.cont [4/16] 0.0, 128
    %256 = vxpose.xlu0.b32.cont [5/16] 0.0, 128
    %257 = vxpose.xlu0.b32.cont [6/16] 0.0, 128
    %258 = vxpose.xlu0.b32.cont [7/16] 0.0, 128
    %259 = vxpose.xlu0.b32.cont [8/16] 0.0, 128
    %260 = vxpose.xlu0.b32.cont [9/16] 0.0, 128
    %261 = vxpose.xlu0.b32.cont [10/16] 0.0, 128
    %262 = vxpose.xlu0.b32.cont [11/16] 0.0, 128
    %263 = vxpose.xlu0.b32.cont [12/16] 0.0, 128
    %264 = vxpose.xlu0.b32.cont [13/16] 0.0, 128
    %265 = vxpose.xlu0.b32.cont [14/16] 0.0, 128
    %266 = vxpose.xlu0.b32.cont [15/16] 0.0, 128
    %267 = vxpose.xlu0.b32.end [16/16] 0.0, 128
    %v268 = vpop.trf.xlu0
    %v269 = vpop.trf.xlu0
    %v270 = vpop.trf.xlu0
    %v271 = vpop.trf.xlu0
    %v272 = vpop.trf.xlu0
    %v273 = vpop.trf.xlu0
    %v274 = vpop.trf.xlu0
    %v275 = vpop.trf.xlu0
    %v276 = vpop.trf.xlu0
    %v277 = vpop.trf.xlu0
    %v278 = vpop.trf.xlu0
    %v279 = vpop.trf.xlu0
    %v280 = vpop.trf.xlu0
    %v281 = vpop.trf.xlu0
    %v282 = vpop.trf.xlu0
    %v283 = vpop.trf.xlu0
    %vm284 = vcmp.gt.f32.partialorder %v268, 0.5
    %vm285 = vcmp.gt.f32.partialorder %v269, 0.5
    %vm286 = vcmp.gt.f32.partialorder %v270, 0.5
    %vm287 = vcmp.gt.f32.partialorder %v271, 0.5
    %vm288 = vcmp.gt.f32.partialorder %v272, 0.5
    %vm289 = vcmp.gt.f32.partialorder %v273, 0.5
    %vm290 = vcmp.gt.f32.partialorder %v274, 0.5
    %vm291 = vcmp.gt.f32.partialorder %v275, 0.5
    %vm292 = vcmp.gt.f32.partialorder %v276, 0.5
    %vm293 = vcmp.gt.f32.partialorder %v277, 0.5
    %vm294 = vcmp.gt.f32.partialorder %v278, 0.5
    %vm295 = vcmp.gt.f32.partialorder %v279, 0.5
    %vm296 = vcmp.gt.f32.partialorder %v280, 0.5
    %vm297 = vcmp.gt.f32.partialorder %v281, 0.5
    %vm298 = vcmp.gt.f32.partialorder %v282, 0.5
    %vm299 = vcmp.gt.f32.partialorder %v283, 0.5
    %v300 = vsel %vm284, 1, 0
    %v301 = vsel %vm285, 1, 0
    %v302 = vsel %vm286, 1, 0
    %v303 = vsel %vm287, 1, 0
    %v304 = vsel %vm288, 1, 0
    %v305 = vsel %vm289, 1, 0
    %v306 = vsel %vm290, 1, 0
    %v307 = vsel %vm291, 1, 0
    %v308 = vsel %vm292, 1, 0
    %v309 = vsel %vm293, 1, 0
    %v310 = vsel %vm294, 1, 0
    %v311 = vsel %vm295, 1, 0
    %v312 = vsel %vm296, 1, 0
    %v313 = vsel %vm297, 1, 0
    %v314 = vsel %vm298, 1, 0
    %v315 = vsel %vm299, 1, 0
    %316 = vset.pattern.permute.xlu0 0
    %317 = vperm.xlu0 %316, %v300
    %v318 = vpop.permute.xlu0 %317
    %319 = vset.pattern.permute.xlu0 0
    %320 = vperm.xlu0 %319, %v301
    %v321 = vpop.permute.xlu0 %320
    %322 = vset.pattern.permute.xlu0 0
    %323 = vperm.xlu0 %322, %v302
    %v324 = vpop.permute.xlu0 %323
    %325 = vset.pattern.permute.xlu0 0
    %326 = vperm.xlu0 %325, %v303
    %v327 = vpop.permute.xlu0 %326
    %328 = vset.pattern.permute.xlu0 0
    %329 = vperm.xlu0 %328, %v304
    %v330 = vpop.permute.xlu0 %329
    %331 = vset.pattern.permute.xlu0 0
    %332 = vperm.xlu0 %331, %v305
    %v333 = vpop.permute.xlu0 %332
    %334 = vset.pattern.permute.xlu0 0
    %335 = vperm.xlu0 %334, %v306
    %v336 = vpop.permute.xlu0 %335
    %337 = vset.pattern.permute.xlu0 0
    %338 = vperm.xlu0 %337, %v307
    %v339 = vpop.permute.xlu0 %338
    %340 = vset.pattern.permute.xlu0 0
    %341 = vperm.xlu0 %340, %v308
    %v342 = vpop.permute.xlu0 %341
    %343 = vset.pattern.permute.xlu0 0
    %344 = vperm.xlu0 %343, %v309
    %v345 = vpop.permute.xlu0 %344
    %346 = vset.pattern.permute.xlu0 0
    %347 = vperm.xlu0 %346, %v310
    %v348 = vpop.permute.xlu0 %347
    %349 = vset.pattern.permute.xlu0 0
    %350 = vperm.xlu0 %349, %v311
    %v351 = vpop.permute.xlu0 %350
    %352 = vset.pattern.permute.xlu0 0
    %353 = vperm.xlu0 %352, %v312
    %v354 = vpop.permute.xlu0 %353
    %355 = vset.pattern.permute.xlu0 0
    %356 = vperm.xlu0 %355, %v313
    %v357 = vpop.permute.xlu0 %356
    %358 = vset.pattern.permute.xlu0 0
    %359 = vperm.xlu0 %358, %v314
    %v360 = vpop.permute.xlu0 %359
    %361 = vset.pattern.permute.xlu0 0
    %362 = vperm.xlu0 %361, %v315
    %v363 = vpop.permute.xlu0 %362
    %vm364 = vcmp.eq.s32.totalorder %v318, 1
    %vm365 = vcmp.eq.s32.totalorder %v321, 1
    %vm366 = vcmp.eq.s32.totalorder %v324, 1
    %vm367 = vcmp.eq.s32.totalorder %v327, 1
    %vm368 = vcmp.eq.s32.totalorder %v330, 1
    %vm369 = vcmp.eq.s32.totalorder %v333, 1
    %vm370 = vcmp.eq.s32.totalorder %v336, 1
    %vm371 = vcmp.eq.s32.totalorder %v339, 1
    %vm372 = vcmp.eq.s32.totalorder %v342, 1
    %vm373 = vcmp.eq.s32.totalorder %v345, 1
    %vm374 = vcmp.eq.s32.totalorder %v348, 1
    %vm375 = vcmp.eq.s32.totalorder %v351, 1
    %vm376 = vcmp.eq.s32.totalorder %v354, 1
    %vm377 = vcmp.eq.s32.totalorder %v357, 1
    %vm378 = vcmp.eq.s32.totalorder %v360, 1
    %vm379 = vcmp.eq.s32.totalorder %v363, 1
    %v380 = vsel %vm364, %v57, -inf
    %v381 = vsel %vm365, %v58, -inf
    %v382 = vsel %vm366, %v59, -inf
    %v383 = vsel %vm367, %v60, -inf
    %v384 = vsel %vm368, %v61, -inf
    %v385 = vsel %vm369, %v62, -inf
    %v386 = vsel %vm370, %v63, -inf
    %v387 = vsel %vm371, %v64, -inf
    %v388 = vsel %vm372, %v65, -inf
    %v389 = vsel %vm373, %v66, -inf
    %v390 = vsel %vm374, %v67, -inf
    %v391 = vsel %vm375, %v68, -inf
    %v392 = vsel %vm376, %v69, -inf
    %v393 = vsel %vm377, %v70, -inf
    %v394 = vsel %vm378, %v71, -inf
    %v395 = vsel %vm379, %v72, -inf
    %v396 = vsel %vm161, %v380, -inf
    %v397 = vsel %vm161, %v381, -inf
    %v398 = vsel %vm161, %v382, -inf
    %v399 = vsel %vm161, %v383, -inf
    %v400 = vsel %vm161, %v384, -inf
    %v401 = vmax.f32 %v396, %v400
    %v402 = vsel %vm161, %v385, -inf
    %v403 = vmax.f32 %v397, %v402
    %v404 = vsel %vm161, %v386, -inf
    %v405 = vmax.f32 %v398, %v404
    %v406 = vsel %vm161, %v387, -inf
    %v407 = vmax.f32 %v399, %v406
    %v408 = vsel %vm161, %v388, -inf
    %v409 = vmax.f32 %v401, %v408
    %v410 = vsel %vm161, %v389, -inf
    %v411 = vmax.f32 %v403, %v410
    %v412 = vsel %vm161, %v390, -inf
    %v413 = vmax.f32 %v405, %v412
    %v414 = vsel %vm161, %v391, -inf
    %v415 = vmax.f32 %v407, %v414
    %v416 = vsel %vm161, %v392, -inf
    %v417 = vmax.f32 %v409, %v416
    %v418 = vsel %vm161, %v393, -inf
    %v419 = vmax.f32 %v411, %v418
    %v420 = vsel %vm161, %v394, -inf
    %v421 = vmax.f32 %v413, %v420
    %v422 = vsel %vm161, %v395, -inf
    %v423 = vmax.f32 %v415, %v422
    %v424 = vmax.f32 %v417, %v419
    %v425 = vmax.f32 %v421, %v423
    %v426 = vmax.f32 %v424, %v425
    %v427 = vrot.slane %v426, 4
    %v428 = vmax.f32 %v426, %v427
    %v429 = vrot.slane %v428, 2
    %v430 = vmax.f32 %v428, %v429
    %v431 = vrot.slane %v430, 1
    %v432 = vmax.f32 %v430, %v431
    %v433 = vsel %vm364, %v57, inf
    %v434 = vsel %vm365, %v58, inf
    %v435 = vsel %vm366, %v59, inf
    %v436 = vsel %vm367, %v60, inf
    %v437 = vsel %vm368, %v61, inf
    %v438 = vsel %vm369, %v62, inf
    %v439 = vsel %vm370, %v63, inf
    %v440 = vsel %vm371, %v64, inf
    %v441 = vsel %vm372, %v65, inf
    %v442 = vsel %vm373, %v66, inf
    %v443 = vsel %vm374, %v67, inf
    %v444 = vsel %vm375, %v68, inf
    %v445 = vsel %vm376, %v69, inf
    %v446 = vsel %vm377, %v70, inf
    %v447 = vsel %vm378, %v71, inf
    %v448 = vsel %vm379, %v72, inf
    %v449 = vsel %vm161, %v433, inf
    %v450 = vsel %vm161, %v434, inf
    %v451 = vsel %vm161, %v435, inf
    %v452 = vsel %vm161, %v436, inf
    %v453 = vsel %vm161, %v437, inf
    %v454 = vmin.f32 %v449, %v453
    %v455 = vsel %vm161, %v438, inf
    %v456 = vmin.f32 %v450, %v455
    %v457 = vsel %vm161, %v439, inf
    %v458 = vmin.f32 %v451, %v457
    %v459 = vsel %vm161, %v440, inf
    %v460 = vmin.f32 %v452, %v459
    %v461 = vsel %vm161, %v441, inf
    %v462 = vmin.f32 %v454, %v461
    %v463 = vsel %vm161, %v442, inf
    %v464 = vmin.f32 %v456, %v463
    %v465 = vsel %vm161, %v443, inf
    %v466 = vmin.f32 %v458, %v465
    %v467 = vsel %vm161, %v444, inf
    %v468 = vmin.f32 %v460, %v467
    %v469 = vsel %vm161, %v445, inf
    %v470 = vmin.f32 %v462, %v469
    %v471 = vsel %vm161, %v446, inf
    %v472 = vmin.f32 %v464, %v471
    %v473 = vsel %vm161, %v447, inf
    %v474 = vmin.f32 %v466, %v473
    %v475 = vsel %vm161, %v448, inf
    %v476 = vmin.f32 %v468, %v475
    %v477 = vmin.f32 %v470, %v472
    %v478 = vmin.f32 %v474, %v476
    %v479 = vmin.f32 %v477, %v478
    %v480 = vrot.slane %v479, 4
    %v481 = vmin.f32 %v479, %v480
    %v482 = vrot.slane %v481, 2
    %v483 = vmin.f32 %v481, %v482
    %v484 = vrot.slane %v483, 1
    %v485 = vmin.f32 %v483, %v484
    %486 = vset.pattern.permute.xlu0 1
    %487 = vperm.xlu0 %486, %v300
    %v488 = vpop.permute.xlu0 %487
    %489 = vset.pattern.permute.xlu0 1
    %490 = vperm.xlu0 %489, %v301
    %v491 = vpop.permute.xlu0 %490
    %492 = vset.pattern.permute.xlu0 1
    %493 = vperm.xlu0 %492, %v302
    %v494 = vpop.permute.xlu0 %493
    %495 = vset.pattern.permute.xlu0 1
    %496 = vperm.xlu0 %495, %v303
    %v497 = vpop.permute.xlu0 %496
    %498 = vset.pattern.permute.xlu0 1
    %499 = vperm.xlu0 %498, %v304
    %v500 = vpop.permute.xlu0 %499
    %501 = vset.pattern.permute.xlu0 1
    %502 = vperm.xlu0 %501, %v305
    %v503 = vpop.permute.xlu0 %502
    %504 = vset.pattern.permute.xlu0 1
    %505 = vperm.xlu0 %504, %v306
    %v506 = vpop.permute.xlu0 %505
    %507 = vset.pattern.permute.xlu0 1
    %508 = vperm.xlu0 %507, %v307
    %v509 = vpop.permute.xlu0 %508
    %510 = vset.pattern.permute.xlu0 1
    %511 = vperm.xlu0 %510, %v308
    %v512 = vpop.permute.xlu0 %511
    %513 = vset.pattern.permute.xlu0 1
    %514 = vperm.xlu0 %513, %v309
    %v515 = vpop.permute.xlu0 %514
    %516 = vset.pattern.permute.xlu0 1
    %517 = vperm.xlu0 %516, %v310
    %v518 = vpop.permute.xlu0 %517
    %519 = vset.pattern.permute.xlu0 1
    %520 = vperm.xlu0 %519, %v311
    %v521 = vpop.permute.xlu0 %520
    %522 = vset.pattern.permute.xlu0 1
    %523 = vperm.xlu0 %522, %v312
    %v524 = vpop.permute.xlu0 %523
    %525 = vset.pattern.permute.xlu0 1
    %526 = vperm.xlu0 %525, %v313
    %v527 = vpop.permute.xlu0 %526
    %528 = vset.pattern.permute.xlu0 1
    %529 = vperm.xlu0 %528, %v314
    %v530 = vpop.permute.xlu0 %529
    %531 = vset.pattern.permute.xlu0 1
    %532 = vperm.xlu0 %531, %v315
    %v533 = vpop.permute.xlu0 %532
    %vm534 = vcmp.eq.s32.totalorder %v488, 1
    %vm535 = vcmp.eq.s32.totalorder %v491, 1
    %vm536 = vcmp.eq.s32.totalorder %v494, 1
    %vm537 = vcmp.eq.s32.totalorder %v497, 1
    %vm538 = vcmp.eq.s32.totalorder %v500, 1
    %vm539 = vcmp.eq.s32.totalorder %v503, 1
    %vm540 = vcmp.eq.s32.totalorder %v506, 1
    %vm541 = vcmp.eq.s32.totalorder %v509, 1
    %vm542 = vcmp.eq.s32.totalorder %v512, 1
    %vm543 = vcmp.eq.s32.totalorder %v515, 1
    %vm544 = vcmp.eq.s32.totalorder %v518, 1
    %vm545 = vcmp.eq.s32.totalorder %v521, 1
    %vm546 = vcmp.eq.s32.totalorder %v524, 1
    %vm547 = vcmp.eq.s32.totalorder %v527, 1
    %vm548 = vcmp.eq.s32.totalorder %v530, 1
    %vm549 = vcmp.eq.s32.totalorder %v533, 1
    %v550 = vsel %vm534, %v57, -inf
    %v551 = vsel %vm535, %v58, -inf
    %v552 = vsel %vm536, %v59, -inf
    %v553 = vsel %vm537, %v60, -inf
    %v554 = vsel %vm538, %v61, -inf
    %v555 = vsel %vm539, %v62, -inf
    %v556 = vsel %vm540, %v63, -inf
    %v557 = vsel %vm541, %v64, -inf
    %v558 = vsel %vm542, %v65, -inf
    %v559 = vsel %vm543, %v66, -inf
    %v560 = vsel %vm544, %v67, -inf
    %v561 = vsel %vm545, %v68, -inf
    %v562 = vsel %vm546, %v69, -inf
    %v563 = vsel %vm547, %v70, -inf
    %v564 = vsel %vm548, %v71, -inf
    %v565 = vsel %vm549, %v72, -inf
    %v566 = vsel %vm161, %v550, -inf
    %v567 = vsel %vm161, %v551, -inf
    %v568 = vsel %vm161, %v552, -inf
    %v569 = vsel %vm161, %v553, -inf
    %v570 = vsel %vm161, %v554, -inf
    %v571 = vmax.f32 %v566, %v570
    %v572 = vsel %vm161, %v555, -inf
    %v573 = vmax.f32 %v567, %v572
    %v574 = vsel %vm161, %v556, -inf
    %v575 = vmax.f32 %v568, %v574
    %v576 = vsel %vm161, %v557, -inf
    %v577 = vmax.f32 %v569, %v576
    %v578 = vsel %vm161, %v558, -inf
    %v579 = vmax.f32 %v571, %v578
    %v580 = vsel %vm161, %v559, -inf
    %v581 = vmax.f32 %v573, %v580
    %v582 = vsel %vm161, %v560, -inf
    %v583 = vmax.f32 %v575, %v582
    %v584 = vsel %vm161, %v561, -inf
    %v585 = vmax.f32 %v577, %v584
    %v586 = vsel %vm161, %v562, -inf
    %v587 = vmax.f32 %v579, %v586
    %v588 = vsel %vm161, %v563, -inf
    %v589 = vmax.f32 %v581, %v588
    %v590 = vsel %vm161, %v564, -inf
    %v591 = vmax.f32 %v583, %v590
    %v592 = vsel %vm161, %v565, -inf
    %v593 = vmax.f32 %v585, %v592
    %v594 = vmax.f32 %v587, %v589
    %v595 = vmax.f32 %v591, %v593
    %v596 = vmax.f32 %v594, %v595
    %v597 = vrot.slane %v596, 4
    %v598 = vmax.f32 %v596, %v597
    %v599 = vrot.slane %v598, 2
    %v600 = vmax.f32 %v598, %v599
    %v601 = vrot.slane %v600, 1
    %v602 = vmax.f32 %v600, %v601
    %v603 = vsel %vm534, %v57, inf
    %v604 = vsel %vm535, %v58, inf
    %v605 = vsel %vm536, %v59, inf
    %v606 = vsel %vm537, %v60, inf
    %v607 = vsel %vm538, %v61, inf
    %v608 = vsel %vm539, %v62, inf
    %v609 = vsel %vm540, %v63, inf
    %v610 = vsel %vm541, %v64, inf
    %v611 = vsel %vm542, %v65, inf
    %v612 = vsel %vm543, %v66, inf
    %v613 = vsel %vm544, %v67, inf
    %v614 = vsel %vm545, %v68, inf
    %v615 = vsel %vm546, %v69, inf
    %v616 = vsel %vm547, %v70, inf
    %v617 = vsel %vm548, %v71, inf
    %v618 = vsel %vm549, %v72, inf
    %v619 = vsel %vm161, %v603, inf
    %v620 = vsel %vm161, %v604, inf
    %v621 = vsel %vm161, %v605, inf
    %v622 = vsel %vm161, %v606, inf
    %v623 = vsel %vm161, %v607, inf
    %v624 = vmin.f32 %v619, %v623
    %v625 = vsel %vm161, %v608, inf
    %v626 = vmin.f32 %v620, %v625
    %v627 = vsel %vm161, %v609, inf
    %v628 = vmin.f32 %v621, %v627
    %v629 = vsel %vm161, %v610, inf
    %v630 = vmin.f32 %v622, %v629
    %v631 = vsel %vm161, %v611, inf
    %v632 = vmin.f32 %v624, %v631
    %v633 = vsel %vm161, %v612, inf
    %v634 = vmin.f32 %v626, %v633
    %v635 = vsel %vm161, %v613, inf
    %v636 = vmin.f32 %v628, %v635
    %v637 = vsel %vm161, %v614, inf
    %v638 = vmin.f32 %v630, %v637
    %v639 = vsel %vm161, %v615, inf
    %v640 = vmin.f32 %v632, %v639
    %v641 = vsel %vm161, %v616, inf
    %v642 = vmin.f32 %v634, %v641
    %v643 = vsel %vm161, %v617, inf
    %v644 = vmin.f32 %v636, %v643
    %v645 = vsel %vm161, %v618, inf
    %v646 = vmin.f32 %v638, %v645
    %v647 = vmin.f32 %v640, %v642
    %v648 = vmin.f32 %v644, %v646
    %v649 = vmin.f32 %v647, %v648
    %v650 = vrot.slane %v649, 4
    %v651 = vmin.f32 %v649, %v650
    %v652 = vrot.slane %v651, 2
    %v653 = vmin.f32 %v651, %v652
    %v654 = vrot.slane %v653, 1
    %v655 = vmin.f32 %v653, %v654
    %vm656 = vcmask 1040384
    %v657 = vsel %vm656, %v432, %v602
    %v658 = vsel %vm656, %v485, %v655
    %v659 = vld [vmem:[#allocation5] sm:$0x3]
    %v660 = vmax.f32 %v659, %v657
    %vm661 = vcmask 254976
    %662 = vst.msk [vmem:[#allocation5] sm:$0x3] %vm661, %v660
    %v663 = vld [vmem:[#allocation6] sm:$0x3]
    %v664 = vmin.f32 %v663, %v658
    %665 = vst.msk [vmem:[#allocation6] sm:$0x3] %vm661, %v664
    // Predicated region
    $region58: #{tpu_custom_call.1} parent=1 // pred_check
      %p666 = pneg %p45
    $region59: #{tpu_custom_call.1} parent=1 // pred_check_branch
      %668 = sbr.rel (%p666) target = $region61
    $region60: #{tpu_custom_call.1} parent=1 // pred_region
      %v669 = vld [vmem:[#allocation4] sm:$0x3]
      %vm670 = vcmp.gt.f32.partialorder %v669, 0.0
      %v671 = vmax.f32 %v669, 1.0
      %v672 = vrcp.pop %v671
      %v673 = vmul.f32 1.0, %v672
      %v674 = vsel %vm670, %v673, 0.0
      %v675 = vld [vmem:[#allocation2] sm:$0x3]
      %677 = vset.pattern.permute.xlu0 0
      %678 = vperm.xlu0 %677, %v674
      %v679 = vpop.permute.xlu0 %678
      %v681 = vmul.f32 %v675, %v679
      %v682 = vld [vmem:[#allocation3] sm:$0x3]
      %v683 = vmul.f32 %v682, %v679
      %v684 = vmul.f32 %v681, %v681
      %v685 = vsub.f32 %v683, %v684
      %vm686 = vcmp.le.f32.partialorder %v685, 1e-05
      %v687 = vmax.f32 %v685, 1e-05
      %v688 = vrsqrt.pop %v687
      %v689 = vmul.f32 %v687, %v688
      %vm690 = vcmp.eq.f32.partialorder %v687, inf
      %v691 = vsel %vm690, %v687, %v689
      %vm692 = vcmp.eq.f32.partialorder %v687, 0.0
      %v693 = vand.u32 %v687, 2147483648
      %v694 = vsel %vm692, %v693, %v691
      %v695 = vsel %vm686, 0.0, %v694
      %v696 = vld [vmem:[#allocation5] sm:$0x3]
      %v697 = vsel %vm670, 1, 0
      %698 = vset.pattern.permute.xlu0 0
      %699 = vperm.xlu0 %698, %v697
      %v700 = vpop.permute.xlu0 %699
      %vm701 = vcmp.eq.s32.totalorder %v700, 1
      %v702 = vsel %vm701, %v696, 0.0
      %v703 = vld [vmem:[#allocation6] sm:$0x3]
      %v704 = vsel %vm701, %v703, 0.0
      %v705 = vld [vmem:[%s2] sm:$0x3]
      %v706 = vld [vmem:[%s3] sm:$0xff]
      %v707 = vld [vmem:[%s4] sm:$0xff]
      %v708 = vld [vmem:[%s4 + $0x8] sm:$0xff]
      %v709 = vld [vmem:[%s4 + $0x10] sm:$0xff]
      %v710 = vld [vmem:[%s4 + $0x18] sm:$0xff]
      %v712 = vsel %vm161, %v681, 0
      %714 = vmatprep.subr.mxu0 0.0
      %715 = vmatpush1.msra.mxu0 0.0
      %716 = vmatprep.subr.mxu0 0.0
      %717 = vmatpush1.msra.mxu0 0.0
      %718 = vmatprep.subr.mxu0 0.0
      %719 = vmatpush1.msra.mxu0 0.0
      %720 = vmatprep.subr.mxu0 0.0
      %721 = vmatpush1.msra.mxu0 0.0
      %722 = vmatprep.subr.mxu0 0.0
      %723 = vmatpush1.msra.mxu0 0.0
      %724 = vmatprep.subr.mxu0 0.0
      %725 = vmatpush1.msra.mxu0 0.0
      %726 = vmatprep.subr.mxu0 0.0
      %727 = vmatpush1.msra.mxu0 0.0
      %728 = vmatprep.subr.mxu0 0.0
      %729 = vmatpush1.msra.mxu0 0.0
      %730 = vmatprep.subr.mxu0 0.0
      %731 = vmatpush1.msra.mxu0 0.0
      %732 = vmatprep.subr.mxu0 0.0
      %733 = vmatpush1.msra.mxu0 0.0
      %734 = vmatprep.subr.mxu0 0.0
      %735 = vmatpush1.msra.mxu0 0.0
      %736 = vmatprep.subr.mxu0 0.0
      %737 = vmatpush1.msra.mxu0 0.0
      %738 = vmatprep.subr.mxu0 0.0
      %739 = vmatpush1.msra.mxu0 %v710
      %740 = vmatprep.subr.mxu0 0.0
      %741 = vmatpush1.msra.mxu0 %v709
      %742 = vmatprep.subr.mxu0 0.0
      %743 = vmatpush1.msra.mxu0 %v708
      %744 = vmatprep.subr.mxu0 0.0
      %745 = vmatpush1.msra.mxu0 %v707
      %746 = vmatprep.subr.mxu0 0.0
      %747 = vmatpush2.msra.mxu0 0.0
      %748 = vmatprep.subr.mxu0 0.0
      %749 = vmatpush2.msra.mxu0 0.0
      %750 = vmatprep.subr.mxu0 0.0
      %751 = vmatpush2.msra.mxu0 0.0
      %752 = vmatprep.subr.mxu0 0.0
      %753 = vmatpush2.msra.mxu0 0.0
      %754 = vmatprep.subr.mxu0 0.0
      %755 = vmatpush2.msra.mxu0 0.0
      %756 = vmatprep.subr.mxu0 0.0
      %757 = vmatpush2.msra.mxu0 0.0
      %758 = vmatprep.subr.mxu0 0.0
      %759 = vmatpush2.msra.mxu0 0.0
      %760 = vmatprep.subr.mxu0 0.0
      %761 = vmatpush2.msra.mxu0 0.0
      %762 = vmatprep.subr.mxu0 0.0
      %763 = vmatpush2.msra.mxu0 0.0
      %764 = vmatprep.subr.mxu0 0.0
      %765 = vmatpush2.msra.mxu0 0.0
      %766 = vmatprep.subr.mxu0 0.0
      %767 = vmatpush2.msra.mxu0 0.0
      %768 = vmatprep.subr.mxu0 0.0
      %769 = vmatpush2.msra.mxu0 0.0
      %770 = vmatprep.subr.mxu0 0.0
      %771 = vmatpush2.msra.mxu0 0.0
      %772 = vmatprep.subr.mxu0 0.0
      %773 = vmatpush2.msra.mxu0 0.0
      %774 = vmatprep.subr.mxu0 0.0
      %775 = vmatpush2.msra.mxu0 0.0
      %776 = vmatprep.subr.mxu0 0.0
      %777 = vmatpush2.msra.mxu0 0.0
      %778 = vmatprep.mubr.f32.mxu0 0.0
      %779 = vmatmul.mubr.f32.gmra.mxu0 %v712
      %v780 = vpop.f32.mrf.mxu0
      %v781 = vadd.f32 0.0, %v780
      %v782 = vpop.f32.mrf.mxu0
      %783 = vdwg.mxu0
      %vm784 = vcmask 64512
      %v786 = vsel %vm784, %v705, 0
      %788 = vmatprep.subr.mxu0 0.0
      %789 = vmatpush1.msra.mxu0 0.0
      %790 = vmatprep.subr.mxu0 0.0
      %791 = vmatpush1.msra.mxu0 0.0
      %792 = vmatprep.subr.mxu0 0.0
      %793 = vmatpush1.msra.mxu0 0.0
      %794 = vmatprep.subr.mxu0 0.0
      %795 = vmatpush1.msra.mxu0 0.0
      %796 = vmatprep.subr.mxu0 0.0
      %797 = vmatpush1.msra.mxu0 0.0
      %798 = vmatprep.subr.mxu0 0.0
      %799 = vmatpush1.msra.mxu0 0.0
      %800 = vmatprep.subr.mxu0 0.0
      %801 = vmatpush1.msra.mxu0 0.0
      %802 = vmatprep.subr.mxu0 0.0
      %803 = vmatpush1.msra.mxu0 0.0
      %804 = vmatprep.subr.mxu0 0.0
      %805 = vmatpush1.msra.mxu0 0.0
      %806 = vmatprep.subr.mxu0 0.0
      %807 = vmatpush1.msra.mxu0 0.0
      %808 = vmatprep.subr.mxu0 0.0
      %809 = vmatpush1.msra.mxu0 0.0
      %810 = vmatprep.subr.mxu0 0.0
      %811 = vmatpush1.msra.mxu0 0.0
      %812 = vmatprep.subr.mxu0 0.0
      %813 = vmatpush1.msra.mxu0 0.0
      %814 = vmatprep.subr.mxu0 0.0
      %815 = vmatpush1.msra.mxu0 0.0
      %816 = vmatprep.subr.mxu0 0.0
      %817 = vmatpush1.msra.mxu0 0.0
      %818 = vmatprep.subr.mxu0 0.0
      %819 = vmatpush1.msra.mxu0 %v706
      %820 = vmatprep.subr.mxu0 0.0
      %821 = vmatpush2.msra.mxu0 0.0
      %822 = vmatprep.subr.mxu0 0.0
      %823 = vmatpush2.msra.mxu0 0.0
      %824 = vmatprep.subr.mxu0 0.0
      %825 = vmatpush2.msra.mxu0 0.0
      %826 = vmatprep.subr.mxu0 0.0
      %827 = vmatpush2.msra.mxu0 0.0
      %828 = vmatprep.subr.mxu0 0.0
      %829 = vmatpush2.msra.mxu0 0.0
      %830 = vmatprep.subr.mxu0 0.0
      %831 = vmatpush2.msra.mxu0 0.0
      %832 = vmatprep.subr.mxu0 0.0
      %833 = vmatpush2.msra.mxu0 0.0
      %834 = vmatprep.subr.mxu0 0.0
      %835 = vmatpush2.msra.mxu0 0.0
      %836 = vmatprep.subr.mxu0 0.0
      %837 = vmatpush2.msra.mxu0 0.0
      %838 = vmatprep.subr.mxu0 0.0
      %839 = vmatpush2.msra.mxu0 0.0
      %840 = vmatprep.subr.mxu0 0.0
      %841 = vmatpush2.msra.mxu0 0.0
      %842 = vmatprep.subr.mxu0 0.0
      %843 = vmatpush2.msra.mxu0 0.0
      %844 = vmatprep.subr.mxu0 0.0
      %845 = vmatpush2.msra.mxu0 0.0
      %846 = vmatprep.subr.mxu0 0.0
      %847 = vmatpush2.msra.mxu0 0.0
      %848 = vmatprep.subr.mxu0 0.0
      %849 = vmatpush2.msra.mxu0 0.0
      %850 = vmatprep.subr.mxu0 0.0
      %851 = vmatpush2.msra.mxu0 0.0
      %852 = vmatprep.mubr.f32.mxu0 0.0
      %853 = vmatmul.mubr.f32.gmra.mxu0 %v786
      %v854 = vpop.f32.mrf.mxu0
      %v855 = vadd.f32 %v781, %v854
      %v856 = vpop.f32.mrf.mxu0
      %857 = vdwg.mxu0
      %v858 = vld [vmem:[%s5] sm:$0xff]
      %v859 = vld [vmem:[%s5 + $0x8] sm:$0xff]
      %v860 = vld [vmem:[%s5 + $0x10] sm:$0xff]
      %v861 = vld [vmem:[%s5 + $0x18] sm:$0xff]
      %v863 = vsel %vm161, %v695, 0
      %865 = vmatprep.subr.mxu0 0.0
      %866 = vmatpush1.msra.mxu0 0.0
      %867 = vmatprep.subr.mxu0 0.0
      %868 = vmatpush1.msra.mxu0 0.0
      %869 = vmatprep.subr.mxu0 0.0
      %870 = vmatpush1.msra.mxu0 0.0
      %871 = vmatprep.subr.mxu0 0.0
      %872 = vmatpush1.msra.mxu0 0.0
      %873 = vmatprep.subr.mxu0 0.0
      %874 = vmatpush1.msra.mxu0 0.0
      %875 = vmatprep.subr.mxu0 0.0
      %876 = vmatpush1.msra.mxu0 0.0
      %877 = vmatprep.subr.mxu0 0.0
      %878 = vmatpush1.msra.mxu0 0.0
      %879 = vmatprep.subr.mxu0 0.0
      %880 = vmatpush1.msra.mxu0 0.0
      %881 = vmatprep.subr.mxu0 0.0
      %882 = vmatpush1.msra.mxu0 0.0
      %883 = vmatprep.subr.mxu0 0.0
      %884 = vmatpush1.msra.mxu0 0.0
      %885 = vmatprep.subr.mxu0 0.0
      %886 = vmatpush1.msra.mxu0 0.0
      %887 = vmatprep.subr.mxu0 0.0
      %888 = vmatpush1.msra.mxu0 0.0
      %889 = vmatprep.subr.mxu0 0.0
      %890 = vmatpush1.msra.mxu0 %v861
      %891 = vmatprep.subr.mxu0 0.0
      %892 = vmatpush1.msra.mxu0 %v860
      %893 = vmatprep.subr.mxu0 0.0
      %894 = vmatpush1.msra.mxu0 %v859
      %895 = vmatprep.subr.mxu0 0.0
      %896 = vmatpush1.msra.mxu0 %v858
      %897 = vmatprep.subr.mxu0 0.0
      %898 = vmatpush2.msra.mxu0 0.0
      %899 = vmatprep.subr.mxu0 0.0
      %900 = vmatpush2.msra.mxu0 0.0
      %901 = vmatprep.subr.mxu0 0.0
      %902 = vmatpush2.msra.mxu0 0.0
      %903 = vmatprep.subr.mxu0 0.0
      %904 = vmatpush2.msra.mxu0 0.0
      %905 = vmatprep.subr.mxu0 0.0
      %906 = vmatpush2.msra.mxu0 0.0
      %907 = vmatprep.subr.mxu0 0.0
      %908 = vmatpush2.msra.mxu0 0.0
      %909 = vmatprep.subr.mxu0 0.0
      %910 = vmatpush2.msra.mxu0 0.0
      %911 = vmatprep.subr.mxu0 0.0
      %912 = vmatpush2.msra.mxu0 0.0
      %913 = vmatprep.subr.mxu0 0.0
      %914 = vmatpush2.msra.mxu0 0.0
      %915 = vmatprep.subr.mxu0 0.0
      %916 = vmatpush2.msra.mxu0 0.0
      %917 = vmatprep.subr.mxu0 0.0
      %918 = vmatpush2.msra.mxu0 0.0
      %919 = vmatprep.subr.mxu0 0.0
      %920 = vmatpush2.msra.mxu0 0.0
      %921 = vmatprep.subr.mxu0 0.0
      %922 = vmatpush2.msra.mxu0 0.0
      %923 = vmatprep.subr.mxu0 0.0
      %924 = vmatpush2.msra.mxu0 0.0
      %925 = vmatprep.subr.mxu0 0.0
      %926 = vmatpush2.msra.mxu0 0.0
      %927 = vmatprep.subr.mxu0 0.0
      %928 = vmatpush2.msra.mxu0 0.0
      %929 = vmatprep.mubr.f32.mxu0 0.0
      %930 = vmatmul.mubr.f32.gmra.mxu0 %v863
      %v931 = vpop.f32.mrf.mxu0
      %v932 = vadd.f32 0.0, %v931
      %v933 = vpop.f32.mrf.mxu0
      %934 = vdwg.mxu0
      %v935 = vadd.f32 %v855, %v932
      %v936 = vld [vmem:[%s6] sm:$0xff]
      %v937 = vld [vmem:[%s6 + $0x8] sm:$0xff]
      %v938 = vld [vmem:[%s6 + $0x10] sm:$0xff]
      %v939 = vld [vmem:[%s6 + $0x18] sm:$0xff]
      %v941 = vsel %vm161, %v702, 0
      %943 = vmatprep.subr.mxu0 0.0
      %944 = vmatpush1.msra.mxu0 0.0
      %945 = vmatprep.subr.mxu0 0.0
      %946 = vmatpush1.msra.mxu0 0.0
      %947 = vmatprep.subr.mxu0 0.0
      %948 = vmatpush1.msra.mxu0 0.0
      %949 = vmatprep.subr.mxu0 0.0
      %950 = vmatpush1.msra.mxu0 0.0
      %951 = vmatprep.subr.mxu0 0.0
      %952 = vmatpush1.msra.mxu0 0.0
      %953 = vmatprep.subr.mxu0 0.0
      %954 = vmatpush1.msra.mxu0 0.0
      %955 = vmatprep.subr.mxu0 0.0
      %956 = vmatpush1.msra.mxu0 0.0
      %957 = vmatprep.subr.mxu0 0.0
      %958 = vmatpush1.msra.mxu0 0.0
      %959 = vmatprep.subr.mxu0 0.0
      %960 = vmatpush1.msra.mxu0 0.0
      %961 = vmatprep.subr.mxu0 0.0
      %962 = vmatpush1.msra.mxu0 0.0
      %963 = vmatprep.subr.mxu0 0.0
      %964 = vmatpush1.msra.mxu0 0.0
      %965 = vmatprep.subr.mxu0 0.0
      %966 = vmatpush1.msra.mxu0 0.0
      %967 = vmatprep.subr.mxu0 0.0
      %968 = vmatpush1.msra.mxu0 %v939
      %969 = vmatprep.subr.mxu0 0.0
      %970 = vmatpush1.msra.mxu0 %v938
      %971 = vmatprep.subr.mxu0 0.0
      %972 = vmatpush1.msra.mxu0 %v937
      %973 = vmatprep.subr.mxu0 0.0
      %974 = vmatpush1.msra.mxu0 %v936
      %975 = vmatprep.subr.mxu0 0.0
      %976 = vmatpush2.msra.mxu0 0.0
      %977 = vmatprep.subr.mxu0 0.0
      %978 = vmatpush2.msra.mxu0 0.0
      %979 = vmatprep.subr.mxu0 0.0
      %980 = vmatpush2.msra.mxu0 0.0
      %981 = vmatprep.subr.mxu0 0.0
      %982 = vmatpush2.msra.mxu0 0.0
      %983 = vmatprep.subr.mxu0 0.0
      %984 = vmatpush2.msra.mxu0 0.0
      %985 = vmatprep.subr.mxu0 0.0
      %986 = vmatpush2.msra.mxu0 0.0
      %987 = vmatprep.subr.mxu0 0.0
      %988 = vmatpush2.msra.mxu0 0.0
      %989 = vmatprep.subr.mxu0 0.0
      %990 = vmatpush2.msra.mxu0 0.0
      %991 = vmatprep.subr.mxu0 0.0
      %992 = vmatpush2.msra.mxu0 0.0
      %993 = vmatprep.subr.mxu0 0.0
      %994 = vmatpush2.msra.mxu0 0.0
      %995 = vmatprep.subr.mxu0 0.0
      %996 = vmatpush2.msra.mxu0 0.0
      %997 = vmatprep.subr.mxu0 0.0
      %998 = vmatpush2.msra.mxu0 0.0
      %999 = vmatprep.subr.mxu0 0.0
      %1000 = vmatpush2.msra.mxu0 0.0
      %1001 = vmatprep.subr.mxu0 0.0
      %1002 = vmatpush2.msra.mxu0 0.0
      %1003 = vmatprep.subr.mxu0 0.0
      %1004 = vmatpush2.msra.mxu0 0.0
      %1005 = vmatprep.subr.mxu0 0.0
      %1006 = vmatpush2.msra.mxu0 0.0
      %1007 = vmatprep.mubr.f32.mxu0 0.0
      %1008 = vmatmul.mubr.f32.gmra.mxu0 %v941
      %v1009 = vpop.f32.mrf.mxu0
      %v1010 = vadd.f32 0.0, %v1009
      %v1011 = vpop.f32.mrf.mxu0
      %1012 = vdwg.mxu0
      %v1013 = vadd.f32 %v935, %v1010
      %v1014 = vld [vmem:[%s7] sm:$0xff]
      %v1015 = vld [vmem:[%s7 + $0x8] sm:$0xff]
      %v1016 = vld [vmem:[%s7 + $0x10] sm:$0xff]
      %v1017 = vld [vmem:[%s7 + $0x18] sm:$0xff]
      %v1019 = vsel %vm161, %v704, 0
      %1021 = vmatprep.subr.mxu0 0.0
      %1022 = vmatpush1.msra.mxu0 0.0
      %1023 = vmatprep.subr.mxu0 0.0
      %1024 = vmatpush1.msra.mxu0 0.0
      %1025 = vmatprep.subr.mxu0 0.0
      %1026 = vmatpush1.msra.mxu0 0.0
      %1027 = vmatprep.subr.mxu0 0.0
      %1028 = vmatpush1.msra.mxu0 0.0
      %1029 = vmatprep.subr.mxu0 0.0
      %1030 = vmatpush1.msra.mxu0 0.0
      %1031 = vmatprep.subr.mxu0 0.0
      %1032 = vmatpush1.msra.mxu0 0.0
      %1033 = vmatprep.subr.mxu0 0.0
      %1034 = vmatpush1.msra.mxu0 0.0
      %1035 = vmatprep.subr.mxu0 0.0
      %1036 = vmatpush1.msra.mxu0 0.0
      %1037 = vmatprep.subr.mxu0 0.0
      %1038 = vmatpush1.msra.mxu0 0.0
      %1039 = vmatprep.subr.mxu0 0.0
      %1040 = vmatpush1.msra.mxu0 0.0
      %1041 = vmatprep.subr.mxu0 0.0
      %1042 = vmatpush1.msra.mxu0 0.0
      %1043 = vmatprep.subr.mxu0 0.0
      %1044 = vmatpush1.msra.mxu0 0.0
      %1045 = vmatprep.subr.mxu0 0.0
      %1046 = vmatpush1.msra.mxu0 %v1017
      %1047 = vmatprep.subr.mxu0 0.0
      %1048 = vmatpush1.msra.mxu0 %v1016
      %1049 = vmatprep.subr.mxu0 0.0
      %1050 = vmatpush1.msra.mxu0 %v1015
      %1051 = vmatprep.subr.mxu0 0.0
      %1052 = vmatpush1.msra.mxu0 %v1014
      %1053 = vmatprep.subr.mxu0 0.0
      %1054 = vmatpush2.msra.mxu0 0.0
      %1055 = vmatprep.subr.mxu0 0.0
      %1056 = vmatpush2.msra.mxu0 0.0
      %1057 = vmatprep.subr.mxu0 0.0
      %1058 = vmatpush2.msra.mxu0 0.0
      %1059 = vmatprep.subr.mxu0 0.0
      %1060 = vmatpush2.msra.mxu0 0.0
      %1061 = vmatprep.subr.mxu0 0.0
      %1062 = vmatpush2.msra.mxu0 0.0
      %1063 = vmatprep.subr.mxu0 0.0
      %1064 = vmatpush2.msra.mxu0 0.0
      %1065 = vmatprep.subr.mxu0 0.0
      %1066 = vmatpush2.msra.mxu0 0.0
      %1067 = vmatprep.subr.mxu0 0.0
      %1068 = vmatpush2.msra.mxu0 0.0
      %1069 = vmatprep.subr.mxu0 0.0
      %1070 = vmatpush2.msra.mxu0 0.0
      %1071 = vmatprep.subr.mxu0 0.0
      %1072 = vmatpush2.msra.mxu0 0.0
      %1073 = vmatprep.subr.mxu0 0.0
      %1074 = vmatpush2.msra.mxu0 0.0
      %1075 = vmatprep.subr.mxu0 0.0
      %1076 = vmatpush2.msra.mxu0 0.0
      %1077 = vmatprep.subr.mxu0 0.0
      %1078 = vmatpush2.msra.mxu0 0.0
      %1079 = vmatprep.subr.mxu0 0.0
      %1080 = vmatpush2.msra.mxu0 0.0
      %1081 = vmatprep.subr.mxu0 0.0
      %1082 = vmatpush2.msra.mxu0 0.0
      %1083 = vmatprep.subr.mxu0 0.0
      %1084 = vmatpush2.msra.mxu0 0.0
      %1085 = vmatprep.mubr.f32.mxu0 0.0
      %1086 = vmatmul.mubr.f32.gmra.mxu0 %v1019
      %v1087 = vpop.f32.mrf.mxu0
      %v1088 = vadd.f32 0.0, %v1087
      %v1089 = vpop.f32.mrf.mxu0
      %1090 = vdwg.mxu0
      %v1091 = vadd.f32 %v1013, %v1088
      %v1092 = vld [vmem:[%s8] sm:$0x1]
      %v1094 = vlaneseq
      %v1095 = vshrl.u32 %v1094, 7
      %v1096 = vsub.s32 0, %v1095
      %v1097 = vrot.slane %v1092, %v1096
      %v1099 = vadd.f32 %v1091, %v1097
      %vm1100 = vcmp.gt.f32.partialorder %v1099, 0.0
      %v1101 = vmul.f32 %v1099, 1.442695
      %v1102 = vpow.pop %v1101
      %v1103 = vsub.f32 %v1102, 1.0
      %v1104 = vmul.f32 %v1103, 1.6732632
      %v1105 = vsel %vm1100, %v1099, %v1104
      %v1106 = vmul.f32 %v1105, 1.050701
      %v1107 = vsel %vm661, %v1106, 0.0
      %1108 = vadd.xlane.f32.xlu0 %v1107
      %v1109 = vpop.xlane.xlu0 %1108
      %v1110 = vrcp.pop 32.0
      %v1111 = vmul.f32 %v1109, %v1110
      %v1112 = vsub.f32 %v1106, %v1111
      %v1113 = vmul.f32 %v1112, %v1112
      %v1114 = vsel %vm661, %v1113, 0.0
      %1115 = vadd.xlane.f32.xlu0 %v1114
      %v1116 = vpop.xlane.xlu0 %1115
      %v1117 = vmul.f32 %v1116, %v1110
      %v1118 = vadd.f32 %v1117, 1e-05
      %v1119 = vrsqrt.pop %v1118
      %v1120 = vmul.f32 %v1112, %v1119
      %v1121 = vld [vmem:[%s9] sm:$0x1]
      %v1123 = vlaneseq
      %v1124 = vshrl.u32 %v1123, 7
      %v1125 = vsub.s32 0, %v1124
      %v1126 = vrot.slane %v1121, %v1125
      %v1128 = vmul.f32 %v1120, %v1126
      %v1129 = vld [vmem:[%s10] sm:$0x1]
      %v1131 = vlaneseq
      %v1132 = vshrl.u32 %v1131, 7
      %v1133 = vsub.s32 0, %v1132
      %v1134 = vrot.slane %v1129, %v1133
      %v1136 = vadd.f32 %v1128, %v1134
      %v1137 = vld [vmem:[%s11] sm:$0xff]
      %v1138 = vld [vmem:[%s11 + $0x8] sm:$0xff]
      %v1139 = vld [vmem:[%s11 + $0x10] sm:$0xff]
      %v1140 = vld [vmem:[%s11 + $0x18] sm:$0xff]
      %v1141 = vld [vmem:[%s12] sm:$0x1]
      %v1143 = vlaneseq
      %v1144 = vshrl.u32 %v1143, 7
      %v1145 = vsub.s32 0, %v1144
      %v1146 = vrot.slane %v1141, %v1145
      %v1149 = vsel %vm161, %v1136, 0
      %1151 = vmatprep.subr.mxu0 0.0
      %1152 = vmatpush1.msra.mxu0 0.0
      %1153 = vmatprep.subr.mxu0 0.0
      %1154 = vmatpush1.msra.mxu0 0.0
      %1155 = vmatprep.subr.mxu0 0.0
      %1156 = vmatpush1.msra.mxu0 0.0
      %1157 = vmatprep.subr.mxu0 0.0
      %1158 = vmatpush1.msra.mxu0 0.0
      %1159 = vmatprep.subr.mxu0 0.0
      %1160 = vmatpush1.msra.mxu0 0.0
      %1161 = vmatprep.subr.mxu0 0.0
      %1162 = vmatpush1.msra.mxu0 0.0
      %1163 = vmatprep.subr.mxu0 0.0
      %1164 = vmatpush1.msra.mxu0 0.0
      %1165 = vmatprep.subr.mxu0 0.0
      %1166 = vmatpush1.msra.mxu0 0.0
      %1167 = vmatprep.subr.mxu0 0.0
      %1168 = vmatpush1.msra.mxu0 0.0
      %1169 = vmatprep.subr.mxu0 0.0
      %1170 = vmatpush1.msra.mxu0 0.0
      %1171 = vmatprep.subr.mxu0 0.0
      %1172 = vmatpush1.msra.mxu0 0.0
      %1173 = vmatprep.subr.mxu0 0.0
      %1174 = vmatpush1.msra.mxu0 0.0
      %1175 = vmatprep.subr.mxu0 0.0
      %1176 = vmatpush1.msra.mxu0 %v1140
      %1177 = vmatprep.subr.mxu0 0.0
      %1178 = vmatpush1.msra.mxu0 %v1139
      %1179 = vmatprep.subr.mxu0 0.0
      %1180 = vmatpush1.msra.mxu0 %v1138
      %1181 = vmatprep.subr.mxu0 0.0
      %1182 = vmatpush1.msra.mxu0 %v1137
      %1183 = vmatprep.subr.mxu0 0.0
      %1184 = vmatpush2.msra.mxu0 0.0
      %1185 = vmatprep.subr.mxu0 0.0
      %1186 = vmatpush2.msra.mxu0 0.0
      %1187 = vmatprep.subr.mxu0 0.0
      %1188 = vmatpush2.msra.mxu0 0.0
      %1189 = vmatprep.subr.mxu0 0.0
      %1190 = vmatpush2.msra.mxu0 0.0
      %1191 = vmatprep.subr.mxu0 0.0
      %1192 = vmatpush2.msra.mxu0 0.0
      %1193 = vmatprep.subr.mxu0 0.0
      %1194 = vmatpush2.msra.mxu0 0.0
      %1195 = vmatprep.subr.mxu0 0.0
      %1196 = vmatpush2.msra.mxu0 0.0
      %1197 = vmatprep.subr.mxu0 0.0
      %1198 = vmatpush2.msra.mxu0 0.0
      %1199 = vmatprep.subr.mxu0 0.0
      %1200 = vmatpush2.msra.mxu0 0.0
      %1201 = vmatprep.subr.mxu0 0.0
      %1202 = vmatpush2.msra.mxu0 0.0
      %1203 = vmatprep.subr.mxu0 0.0
      %1204 = vmatpush2.msra.mxu0 0.0
      %1205 = vmatprep.subr.mxu0 0.0
      %1206 = vmatpush2.msra.mxu0 0.0
      %1207 = vmatprep.subr.mxu0 0.0
      %1208 = vmatpush2.msra.mxu0 0.0
      %1209 = vmatprep.subr.mxu0 0.0
      %1210 = vmatpush2.msra.mxu0 0.0
      %1211 = vmatprep.subr.mxu0 0.0
      %1212 = vmatpush2.msra.mxu0 0.0
      %1213 = vmatprep.subr.mxu0 0.0
      %1214 = vmatpush2.msra.mxu0 0.0
      %1215 = vmatprep.mubr.f32.mxu0 0.0
      %1216 = vmatmul.mubr.f32.gmra.mxu0 %v1149
      %v1217 = vpop.f32.mrf.mxu0
      %v1218 = vadd.f32 %v1146, %v1217
      %v1219 = vpop.f32.mrf.mxu0
      %1220 = vdwg.mxu0
      %vm1221 = vcmask 58368
      %1222 = vst.msk [vmem:[#allocation7] sm:$0x3] %vm1221, %v1218
    $region61: #{tpu_custom_call.1} parent=1 // pred_fallthru
      _
    // Predicated region
    $region62: #{tpu_custom_call.1} parent=1 // pred_check
      _
    $region63: #{tpu_custom_call.1} parent=1 // pred_check_branch
      %1224 = sbr.rel (0) target = $region65
    $region64: #{tpu_custom_call.1} parent=1 // pred_region
      %s1226 = ssub.s32 32, 32
      %1227 = vsyncadd [#allocation8], %s1226
      %s1229 = sshll.u32 [#allocation7], 4
      %s1230 = int_to_ptr.vmem [resolvable:$true] %s1229
      %1232 = dma.vmem_to_hbm [thread:$0]  %s1230, 32, %s13, [#allocation8]
    $region65: #{tpu_custom_call.1} parent=1 // pred_fallthru
      _
    // Predicated region
    $region66: #{tpu_custom_call.1} parent=1 // pred_check
      _
    $region67: #{tpu_custom_call.1} parent=1 // pred_check_branch
      %1234 = sbr.rel (0) target = $region69
    $region68: #{tpu_custom_call.1} parent=1 // pred_region
      %1235 = dma.done [#allocation8], 32
    $region69: #{tpu_custom_call.1} parent=1 // pred_fallthru
      _
    %1236 = vsyncpa [#allocation8], 1

</llo_original>
